<compile_context>
chip_gen: v6e
topology: v6e:2x2x1
jax: 0.10.0
libtpu: 0.0.40
codegen_flags: <defaults>
</compile_context>

<pallas_src>
import functools

import jax
import jax.numpy as jnp
from jax.experimental import pallas as pl
from jax.experimental.pallas import tpu as pltpu


CFG = dict(vocab=64, hidden=32, heads=4, inter=64, layers=2, max_pos=16,
           type_vocab=2, num_even_tags=4, num_odd_tags=4)
LN_EPS = 1e-12
NEG_INF = -10000.0  # BERT extended-attention-mask constant


def _full_spec(shape):
    # single grid step, full-array block (block_shape == array shape satisfies
    # the (8,128)-or-full-dim tiling rule).
    n = len(shape)
    return pl.BlockSpec(tuple(shape), lambda i, _n=n: (0,) * _n)


# ----------------------------------------------------------------------------
# The fused kernel: embeddings -> L transformer layers -> classifier -> CE
# ----------------------------------------------------------------------------
def _fused_bert_tetratag_kernel(
        tok_ref, amw_ref, tab_ref, bw_ref, sp_ref,
        logits_ref, loss_ref, *,
        batch, seq, vocab, max_pos, type_vocab, num_layers, num_heads,
        inter, num_even, num_odd):
    f32 = jnp.float32
    N = batch * seq
    C = num_even + num_odd
    H = tab_ref.shape[-1]
    d = H // num_heads
    HN = num_heads * N
    scale = 1.0 / float(d) ** 0.5

    def layer_norm(x, g, b):
        mu = jnp.mean(x, axis=-1, keepdims=True)
        var = jnp.mean((x - mu) ** 2, axis=-1, keepdims=True)
        return (x - mu) * jax.lax.rsqrt(var + LN_EPS) * g + b

    def gelu(x):
        # TODO(synk): HF BERT uses erf-based GELU; tanh approximation kept since
        # erf lowering on Mosaic is not guaranteed.
        c = 0.7978845608028654  # sqrt(2/pi)
        return 0.5 * x * (1.0 + jnp.tanh(c * (x + 0.044715 * x * x * x)))

    # ---- unpack the packed operands (static slices are free) ---------------
    tab = tab_ref[...]
    r = 0
    word_emb = tab[r:r + vocab, :]; r += vocab                 # (V, H)
    pos_emb = tab[r:r + max_pos, :]; r += max_pos              # (P, H)
    type_row = tab[r:r + 1, :]; r += type_vocab                # type-0 row (1, H)
    emb_g = tab[r:r + 1, :]; r += 1
    emb_b = tab[r:r + 1, :]; r += 1
    cls_b = tab[r:r + 1, 0:C]; r += 1                          # (1, C)
    cls_wT = tab[r:r + C, :]; r += C                           # (C, H)

    ids = tok_ref[:, 0:1]                                      # (N, 1) int32
    labels = tok_ref[:, 1:2]                                   # (N, 1) int32
    am_col = tok_ref[:, 2:3]                                   # (N, 1) int32
    am_wide = amw_ref[...]                                     # (1, HN) f32

    # ---- embeddings: one-hot gather matmul + pos/type adds + LayerNorm -----
    vocab_iota = jax.lax.broadcasted_iota(jnp.int32, (N, vocab), 1)
    onehot = jnp.where(vocab_iota == ids, 1.0, 0.0).astype(f32)
    we = jnp.dot(onehot, word_emb, preferred_element_type=f32)          # (N, H)
    pe = jnp.concatenate([pos_emb[0:seq, :]] * batch, axis=0)           # (N, H)
    h = layer_norm(we + pe + type_row, emb_g, emb_b)

    # ---- structural masks for the head-stacked (HN, HN) score layout -------
    # float floor-division keeps index math exact and avoids vector int div.
    row_f = jax.lax.broadcasted_iota(jnp.int32, (HN, 1), 0).astype(f32)
    col_f = jax.lax.broadcasted_iota(jnp.int32, (1, HN), 1).astype(f32)
    head_r = jnp.floor(row_f / float(N))
    head_c = jnp.floor(col_f / float(N))
    pos_r = row_f - head_r * float(N)
    pos_c = col_f - head_c * float(N)
    batch_r = jnp.floor(pos_r / float(seq))
    batch_c = jnp.floor(pos_c / float(seq))
    allowed = (head_r == head_c) & (batch_r == batch_c) & (am_wide > 0.5)
    mask_add = jnp.where(allowed, 0.0, NEG_INF).astype(f32)             # (HN, HN)

    # per-head lane-block selection mask for the replicated (HN, H) layout
    lane_f = jax.lax.broadcasted_iota(jnp.int32, (1, H), 1).astype(f32)
    head_l = jnp.floor(lane_f / float(d))                                # (1, H)
    hmask = jnp.where(head_l == head_r, 1.0, 0.0).astype(f32)            # (HN, H)
    q_sel = hmask * scale                                                # fold 1/sqrt(d)

    # ---- transformer layers (static unroll) ---------------------------------
    for l in range(num_layers):
        bwl = bw_ref[l]                                   # (H, 3H + H + I + I)
        o = 0
        wqkv = bwl[:, o:o + 3 * H]; o += 3 * H
        wo = bwl[:, o:o + H]; o += H
        w1 = bwl[:, o:o + inter]; o += inter
        w2t = bwl[:, o:o + inter]; o += inter             # (H, I) = w2^T
        spl = sp_ref[l]                                   # (8, 3H) 1-row params
        bqkv = spl[0:1, 0:3 * H]
        bo = spl[1:2, 0:H]
        ln1g = spl[2:3, 0:H]
        ln1b = spl[3:4, 0:H]
        b1 = spl[4:5, 0:inter]
        b2 = spl[5:6, 0:H]
        ln2g = spl[6:7, 0:H]
        ln2b = spl[7:8, 0:H]

        # fused QKV projection: one (N,H)x(H,3H) MXU pass
        qkv = jnp.dot(h, wqkv, preferred_element_type=f32) + bqkv        # (N, 3H)

        # replicate tokens across heads on the sublane axis (tile-aligned
        # concat), then select each head's lane block with a 0/1 mask so all
        # heads share a single QK^T and a single PV matmul.
        rep = jnp.concatenate([qkv] * num_heads, axis=0)                 # (HN, 3H)
        q_blk = rep[:, 0:H] * q_sel
        k_blk = rep[:, H:2 * H] * hmask
        v_blk = rep[:, 2 * H:3 * H] * hmask

        s = jax.lax.dot_general(q_blk, k_blk, (((1,), (1,)), ((), ())),
                                preferred_element_type=f32) + mask_add   # (HN, HN)
        s = s - jnp.max(s, axis=-1, keepdims=True)
        p = jnp.exp(s)
        p = p / jnp.sum(p, axis=-1, keepdims=True)        # exact division (review)
        ctx_big = jnp.dot(p, v_blk, preferred_element_type=f32)          # (HN, H)

        # head merge: masked cross-head entries are exactly 0, so summing the
        # per-head sublane blocks reassembles the (N, H) context in-place.
        ctx = ctx_big[0:N, :]
        for hd in range(1, num_heads):
            ctx = ctx + ctx_big[hd * N:(hd + 1) * N, :]

        attn = jnp.dot(ctx, wo, preferred_element_type=f32) + bo
        h = layer_norm(attn + h, ln1g, ln1b)

        ff = gelu(jnp.dot(h, w1, preferred_element_type=f32) + b1)
        ff = jax.lax.dot_general(ff, w2t, (((1,), (1,)), ((), ())),
                                 preferred_element_type=f32) + b2
        h = layer_norm(ff + h, ln2g, ln2b)

    # ---- token classifier (dropout identity in eval mode) ------------------
    logits = jax.lax.dot_general(h, cls_wT, (((1,), (1,)), ((), ())),
                                 preferred_element_type=f32) + cls_b     # (N, C)
    logits_ref[...] = logits

    # ---- tetratag label split + masked-mean CE (ignore_index = -1) ---------
    lab_f = labels.astype(f32)                                           # (N, 1)
    quot = jnp.floor(lab_f / float(num_even + 1))
    odd_lab = quot - 1.0
    even_lab = lab_f - quot * float(num_even + 1) - 1.0
    active = am_col > 0
    odd_lab = jnp.where(active, odd_lab, -1.0)
    even_lab = jnp.where(active, even_lab, -1.0)

    def ce_mean(lg, lab):
        m = jnp.max(lg, axis=-1, keepdims=True)
        lse = jnp.log(jnp.sum(jnp.exp(lg - m), axis=-1, keepdims=True)) + m
        col = jax.lax.broadcasted_iota(jnp.int32, lg.shape, 1).astype(f32)
        sel = jnp.sum(jnp.where(col == lab, lg, 0.0), axis=-1, keepdims=True)
        valid = lab >= 0.0
        nll = jnp.where(valid, lse - sel, 0.0)
        tot = jnp.sum(nll, axis=0, keepdims=True)
        cnt = jnp.sum(jnp.where(valid, 1.0, 0.0), axis=0, keepdims=True)
        # TODO(synk): PyTorch CE yields NaN when zero labels are valid; clamped to 0.
        return tot / jnp.maximum(cnt, 1.0)                               # (1, 1)

    odd_logits = logits[:, 0:num_odd]
    even_logits = logits[:, num_odd:num_odd + num_even]
    # TODO(synk): an SMEM scalar output would avoid the padded (1,1) VMEM store;
    # kept as a VMEM block since that path is proven to lower cleanly here.
    loss_ref[...] = ce_mean(even_logits, even_lab) + ce_mean(odd_logits, odd_lab)


def fused_bert_tetratag(packed, tok, am_wide, cfg, batch, seq):
    N = batch * seq
    C = cfg["num_even_tags"] + cfg["num_odd_tags"]
    kernel = functools.partial(
        _fused_bert_tetratag_kernel,
        batch=batch, seq=seq, vocab=cfg["vocab"], max_pos=cfg["max_pos"],
        type_vocab=cfg["type_vocab"], num_layers=cfg["layers"],
        num_heads=cfg["heads"], inter=cfg["inter"],
        num_even=cfg["num_even_tags"], num_odd=cfg["num_odd_tags"])
    inputs = (tok, am_wide, packed["tables"], packed["big_w"], packed["small"])
    logits, loss = pl.pallas_call(
        kernel,
        out_shape=(jax.ShapeDtypeStruct((N, C), jnp.float32),
                   jax.ShapeDtypeStruct((1, 1), jnp.float32)),
        grid=(1,),
        in_specs=[_full_spec(a.shape) for a in inputs],
        out_specs=(_full_spec((N, C)), _full_spec((1, 1))),
        # TODO(synk): on v7x a batch-parallel grid axis would engage the second
        # TensorCore; grid=(1,) kept since it is optimal on v5e/v6e at this size.
        compiler_params=pltpu.CompilerParams(dimension_semantics=("arbitrary",)),
    )(*inputs)
    return logits, loss


# ----------------------------------------------------------------------------
# Parameters (per-layer weights stacked with a leading layer axis; QKV fused)
# ----------------------------------------------------------------------------
def init_params(key, cfg):
    H, I, L = cfg["hidden"], cfg["inter"], cfg["layers"]
    C = cfg["num_even_tags"] + cfg["num_odd_tags"]

    def nrm(k, shape):
        return (0.02 * jax.random.normal(k, shape)).astype(jnp.float32)

    ks = iter(jax.random.split(key, 12))
    return {
        "word_emb": nrm(next(ks), (cfg["vocab"], H)),
        "pos_emb": nrm(next(ks), (cfg["max_pos"], H)),
        "type_emb": nrm(next(ks), (cfg["type_vocab"], H)),
        "emb_ln_g": jnp.ones((1, H), jnp.float32),
        "emb_ln_b": jnp.zeros((1, H), jnp.float32),
        "wqkv": nrm(next(ks), (L, H, 3 * H)),       # [Wq | Wk | Wv] concatenated
        "bqkv": jnp.zeros((L, 1, 3 * H), jnp.float32),
        "wo": nrm(next(ks), (L, H, H)),
        "bo": jnp.zeros((L, 1, H), jnp.float32),
        "ln1_g": jnp.ones((L, 1, H), jnp.float32),
        "ln1_b": jnp.zeros((L, 1, H), jnp.float32),
        "w1": nrm(next(ks), (L, H, I)),
        "b1": jnp.zeros((L, 1, I), jnp.float32),
        "w2": nrm(next(ks), (L, I, H)),
        "b2": jnp.zeros((L, 1, H), jnp.float32),
        "ln2_g": jnp.ones((L, 1, H), jnp.float32),
        "ln2_b": jnp.zeros((L, 1, H), jnp.float32),
        "cls_w": nrm(next(ks), (H, C)),
        "cls_b": jnp.zeros((1, C), jnp.float32),
    }


def pack_params(params, cfg):
    """One-time packing into a handful of slabs (fewer kernel input DMAs)."""
    H, I = cfg["hidden"], cfg["inter"]
    C = cfg["num_even_tags"] + cfg["num_odd_tags"]
    assert 3 * H >= I and 3 * H >= H and H >= C

    # embedding tables + classifier params, all with H lanes, stacked on rows:
    # [word | pos | type | emb_ln_g | emb_ln_b | cls_b(pad) | cls_w^T]
    tables = jnp.concatenate([
        params["word_emb"], params["pos_emb"], params["type_emb"],
        params["emb_ln_g"], params["emb_ln_b"],
        jnp.pad(params["cls_b"], ((0, 0), (0, H - C))),
        params["cls_w"].T,
    ], axis=0).astype(jnp.float32)

    # per-layer big weights on lanes: [Wqkv | Wo | W1 | W2^T]  -> (L, H, 5H+2I)
    big_w = jnp.concatenate([
        params["wqkv"], params["wo"], params["w1"],
        jnp.transpose(params["w2"], (0, 2, 1)),
    ], axis=2).astype(jnp.float32)

    # per-layer 1-row params as rows of an (L, 8, 3H) slab
    def pad_to(x, w):
        return jnp.pad(x, ((0, 0), (0, 0), (0, w - x.shape[-1])))
    W = 3 * H
    small = jnp.concatenate([
        pad_to(params["bqkv"], W), pad_to(params["bo"], W),
        pad_to(params["ln1_g"], W), pad_to(params["ln1_b"], W),
        pad_to(params["b1"], W), pad_to(params["b2"], W),
        pad_to(params["ln2_g"], W), pad_to(params["ln2_b"], W),
    ], axis=1).astype(jnp.float32)

    return {"tables": tables, "big_w": big_w, "small": small}


# ----------------------------------------------------------------------------
# Forward: minimal int packing glue + one fused kernel call
# ----------------------------------------------------------------------------
def model_for_tetratagging_forward(packed, input_ids, attention_mask, labels, cfg):
    B, S = input_ids.shape
    N = B * S
    heads = cfg["heads"]
    ne, no = cfg["num_even_tags"], cfg["num_odd_tags"]

    am = attention_mask.reshape(N, 1).astype(jnp.int32)
    if labels is not None:
        lab = labels.reshape(N, 1).astype(jnp.int32)
    else:
        lab = jnp.zeros((N, 1), jnp.int32)        # splits to (-1,-1) -> ignored
    tok = jnp.concatenate(
        [input_ids.reshape(N, 1).astype(jnp.int32), lab, am], axis=1)   # (N, 3)
    am_wide = jnp.tile(
        attention_mask.reshape(1, N).astype(jnp.float32), (1, heads))   # (1, heads*N)

    logits2d, loss_mat = fused_bert_tetratag(packed, tok, am_wide, cfg, B, S)
    logits = logits2d.reshape(B, S, ne + no)
    loss = loss_mat[0, 0] if labels is not None else None
    return loss, logits


if __name__ == "__main__":
    key = jax.random.PRNGKey(0)
    kp, ki, kl = jax.random.split(key, 3)

    B, S = 2, 8
    params = init_params(kp, CFG)
    packed = pack_params(params, CFG)      # one-time packing, outside hot path

    input_ids = jax.random.randint(ki, (B, S), 0, CFG["vocab"], dtype=jnp.int32)
    # mask out the last two tokens of the second sequence
    attention_mask = jnp.ones((B, S), jnp.int32).at[1, -2:].set(0)
    max_label = (CFG["num_even_tags"] + 1) * (CFG["num_odd_tags"] + 1)
    labels = jax.random.randint(kl, (B, S), 1, max_label, dtype=jnp.int32)

    loss, logits = model_for_tetratagging_forward(
        packed, input_ids, attention_mask, labels, CFG)
    jax.block_until_ready((loss, logits))

    assert logits.shape == (B, S, CFG["num_even_tags"] + CFG["num_odd_tags"])
    assert jnp.isfinite(loss)
    print("KERNEL_OK")
</pallas_src>

<mosaic_0001>
module attributes {stable_mosaic.version = 11 : i64} {
  func.func @_fused_bert_tetratag_kernel(%arg0: i32, %arg1: memref<16x3xi32, #tpu.memory_space<vmem>>, %arg2: memref<1x64xf32, #tpu.memory_space<vmem>>, %arg3: memref<93x32xf32, #tpu.memory_space<vmem>>, %arg4: memref<2x32x256xf32, #tpu.memory_space<vmem>>, %arg5: memref<2x8x96xf32, #tpu.memory_space<vmem>>, %arg6: memref<16x8xf32, #tpu.memory_space<vmem>>, %arg7: memref<1x1xf32, #tpu.memory_space<vmem>>) attributes {dimension_semantics = [#tpu.dimension_semantics<arbitrary>], iteration_bounds = array<i64: 1>, scalar_prefetch = 0 : i64, scratch_operands = 0 : i64, tpu.core_type = #tpu.core_type<tc>, window_params = [{pipeline_mode = #tpu.pipeline_mode<synchronous>, transform_indices = @transform_0, window_bounds = array<i64: 16, 3>}, {pipeline_mode = #tpu.pipeline_mode<synchronous>, transform_indices = @transform_1, window_bounds = array<i64: 1, 64>}, {pipeline_mode = #tpu.pipeline_mode<synchronous>, transform_indices = @transform_2, window_bounds = array<i64: 93, 32>}, {pipeline_mode = #tpu.pipeline_mode<synchronous>, transform_indices = @transform_3, window_bounds = array<i64: 2, 32, 256>}, {pipeline_mode = #tpu.pipeline_mode<synchronous>, transform_indices = @transform_4, window_bounds = array<i64: 2, 8, 96>}, {pipeline_mode = #tpu.pipeline_mode<synchronous>, transform_indices = @transform_5, window_bounds = array<i64: 16, 8>}, {pipeline_mode = #tpu.pipeline_mode<synchronous>, transform_indices = @transform_6, window_bounds = array<i64: 1, 1>}]} {
    %c0 = arith.constant 0 : index
    %c0_0 = arith.constant 0 : index
    %0 = vector.load %arg3[%c0, %c0_0] : memref<93x32xf32, #tpu.memory_space<vmem>>, vector<93x32xf32>
    %1 = vector.extract_strided_slice %0 {offsets = [0, 0], sizes = [64, 32], strides = [1, 1]} : vector<93x32xf32> to vector<64x32xf32>
    %2 = vector.extract_strided_slice %0 {offsets = [64, 0], sizes = [16, 32], strides = [1, 1]} : vector<93x32xf32> to vector<16x32xf32>
    %3 = vector.extract_strided_slice %0 {offsets = [80, 0], sizes = [1, 32], strides = [1, 1]} : vector<93x32xf32> to vector<1x32xf32>
    %4 = vector.extract_strided_slice %0 {offsets = [82, 0], sizes = [1, 32], strides = [1, 1]} : vector<93x32xf32> to vector<1x32xf32>
    %5 = vector.extract_strided_slice %0 {offsets = [83, 0], sizes = [1, 32], strides = [1, 1]} : vector<93x32xf32> to vector<1x32xf32>
    %6 = vector.extract_strided_slice %0 {offsets = [84, 0], sizes = [1, 8], strides = [1, 1]} : vector<93x32xf32> to vector<1x8xf32>
    %7 = vector.extract_strided_slice %0 {offsets = [85, 0], sizes = [8, 32], strides = [1, 1]} : vector<93x32xf32> to vector<8x32xf32>
    %c0_1 = arith.constant 0 : index
    %c0_2 = arith.constant 0 : index
    %8 = vector.load %arg1[%c0_1, %c0_2] : memref<16x3xi32, #tpu.memory_space<vmem>>, vector<16x1xi32>
    %c0_3 = arith.constant 0 : index
    %c1 = arith.constant 1 : index
    %9 = vector.load %arg1[%c0_3, %c1] : memref<16x3xi32, #tpu.memory_space<vmem>>, vector<16x1xi32>
    %c0_4 = arith.constant 0 : index
    %c2 = arith.constant 2 : index
    %10 = vector.load %arg1[%c0_4, %c2] : memref<16x3xi32, #tpu.memory_space<vmem>>, vector<16x1xi32>
    %c0_5 = arith.constant 0 : index
    %c0_6 = arith.constant 0 : index
    %11 = vector.load %arg2[%c0_5, %c0_6] : memref<1x64xf32, #tpu.memory_space<vmem>>, vector<1x64xf32>
    %12 = tpu.iota {dimensions = array<i32: 1>} : vector<16x64xi32>
    %13 = vector.broadcast %8 : vector<16x1xi32> to vector<16x64xi32>
    %14 = arith.cmpi eq, %12, %13 : vector<16x64xi32>
    %cst = arith.constant 1.000000e+00 : f32
    %cst_7 = arith.constant 0.000000e+00 : f32
    %15 = vector.broadcast %cst : f32 to vector<16x64xf32>
    %16 = vector.broadcast %cst_7 : f32 to vector<16x64xf32>
    %17 = arith.select %14, %15, %16 : vector<16x64xi1>, vector<16x64xf32>
    %cst_8 = arith.constant dense<0.000000e+00> : vector<16x32xf32>
    %18 = tpu.matmul %17, %1, %cst_8 {dimension_numbers = #tpu.dot_dimension_numbers<[1], [0], [0], [1], [0, 0, 1, 1], [], []>} : vector<16x64xf32>, vector<64x32xf32>, vector<16x32xf32> -> vector<16x32xf32>
    %19 = vector.extract_strided_slice %2 {offsets = [0, 0], sizes = [8, 32], strides = [1, 1]} : vector<16x32xf32> to vector<8x32xf32>
    %20 = tpu.concatenate %19, %19 in 0 : vector<8x32xf32>, vector<8x32xf32> -> vector<16x32xf32>
    %21 = arith.addf %18, %20 : vector<16x32xf32>
    %22 = vector.broadcast %3 : vector<1x32xf32> to vector<16x32xf32>
    %23 = arith.addf %21, %22 : vector<16x32xf32>
    %cst_9 = arith.constant dense<0.000000e+00> : vector<16xf32>
    %24 = vector.multi_reduction <add>, %23, %cst_9 [1] : vector<16x32xf32> to vector<16xf32>
    %25 = vector.shape_cast %24 : vector<16xf32> to vector<16x1xf32>
    %cst_10 = arith.constant 3.200000e+01 : f32
    %26 = vector.broadcast %cst_10 : f32 to vector<16x1xf32>
    %27 = arith.divf %25, %26 : vector<16x1xf32>
    %28 = vector.broadcast %27 : vector<16x1xf32> to vector<16x32xf32>
    %29 = arith.subf %23, %28 : vector<16x32xf32>
    %30 = arith.mulf %29, %29 : vector<16x32xf32>
    %cst_11 = arith.constant dense<0.000000e+00> : vector<16xf32>
    %31 = vector.multi_reduction <add>, %30, %cst_11 [1] : vector<16x32xf32> to vector<16xf32>
    %32 = vector.shape_cast %31 : vector<16xf32> to vector<16x1xf32>
    %cst_12 = arith.constant 3.200000e+01 : f32
    %33 = vector.broadcast %cst_12 : f32 to vector<16x1xf32>
    %34 = arith.divf %32, %33 : vector<16x1xf32>
    %35 = vector.broadcast %27 : vector<16x1xf32> to vector<16x32xf32>
    %36 = arith.subf %23, %35 : vector<16x32xf32>
    %cst_13 = arith.constant 9.99999996E-13 : f32
    %37 = vector.broadcast %cst_13 : f32 to vector<16x1xf32>
    %38 = arith.addf %34, %37 : vector<16x1xf32>
    %39 = math.rsqrt %38 : vector<16x1xf32>
    %40 = vector.broadcast %39 : vector<16x1xf32> to vector<16x32xf32>
    %41 = arith.mulf %36, %40 : vector<16x32xf32>
    %42 = vector.broadcast %4 : vector<1x32xf32> to vector<16x32xf32>
    %43 = arith.mulf %41, %42 : vector<16x32xf32>
    %44 = vector.broadcast %5 : vector<1x32xf32> to vector<16x32xf32>
    %45 = arith.addf %43, %44 : vector<16x32xf32>
    %46 = tpu.iota {dimensions = array<i32: 0>} : vector<64x1xi32>
    %47 = arith.sitofp %46 : vector<64x1xi32> to vector<64x1xf32>
    %48 = tpu.iota {dimensions = array<i32: 1>} : vector<1x64xi32>
    %49 = arith.sitofp %48 : vector<1x64xi32> to vector<1x64xf32>
    %cst_14 = arith.constant 1.600000e+01 : f32
    %50 = vector.broadcast %cst_14 : f32 to vector<64x1xf32>
    %51 = arith.divf %47, %50 : vector<64x1xf32>
    %52 = math.floor %51 : vector<64x1xf32>
    %cst_15 = arith.constant 1.600000e+01 : f32
    %53 = vector.broadcast %cst_15 : f32 to vector<1x64xf32>
    %54 = arith.divf %49, %53 : vector<1x64xf32>
    %55 = math.floor %54 : vector<1x64xf32>
    %cst_16 = arith.constant 1.600000e+01 : f32
    %56 = vector.broadcast %cst_16 : f32 to vector<64x1xf32>
    %57 = arith.mulf %52, %56 : vector<64x1xf32>
    %58 = arith.subf %47, %57 : vector<64x1xf32>
    %cst_17 = arith.constant 1.600000e+01 : f32
    %59 = vector.broadcast %cst_17 : f32 to vector<1x64xf32>
    %60 = arith.mulf %55, %59 : vector<1x64xf32>
    %61 = arith.subf %49, %60 : vector<1x64xf32>
    %cst_18 = arith.constant 8.000000e+00 : f32
    %62 = vector.broadcast %cst_18 : f32 to vector<64x1xf32>
    %63 = arith.divf %58, %62 : vector<64x1xf32>
    %64 = math.floor %63 : vector<64x1xf32>
    %cst_19 = arith.constant 8.000000e+00 : f32
    %65 = vector.broadcast %cst_19 : f32 to vector<1x64xf32>
    %66 = arith.divf %61, %65 : vector<1x64xf32>
    %67 = math.floor %66 : vector<1x64xf32>
    %68 = vector.broadcast %52 : vector<64x1xf32> to vector<64x64xf32>
    %69 = vector.broadcast %55 : vector<1x64xf32> to vector<64x64xf32>
    %70 = arith.cmpf oeq, %68, %69 : vector<64x64xf32>
    %71 = vector.broadcast %64 : vector<64x1xf32> to vector<64x64xf32>
    %72 = vector.broadcast %67 : vector<1x64xf32> to vector<64x64xf32>
    %73 = arith.cmpf oeq, %71, %72 : vector<64x64xf32>
    %74 = arith.andi %70, %73 : vector<64x64xi1>
    %cst_20 = arith.constant 5.000000e-01 : f32
    %75 = vector.broadcast %cst_20 : f32 to vector<1x64xf32>
    %76 = arith.cmpf ogt, %11, %75 : vector<1x64xf32>
    %77 = vector.broadcast %76 : vector<1x64xi1> to vector<64x64xi1>
    %78 = arith.andi %74, %77 : vector<64x64xi1>
    %cst_21 = arith.constant 0.000000e+00 : f32
    %cst_22 = arith.constant -1.000000e+04 : f32
    %79 = vector.broadcast %cst_21 : f32 to vector<64x64xf32>
    %80 = vector.broadcast %cst_22 : f32 to vector<64x64xf32>
    %81 = arith.select %78, %79, %80 : vector<64x64xi1>, vector<64x64xf32>
    %82 = tpu.iota {dimensions = array<i32: 1>} : vector<1x32xi32>
    %83 = arith.sitofp %82 : vector<1x32xi32> to vector<1x32xf32>
    %cst_23 = arith.constant 8.000000e+00 : f32
    %84 = vector.broadcast %cst_23 : f32 to vector<1x32xf32>
    %85 = arith.divf %83, %84 : vector<1x32xf32>
    %86 = math.floor %85 : vector<1x32xf32>
    %87 = vector.broadcast %86 : vector<1x32xf32> to vector<64x32xf32>
    %88 = vector.broadcast %52 : vector<64x1xf32> to vector<64x32xf32>
    %89 = arith.cmpf oeq, %87, %88 : vector<64x32xf32>
    %cst_24 = arith.constant 1.000000e+00 : f32
    %cst_25 = arith.constant 0.000000e+00 : f32
    %90 = vector.broadcast %cst_24 : f32 to vector<64x32xf32>
    %91 = vector.broadcast %cst_25 : f32 to vector<64x32xf32>
    %92 = arith.select %89, %90, %91 : vector<64x32xi1>, vector<64x32xf32>
    %cst_26 = arith.constant 0.353553385 : f32
    %93 = vector.broadcast %cst_26 : f32 to vector<64x32xf32>
    %94 = arith.mulf %92, %93 : vector<64x32xf32>
    %c0_27 = arith.constant 0 : index
    %c0_28 = arith.constant 0 : index
    %c0_29 = arith.constant 0 : index
    %95 = vector.load %arg4[%c0_27, %c0_28, %c0_29] : memref<2x32x256xf32, #tpu.memory_space<vmem>>, vector<1x32x256xf32>
    %96 = vector.shape_cast %95 : vector<1x32x256xf32> to vector<32x256xf32>
    %97 = vector.extract_strided_slice %96 {offsets = [0, 0], sizes = [32, 96], strides = [1, 1]} : vector<32x256xf32> to vector<32x96xf32>
    %98 = vector.extract_strided_slice %96 {offsets = [0, 96], sizes = [32, 32], strides = [1, 1]} : vector<32x256xf32> to vector<32x32xf32>
    %99 = vector.extract_strided_slice %96 {offsets = [0, 128], sizes = [32, 64], strides = [1, 1]} : vector<32x256xf32> to vector<32x64xf32>
    %100 = vector.extract_strided_slice %96 {offsets = [0, 192], sizes = [32, 64], strides = [1, 1]} : vector<32x256xf32> to vector<32x64xf32>
    %c0_30 = arith.constant 0 : index
    %c0_31 = arith.constant 0 : index
    %c0_32 = arith.constant 0 : index
    %101 = vector.load %arg5[%c0_30, %c0_31, %c0_32] : memref<2x8x96xf32, #tpu.memory_space<vmem>>, vector<1x8x96xf32>
    %102 = vector.shape_cast %101 : vector<1x8x96xf32> to vector<8x96xf32>
    %103 = vector.extract_strided_slice %102 {offsets = [0, 0], sizes = [1, 96], strides = [1, 1]} : vector<8x96xf32> to vector<1x96xf32>
    %104 = vector.extract_strided_slice %102 {offsets = [1, 0], sizes = [1, 32], strides = [1, 1]} : vector<8x96xf32> to vector<1x32xf32>
    %105 = vector.extract_strided_slice %102 {offsets = [2, 0], sizes = [1, 32], strides = [1, 1]} : vector<8x96xf32> to vector<1x32xf32>
    %106 = vector.extract_strided_slice %102 {offsets = [3, 0], sizes = [1, 32], strides = [1, 1]} : vector<8x96xf32> to vector<1x32xf32>
    %107 = vector.extract_strided_slice %102 {offsets = [4, 0], sizes = [1, 64], strides = [1, 1]} : vector<8x96xf32> to vector<1x64xf32>
    %108 = vector.extract_strided_slice %102 {offsets = [5, 0], sizes = [1, 32], strides = [1, 1]} : vector<8x96xf32> to vector<1x32xf32>
    %109 = vector.extract_strided_slice %102 {offsets = [6, 0], sizes = [1, 32], strides = [1, 1]} : vector<8x96xf32> to vector<1x32xf32>
    %110 = vector.extract_strided_slice %102 {offsets = [7, 0], sizes = [1, 32], strides = [1, 1]} : vector<8x96xf32> to vector<1x32xf32>
    %cst_33 = arith.constant dense<0.000000e+00> : vector<16x96xf32>
    %111 = tpu.matmul %45, %97, %cst_33 {dimension_numbers = #tpu.dot_dimension_numbers<[1], [0], [0], [1], [0, 0, 1, 1], [], []>} : vector<16x32xf32>, vector<32x96xf32>, vector<16x96xf32> -> vector<16x96xf32>
    %112 = vector.broadcast %103 : vector<1x96xf32> to vector<16x96xf32>
    %113 = arith.addf %111, %112 : vector<16x96xf32>
    %114 = tpu.concatenate %113, %113, %113, %113 in 0 : vector<16x96xf32>, vector<16x96xf32>, vector<16x96xf32>, vector<16x96xf32> -> vector<64x96xf32>
    %115 = vector.extract_strided_slice %114 {offsets = [0, 0], sizes = [64, 32], strides = [1, 1]} : vector<64x96xf32> to vector<64x32xf32>
    %116 = arith.mulf %115, %94 : vector<64x32xf32>
    %117 = vector.extract_strided_slice %114 {offsets = [0, 32], sizes = [64, 32], strides = [1, 1]} : vector<64x96xf32> to vector<64x32xf32>
    %118 = arith.mulf %117, %92 : vector<64x32xf32>
    %119 = vector.extract_strided_slice %114 {offsets = [0, 64], sizes = [64, 32], strides = [1, 1]} : vector<64x96xf32> to vector<64x32xf32>
    %120 = arith.mulf %119, %92 : vector<64x32xf32>
    %cst_34 = arith.constant dense<0.000000e+00> : vector<64x64xf32>
    %121 = tpu.matmul %116, %118, %cst_34 {dimension_numbers = #tpu.dot_dimension_numbers<[1], [1], [0], [0], [0, 0, 1, 0], [], []>} : vector<64x32xf32>, vector<64x32xf32>, vector<64x64xf32> -> vector<64x64xf32>
    %122 = arith.addf %121, %81 : vector<64x64xf32>
    %cst_35 = arith.constant dense<0xFF800000> : vector<64xf32>
    %123 = vector.multi_reduction <maximumf>, %122, %cst_35 [1] : vector<64x64xf32> to vector<64xf32>
    %124 = vector.shape_cast %123 : vector<64xf32> to vector<64x1xf32>
    %125 = vector.broadcast %124 : vector<64x1xf32> to vector<64x64xf32>
    %126 = arith.subf %122, %125 : vector<64x64xf32>
    %127 = math.exp %126 : vector<64x64xf32>
    %cst_36 = arith.constant dense<0.000000e+00> : vector<64xf32>
    %128 = vector.multi_reduction <add>, %127, %cst_36 [1] : vector<64x64xf32> to vector<64xf32>
    %129 = vector.shape_cast %128 : vector<64xf32> to vector<64x1xf32>
    %130 = vector.broadcast %129 : vector<64x1xf32> to vector<64x64xf32>
    %131 = arith.divf %127, %130 : vector<64x64xf32>
    %cst_37 = arith.constant dense<0.000000e+00> : vector<64x32xf32>
    %132 = tpu.matmul %131, %120, %cst_37 {dimension_numbers = #tpu.dot_dimension_numbers<[1], [0], [0], [1], [0, 0, 1, 1], [], []>} : vector<64x64xf32>, vector<64x32xf32>, vector<64x32xf32> -> vector<64x32xf32>
    %133 = vector.extract_strided_slice %132 {offsets = [0, 0], sizes = [16, 32], strides = [1, 1]} : vector<64x32xf32> to vector<16x32xf32>
    %134 = vector.extract_strided_slice %132 {offsets = [16, 0], sizes = [16, 32], strides = [1, 1]} : vector<64x32xf32> to vector<16x32xf32>
    %135 = arith.addf %133, %134 : vector<16x32xf32>
    %136 = vector.extract_strided_slice %132 {offsets = [32, 0], sizes = [16, 32], strides = [1, 1]} : vector<64x32xf32> to vector<16x32xf32>
    %137 = arith.addf %135, %136 : vector<16x32xf32>
    %138 = vector.extract_strided_slice %132 {offsets = [48, 0], sizes = [16, 32], strides = [1, 1]} : vector<64x32xf32> to vector<16x32xf32>
    %139 = arith.addf %137, %138 : vector<16x32xf32>
    %cst_38 = arith.constant dense<0.000000e+00> : vector<16x32xf32>
    %140 = tpu.matmul %139, %98, %cst_38 {dimension_numbers = #tpu.dot_dimension_numbers<[1], [0], [0], [1], [0, 0, 1, 1], [], []>} : vector<16x32xf32>, vector<32x32xf32>, vector<16x32xf32> -> vector<16x32xf32>
    %141 = vector.broadcast %104 : vector<1x32xf32> to vector<16x32xf32>
    %142 = arith.addf %140, %141 : vector<16x32xf32>
    %143 = arith.addf %142, %45 : vector<16x32xf32>
    %cst_39 = arith.constant dense<0.000000e+00> : vector<16xf32>
    %144 = vector.multi_reduction <add>, %143, %cst_39 [1] : vector<16x32xf32> to vector<16xf32>
    %145 = vector.shape_cast %144 : vector<16xf32> to vector<16x1xf32>
    %cst_40 = arith.constant 3.200000e+01 : f32
    %146 = vector.broadcast %cst_40 : f32 to vector<16x1xf32>
    %147 = arith.divf %145, %146 : vector<16x1xf32>
    %148 = vector.broadcast %147 : vector<16x1xf32> to vector<16x32xf32>
    %149 = arith.subf %143, %148 : vector<16x32xf32>
    %150 = arith.mulf %149, %149 : vector<16x32xf32>
    %cst_41 = arith.constant dense<0.000000e+00> : vector<16xf32>
    %151 = vector.multi_reduction <add>, %150, %cst_41 [1] : vector<16x32xf32> to vector<16xf32>
    %152 = vector.shape_cast %151 : vector<16xf32> to vector<16x1xf32>
    %cst_42 = arith.constant 3.200000e+01 : f32
    %153 = vector.broadcast %cst_42 : f32 to vector<16x1xf32>
    %154 = arith.divf %152, %153 : vector<16x1xf32>
    %155 = vector.broadcast %147 : vector<16x1xf32> to vector<16x32xf32>
    %156 = arith.subf %143, %155 : vector<16x32xf32>
    %cst_43 = arith.constant 9.99999996E-13 : f32
    %157 = vector.broadcast %cst_43 : f32 to vector<16x1xf32>
    %158 = arith.addf %154, %157 : vector<16x1xf32>
    %159 = math.rsqrt %158 : vector<16x1xf32>
    %160 = vector.broadcast %159 : vector<16x1xf32> to vector<16x32xf32>
    %161 = arith.mulf %156, %160 : vector<16x32xf32>
    %162 = vector.broadcast %105 : vector<1x32xf32> to vector<16x32xf32>
    %163 = arith.mulf %161, %162 : vector<16x32xf32>
    %164 = vector.broadcast %106 : vector<1x32xf32> to vector<16x32xf32>
    %165 = arith.addf %163, %164 : vector<16x32xf32>
    %cst_44 = arith.constant dense<0.000000e+00> : vector<16x64xf32>
    %166 = tpu.matmul %165, %99, %cst_44 {dimension_numbers = #tpu.dot_dimension_numbers<[1], [0], [0], [1], [0, 0, 1, 1], [], []>} : vector<16x32xf32>, vector<32x64xf32>, vector<16x64xf32> -> vector<16x64xf32>
    %167 = vector.broadcast %107 : vector<1x64xf32> to vector<16x64xf32>
    %168 = arith.addf %166, %167 : vector<16x64xf32>
    %cst_45 = arith.constant 5.000000e-01 : f32
    %169 = vector.broadcast %cst_45 : f32 to vector<16x64xf32>
    %170 = arith.mulf %169, %168 : vector<16x64xf32>
    %cst_46 = arith.constant 4.471500e-02 : f32
    %171 = vector.broadcast %cst_46 : f32 to vector<16x64xf32>
    %172 = arith.mulf %171, %168 : vector<16x64xf32>
    %173 = arith.mulf %172, %168 : vector<16x64xf32>
    %174 = arith.mulf %173, %168 : vector<16x64xf32>
    %175 = arith.addf %168, %174 : vector<16x64xf32>
    %cst_47 = arith.constant 0.797884583 : f32
    %176 = vector.broadcast %cst_47 : f32 to vector<16x64xf32>
    %177 = arith.mulf %176, %175 : vector<16x64xf32>
    %178 = math.tanh %177 : vector<16x64xf32>
    %cst_48 = arith.constant 1.000000e+00 : f32
    %179 = vector.broadcast %cst_48 : f32 to vector<16x64xf32>
    %180 = arith.addf %179, %178 : vector<16x64xf32>
    %181 = arith.mulf %170, %180 : vector<16x64xf32>
    %cst_49 = arith.constant dense<0.000000e+00> : vector<16x32xf32>
    %182 = tpu.matmul %181, %100, %cst_49 {dimension_numbers = #tpu.dot_dimension_numbers<[1], [1], [0], [0], [0, 0, 1, 0], [], []>} : vector<16x64xf32>, vector<32x64xf32>, vector<16x32xf32> -> vector<16x32xf32>
    %183 = vector.broadcast %108 : vector<1x32xf32> to vector<16x32xf32>
    %184 = arith.addf %182, %183 : vector<16x32xf32>
    %185 = arith.addf %184, %165 : vector<16x32xf32>
    %cst_50 = arith.constant dense<0.000000e+00> : vector<16xf32>
    %186 = vector.multi_reduction <add>, %185, %cst_50 [1] : vector<16x32xf32> to vector<16xf32>
    %187 = vector.shape_cast %186 : vector<16xf32> to vector<16x1xf32>
    %cst_51 = arith.constant 3.200000e+01 : f32
    %188 = vector.broadcast %cst_51 : f32 to vector<16x1xf32>
    %189 = arith.divf %187, %188 : vector<16x1xf32>
    %190 = vector.broadcast %189 : vector<16x1xf32> to vector<16x32xf32>
    %191 = arith.subf %185, %190 : vector<16x32xf32>
    %192 = arith.mulf %191, %191 : vector<16x32xf32>
    %cst_52 = arith.constant dense<0.000000e+00> : vector<16xf32>
    %193 = vector.multi_reduction <add>, %192, %cst_52 [1] : vector<16x32xf32> to vector<16xf32>
    %194 = vector.shape_cast %193 : vector<16xf32> to vector<16x1xf32>
    %cst_53 = arith.constant 3.200000e+01 : f32
    %195 = vector.broadcast %cst_53 : f32 to vector<16x1xf32>
    %196 = arith.divf %194, %195 : vector<16x1xf32>
    %197 = vector.broadcast %189 : vector<16x1xf32> to vector<16x32xf32>
    %198 = arith.subf %185, %197 : vector<16x32xf32>
    %cst_54 = arith.constant 9.99999996E-13 : f32
    %199 = vector.broadcast %cst_54 : f32 to vector<16x1xf32>
    %200 = arith.addf %196, %199 : vector<16x1xf32>
    %201 = math.rsqrt %200 : vector<16x1xf32>
    %202 = vector.broadcast %201 : vector<16x1xf32> to vector<16x32xf32>
    %203 = arith.mulf %198, %202 : vector<16x32xf32>
    %204 = vector.broadcast %109 : vector<1x32xf32> to vector<16x32xf32>
    %205 = arith.mulf %203, %204 : vector<16x32xf32>
    %206 = vector.broadcast %110 : vector<1x32xf32> to vector<16x32xf32>
    %207 = arith.addf %205, %206 : vector<16x32xf32>
    %c1_55 = arith.constant 1 : index
    %c0_56 = arith.constant 0 : index
    %c0_57 = arith.constant 0 : index
    %208 = vector.load %arg4[%c1_55, %c0_56, %c0_57] : memref<2x32x256xf32, #tpu.memory_space<vmem>>, vector<1x32x256xf32>
    %209 = vector.shape_cast %208 : vector<1x32x256xf32> to vector<32x256xf32>
    %210 = vector.extract_strided_slice %209 {offsets = [0, 0], sizes = [32, 96], strides = [1, 1]} : vector<32x256xf32> to vector<32x96xf32>
    %211 = vector.extract_strided_slice %209 {offsets = [0, 96], sizes = [32, 32], strides = [1, 1]} : vector<32x256xf32> to vector<32x32xf32>
    %212 = vector.extract_strided_slice %209 {offsets = [0, 128], sizes = [32, 64], strides = [1, 1]} : vector<32x256xf32> to vector<32x64xf32>
    %213 = vector.extract_strided_slice %209 {offsets = [0, 192], sizes = [32, 64], strides = [1, 1]} : vector<32x256xf32> to vector<32x64xf32>
    %c1_58 = arith.constant 1 : index
    %c0_59 = arith.constant 0 : index
    %c0_60 = arith.constant 0 : index
    %214 = vector.load %arg5[%c1_58, %c0_59, %c0_60] : memref<2x8x96xf32, #tpu.memory_space<vmem>>, vector<1x8x96xf32>
    %215 = vector.shape_cast %214 : vector<1x8x96xf32> to vector<8x96xf32>
    %216 = vector.extract_strided_slice %215 {offsets = [0, 0], sizes = [1, 96], strides = [1, 1]} : vector<8x96xf32> to vector<1x96xf32>
    %217 = vector.extract_strided_slice %215 {offsets = [1, 0], sizes = [1, 32], strides = [1, 1]} : vector<8x96xf32> to vector<1x32xf32>
    %218 = vector.extract_strided_slice %215 {offsets = [2, 0], sizes = [1, 32], strides = [1, 1]} : vector<8x96xf32> to vector<1x32xf32>
    %219 = vector.extract_strided_slice %215 {offsets = [3, 0], sizes = [1, 32], strides = [1, 1]} : vector<8x96xf32> to vector<1x32xf32>
    %220 = vector.extract_strided_slice %215 {offsets = [4, 0], sizes = [1, 64], strides = [1, 1]} : vector<8x96xf32> to vector<1x64xf32>
    %221 = vector.extract_strided_slice %215 {offsets = [5, 0], sizes = [1, 32], strides = [1, 1]} : vector<8x96xf32> to vector<1x32xf32>
    %222 = vector.extract_strided_slice %215 {offsets = [6, 0], sizes = [1, 32], strides = [1, 1]} : vector<8x96xf32> to vector<1x32xf32>
    %223 = vector.extract_strided_slice %215 {offsets = [7, 0], sizes = [1, 32], strides = [1, 1]} : vector<8x96xf32> to vector<1x32xf32>
    %cst_61 = arith.constant dense<0.000000e+00> : vector<16x96xf32>
    %224 = tpu.matmul %207, %210, %cst_61 {dimension_numbers = #tpu.dot_dimension_numbers<[1], [0], [0], [1], [0, 0, 1, 1], [], []>} : vector<16x32xf32>, vector<32x96xf32>, vector<16x96xf32> -> vector<16x96xf32>
    %225 = vector.broadcast %216 : vector<1x96xf32> to vector<16x96xf32>
    %226 = arith.addf %224, %225 : vector<16x96xf32>
    %227 = tpu.concatenate %226, %226, %226, %226 in 0 : vector<16x96xf32>, vector<16x96xf32>, vector<16x96xf32>, vector<16x96xf32> -> vector<64x96xf32>
    %228 = vector.extract_strided_slice %227 {offsets = [0, 0], sizes = [64, 32], strides = [1, 1]} : vector<64x96xf32> to vector<64x32xf32>
    %229 = arith.mulf %228, %94 : vector<64x32xf32>
    %230 = vector.extract_strided_slice %227 {offsets = [0, 32], sizes = [64, 32], strides = [1, 1]} : vector<64x96xf32> to vector<64x32xf32>
    %231 = arith.mulf %230, %92 : vector<64x32xf32>
    %232 = vector.extract_strided_slice %227 {offsets = [0, 64], sizes = [64, 32], strides = [1, 1]} : vector<64x96xf32> to vector<64x32xf32>
    %233 = arith.mulf %232, %92 : vector<64x32xf32>
    %cst_62 = arith.constant dense<0.000000e+00> : vector<64x64xf32>
    %234 = tpu.matmul %229, %231, %cst_62 {dimension_numbers = #tpu.dot_dimension_numbers<[1], [1], [0], [0], [0, 0, 1, 0], [], []>} : vector<64x32xf32>, vector<64x32xf32>, vector<64x64xf32> -> vector<64x64xf32>
    %235 = arith.addf %234, %81 : vector<64x64xf32>
    %cst_63 = arith.constant dense<0xFF800000> : vector<64xf32>
    %236 = vector.multi_reduction <maximumf>, %235, %cst_63 [1] : vector<64x64xf32> to vector<64xf32>
    %237 = vector.shape_cast %236 : vector<64xf32> to vector<64x1xf32>
    %238 = vector.broadcast %237 : vector<64x1xf32> to vector<64x64xf32>
    %239 = arith.subf %235, %238 : vector<64x64xf32>
    %240 = math.exp %239 : vector<64x64xf32>
    %cst_64 = arith.constant dense<0.000000e+00> : vector<64xf32>
    %241 = vector.multi_reduction <add>, %240, %cst_64 [1] : vector<64x64xf32> to vector<64xf32>
    %242 = vector.shape_cast %241 : vector<64xf32> to vector<64x1xf32>
    %243 = vector.broadcast %242 : vector<64x1xf32> to vector<64x64xf32>
    %244 = arith.divf %240, %243 : vector<64x64xf32>
    %cst_65 = arith.constant dense<0.000000e+00> : vector<64x32xf32>
    %245 = tpu.matmul %244, %233, %cst_65 {dimension_numbers = #tpu.dot_dimension_numbers<[1], [0], [0], [1], [0, 0, 1, 1], [], []>} : vector<64x64xf32>, vector<64x32xf32>, vector<64x32xf32> -> vector<64x32xf32>
    %246 = vector.extract_strided_slice %245 {offsets = [0, 0], sizes = [16, 32], strides = [1, 1]} : vector<64x32xf32> to vector<16x32xf32>
    %247 = vector.extract_strided_slice %245 {offsets = [16, 0], sizes = [16, 32], strides = [1, 1]} : vector<64x32xf32> to vector<16x32xf32>
    %248 = arith.addf %246, %247 : vector<16x32xf32>
    %249 = vector.extract_strided_slice %245 {offsets = [32, 0], sizes = [16, 32], strides = [1, 1]} : vector<64x32xf32> to vector<16x32xf32>
    %250 = arith.addf %248, %249 : vector<16x32xf32>
    %251 = vector.extract_strided_slice %245 {offsets = [48, 0], sizes = [16, 32], strides = [1, 1]} : vector<64x32xf32> to vector<16x32xf32>
    %252 = arith.addf %250, %251 : vector<16x32xf32>
    %cst_66 = arith.constant dense<0.000000e+00> : vector<16x32xf32>
    %253 = tpu.matmul %252, %211, %cst_66 {dimension_numbers = #tpu.dot_dimension_numbers<[1], [0], [0], [1], [0, 0, 1, 1], [], []>} : vector<16x32xf32>, vector<32x32xf32>, vector<16x32xf32> -> vector<16x32xf32>
    %254 = vector.broadcast %217 : vector<1x32xf32> to vector<16x32xf32>
    %255 = arith.addf %253, %254 : vector<16x32xf32>
    %256 = arith.addf %255, %207 : vector<16x32xf32>
    %cst_67 = arith.constant dense<0.000000e+00> : vector<16xf32>
    %257 = vector.multi_reduction <add>, %256, %cst_67 [1] : vector<16x32xf32> to vector<16xf32>
    %258 = vector.shape_cast %257 : vector<16xf32> to vector<16x1xf32>
    %cst_68 = arith.constant 3.200000e+01 : f32
    %259 = vector.broadcast %cst_68 : f32 to vector<16x1xf32>
    %260 = arith.divf %258, %259 : vector<16x1xf32>
    %261 = vector.broadcast %260 : vector<16x1xf32> to vector<16x32xf32>
    %262 = arith.subf %256, %261 : vector<16x32xf32>
    %263 = arith.mulf %262, %262 : vector<16x32xf32>
    %cst_69 = arith.constant dense<0.000000e+00> : vector<16xf32>
    %264 = vector.multi_reduction <add>, %263, %cst_69 [1] : vector<16x32xf32> to vector<16xf32>
    %265 = vector.shape_cast %264 : vector<16xf32> to vector<16x1xf32>
    %cst_70 = arith.constant 3.200000e+01 : f32
    %266 = vector.broadcast %cst_70 : f32 to vector<16x1xf32>
    %267 = arith.divf %265, %266 : vector<16x1xf32>
    %268 = vector.broadcast %260 : vector<16x1xf32> to vector<16x32xf32>
    %269 = arith.subf %256, %268 : vector<16x32xf32>
    %cst_71 = arith.constant 9.99999996E-13 : f32
    %270 = vector.broadcast %cst_71 : f32 to vector<16x1xf32>
    %271 = arith.addf %267, %270 : vector<16x1xf32>
    %272 = math.rsqrt %271 : vector<16x1xf32>
    %273 = vector.broadcast %272 : vector<16x1xf32> to vector<16x32xf32>
    %274 = arith.mulf %269, %273 : vector<16x32xf32>
    %275 = vector.broadcast %218 : vector<1x32xf32> to vector<16x32xf32>
    %276 = arith.mulf %274, %275 : vector<16x32xf32>
    %277 = vector.broadcast %219 : vector<1x32xf32> to vector<16x32xf32>
    %278 = arith.addf %276, %277 : vector<16x32xf32>
    %cst_72 = arith.constant dense<0.000000e+00> : vector<16x64xf32>
    %279 = tpu.matmul %278, %212, %cst_72 {dimension_numbers = #tpu.dot_dimension_numbers<[1], [0], [0], [1], [0, 0, 1, 1], [], []>} : vector<16x32xf32>, vector<32x64xf32>, vector<16x64xf32> -> vector<16x64xf32>
    %280 = vector.broadcast %220 : vector<1x64xf32> to vector<16x64xf32>
    %281 = arith.addf %279, %280 : vector<16x64xf32>
    %cst_73 = arith.constant 5.000000e-01 : f32
    %282 = vector.broadcast %cst_73 : f32 to vector<16x64xf32>
    %283 = arith.mulf %282, %281 : vector<16x64xf32>
    %cst_74 = arith.constant 4.471500e-02 : f32
    %284 = vector.broadcast %cst_74 : f32 to vector<16x64xf32>
    %285 = arith.mulf %284, %281 : vector<16x64xf32>
    %286 = arith.mulf %285, %281 : vector<16x64xf32>
    %287 = arith.mulf %286, %281 : vector<16x64xf32>
    %288 = arith.addf %281, %287 : vector<16x64xf32>
    %cst_75 = arith.constant 0.797884583 : f32
    %289 = vector.broadcast %cst_75 : f32 to vector<16x64xf32>
    %290 = arith.mulf %289, %288 : vector<16x64xf32>
    %291 = math.tanh %290 : vector<16x64xf32>
    %cst_76 = arith.constant 1.000000e+00 : f32
    %292 = vector.broadcast %cst_76 : f32 to vector<16x64xf32>
    %293 = arith.addf %292, %291 : vector<16x64xf32>
    %294 = arith.mulf %283, %293 : vector<16x64xf32>
    %cst_77 = arith.constant dense<0.000000e+00> : vector<16x32xf32>
    %295 = tpu.matmul %294, %213, %cst_77 {dimension_numbers = #tpu.dot_dimension_numbers<[1], [1], [0], [0], [0, 0, 1, 0], [], []>} : vector<16x64xf32>, vector<32x64xf32>, vector<16x32xf32> -> vector<16x32xf32>
    %296 = vector.broadcast %221 : vector<1x32xf32> to vector<16x32xf32>
    %297 = arith.addf %295, %296 : vector<16x32xf32>
    %298 = arith.addf %297, %278 : vector<16x32xf32>
    %cst_78 = arith.constant dense<0.000000e+00> : vector<16xf32>
    %299 = vector.multi_reduction <add>, %298, %cst_78 [1] : vector<16x32xf32> to vector<16xf32>
    %300 = vector.shape_cast %299 : vector<16xf32> to vector<16x1xf32>
    %cst_79 = arith.constant 3.200000e+01 : f32
    %301 = vector.broadcast %cst_79 : f32 to vector<16x1xf32>
    %302 = arith.divf %300, %301 : vector<16x1xf32>
    %303 = vector.broadcast %302 : vector<16x1xf32> to vector<16x32xf32>
    %304 = arith.subf %298, %303 : vector<16x32xf32>
    %305 = arith.mulf %304, %304 : vector<16x32xf32>
    %cst_80 = arith.constant dense<0.000000e+00> : vector<16xf32>
    %306 = vector.multi_reduction <add>, %305, %cst_80 [1] : vector<16x32xf32> to vector<16xf32>
    %307 = vector.shape_cast %306 : vector<16xf32> to vector<16x1xf32>
    %cst_81 = arith.constant 3.200000e+01 : f32
    %308 = vector.broadcast %cst_81 : f32 to vector<16x1xf32>
    %309 = arith.divf %307, %308 : vector<16x1xf32>
    %310 = vector.broadcast %302 : vector<16x1xf32> to vector<16x32xf32>
    %311 = arith.subf %298, %310 : vector<16x32xf32>
    %cst_82 = arith.constant 9.99999996E-13 : f32
    %312 = vector.broadcast %cst_82 : f32 to vector<16x1xf32>
    %313 = arith.addf %309, %312 : vector<16x1xf32>
    %314 = math.rsqrt %313 : vector<16x1xf32>
    %315 = vector.broadcast %314 : vector<16x1xf32> to vector<16x32xf32>
    %316 = arith.mulf %311, %315 : vector<16x32xf32>
    %317 = vector.broadcast %222 : vector<1x32xf32> to vector<16x32xf32>
    %318 = arith.mulf %316, %317 : vector<16x32xf32>
    %319 = vector.broadcast %223 : vector<1x32xf32> to vector<16x32xf32>
    %320 = arith.addf %318, %319 : vector<16x32xf32>
    %cst_83 = arith.constant dense<0.000000e+00> : vector<16x8xf32>
    %321 = tpu.matmul %320, %7, %cst_83 {dimension_numbers = #tpu.dot_dimension_numbers<[1], [1], [0], [0], [0, 0, 1, 0], [], []>} : vector<16x32xf32>, vector<8x32xf32>, vector<16x8xf32> -> vector<16x8xf32>
    %322 = vector.broadcast %6 : vector<1x8xf32> to vector<16x8xf32>
    %323 = arith.addf %321, %322 : vector<16x8xf32>
    %c0_84 = arith.constant 0 : index
    %c0_85 = arith.constant 0 : index
    %324 = vector.load %arg6[%c0_84, %c0_85] : memref<16x8xf32, #tpu.memory_space<vmem>>, vector<16x8xf32>
    tpu.vector_store %arg6[%c0_84, %c0_85], %323 {strides = array<i32>} : memref<16x8xf32, #tpu.memory_space<vmem>>, vector<16x8xf32>,
    %325 = arith.sitofp %9 : vector<16x1xi32> to vector<16x1xf32>
    %cst_86 = arith.constant 5.000000e+00 : f32
    %326 = vector.broadcast %cst_86 : f32 to vector<16x1xf32>
    %327 = arith.divf %325, %326 : vector<16x1xf32>
    %328 = math.floor %327 : vector<16x1xf32>
    %cst_87 = arith.constant 1.000000e+00 : f32
    %329 = vector.broadcast %cst_87 : f32 to vector<16x1xf32>
    %330 = arith.subf %328, %329 : vector<16x1xf32>
    %cst_88 = arith.constant 5.000000e+00 : f32
    %331 = vector.broadcast %cst_88 : f32 to vector<16x1xf32>
    %332 = arith.mulf %328, %331 : vector<16x1xf32>
    %333 = arith.subf %325, %332 : vector<16x1xf32>
    %cst_89 = arith.constant 1.000000e+00 : f32
    %334 = vector.broadcast %cst_89 : f32 to vector<16x1xf32>
    %335 = arith.subf %333, %334 : vector<16x1xf32>
    %c0_i32 = arith.constant 0 : i32
    %336 = vector.broadcast %c0_i32 : i32 to vector<16x1xi32>
    %337 = arith.cmpi sgt, %10, %336 : vector<16x1xi32>
    %cst_90 = arith.constant -1.000000e+00 : f32
    %338 = vector.broadcast %cst_90 : f32 to vector<16x1xf32>
    %339 = arith.select %337, %330, %338 : vector<16x1xi1>, vector<16x1xf32>
    %cst_91 = arith.constant -1.000000e+00 : f32
    %340 = vector.broadcast %cst_91 : f32 to vector<16x1xf32>
    %341 = arith.select %337, %335, %340 : vector<16x1xi1>, vector<16x1xf32>
    %342 = vector.extract_strided_slice %323 {offsets = [0, 0], sizes = [16, 4], strides = [1, 1]} : vector<16x8xf32> to vector<16x4xf32>
    %343 = vector.extract_strided_slice %323 {offsets = [0, 4], sizes = [16, 4], strides = [1, 1]} : vector<16x8xf32> to vector<16x4xf32>
    %cst_92 = arith.constant dense<0xFF800000> : vector<16xf32>
    %344 = vector.multi_reduction <maximumf>, %343, %cst_92 [1] : vector<16x4xf32> to vector<16xf32>
    %345 = vector.shape_cast %344 : vector<16xf32> to vector<16x1xf32>
    %346 = vector.broadcast %345 : vector<16x1xf32> to vector<16x4xf32>
    %347 = arith.subf %343, %346 : vector<16x4xf32>
    %348 = math.exp %347 : vector<16x4xf32>
    %cst_93 = arith.constant dense<0.000000e+00> : vector<16xf32>
    %349 = vector.multi_reduction <add>, %348, %cst_93 [1] : vector<16x4xf32> to vector<16xf32>
    %350 = vector.shape_cast %349 : vector<16xf32> to vector<16x1xf32>
    %351 = math.log %350 : vector<16x1xf32>
    %352 = arith.addf %351, %345 : vector<16x1xf32>
    %353 = tpu.iota {dimensions = array<i32: 1>} : vector<16x4xi32>
    %354 = arith.sitofp %353 : vector<16x4xi32> to vector<16x4xf32>
    %355 = vector.broadcast %341 : vector<16x1xf32> to vector<16x4xf32>
    %356 = arith.cmpf oeq, %354, %355 : vector<16x4xf32>
    %cst_94 = arith.constant 0.000000e+00 : f32
    %357 = vector.broadcast %cst_94 : f32 to vector<16x4xf32>
    %358 = arith.select %356, %343, %357 : vector<16x4xi1>, vector<16x4xf32>
    %cst_95 = arith.constant dense<0.000000e+00> : vector<16xf32>
    %359 = vector.multi_reduction <add>, %358, %cst_95 [1] : vector<16x4xf32> to vector<16xf32>
    %360 = vector.shape_cast %359 : vector<16xf32> to vector<16x1xf32>
    %cst_96 = arith.constant 0.000000e+00 : f32
    %361 = vector.broadcast %cst_96 : f32 to vector<16x1xf32>
    %362 = arith.cmpf oge, %341, %361 : vector<16x1xf32>
    %363 = arith.subf %352, %360 : vector<16x1xf32>
    %cst_97 = arith.constant 0.000000e+00 : f32
    %364 = vector.broadcast %cst_97 : f32 to vector<16x1xf32>
    %365 = arith.select %362, %363, %364 : vector<16x1xi1>, vector<16x1xf32>
    %cst_98 = arith.constant dense<0.000000e+00> : vector<1xf32>
    %366 = vector.multi_reduction <add>, %365, %cst_98 [0] : vector<16x1xf32> to vector<1xf32>
    %367 = vector.shape_cast %366 : vector<1xf32> to vector<1x1xf32>
    %cst_99 = arith.constant 1.000000e+00 : f32
    %cst_100 = arith.constant 0.000000e+00 : f32
    %368 = vector.broadcast %cst_99 : f32 to vector<16x1xf32>
    %369 = vector.broadcast %cst_100 : f32 to vector<16x1xf32>
    %370 = arith.select %362, %368, %369 : vector<16x1xi1>, vector<16x1xf32>
    %cst_101 = arith.constant dense<0.000000e+00> : vector<1xf32>
    %371 = vector.multi_reduction <add>, %370, %cst_101 [0] : vector<16x1xf32> to vector<1xf32>
    %372 = vector.shape_cast %371 : vector<1xf32> to vector<1x1xf32>
    %cst_102 = arith.constant 1.000000e+00 : f32
    %373 = vector.broadcast %cst_102 : f32 to vector<1x1xf32>
    %374 = arith.maximumf %372, %373 : vector<1x1xf32>
    %375 = arith.divf %367, %374 : vector<1x1xf32>
    %cst_103 = arith.constant dense<0xFF800000> : vector<16xf32>
    %376 = vector.multi_reduction <maximumf>, %342, %cst_103 [1] : vector<16x4xf32> to vector<16xf32>
    %377 = vector.shape_cast %376 : vector<16xf32> to vector<16x1xf32>
    %378 = vector.broadcast %377 : vector<16x1xf32> to vector<16x4xf32>
    %379 = arith.subf %342, %378 : vector<16x4xf32>
    %380 = math.exp %379 : vector<16x4xf32>
    %cst_104 = arith.constant dense<0.000000e+00> : vector<16xf32>
    %381 = vector.multi_reduction <add>, %380, %cst_104 [1] : vector<16x4xf32> to vector<16xf32>
    %382 = vector.shape_cast %381 : vector<16xf32> to vector<16x1xf32>
    %383 = math.log %382 : vector<16x1xf32>
    %384 = arith.addf %383, %377 : vector<16x1xf32>
    %385 = tpu.iota {dimensions = array<i32: 1>} : vector<16x4xi32>
    %386 = arith.sitofp %385 : vector<16x4xi32> to vector<16x4xf32>
    %387 = vector.broadcast %339 : vector<16x1xf32> to vector<16x4xf32>
    %388 = arith.cmpf oeq, %386, %387 : vector<16x4xf32>
    %cst_105 = arith.constant 0.000000e+00 : f32
    %389 = vector.broadcast %cst_105 : f32 to vector<16x4xf32>
    %390 = arith.select %388, %342, %389 : vector<16x4xi1>, vector<16x4xf32>
    %cst_106 = arith.constant dense<0.000000e+00> : vector<16xf32>
    %391 = vector.multi_reduction <add>, %390, %cst_106 [1] : vector<16x4xf32> to vector<16xf32>
    %392 = vector.shape_cast %391 : vector<16xf32> to vector<16x1xf32>
    %cst_107 = arith.constant 0.000000e+00 : f32
    %393 = vector.broadcast %cst_107 : f32 to vector<16x1xf32>
    %394 = arith.cmpf oge, %339, %393 : vector<16x1xf32>
    %395 = arith.subf %384, %392 : vector<16x1xf32>
    %cst_108 = arith.constant 0.000000e+00 : f32
    %396 = vector.broadcast %cst_108 : f32 to vector<16x1xf32>
    %397 = arith.select %394, %395, %396 : vector<16x1xi1>, vector<16x1xf32>
    %cst_109 = arith.constant dense<0.000000e+00> : vector<1xf32>
    %398 = vector.multi_reduction <add>, %397, %cst_109 [0] : vector<16x1xf32> to vector<1xf32>
    %399 = vector.shape_cast %398 : vector<1xf32> to vector<1x1xf32>
    %cst_110 = arith.constant 1.000000e+00 : f32
    %cst_111 = arith.constant 0.000000e+00 : f32
    %400 = vector.broadcast %cst_110 : f32 to vector<16x1xf32>
    %401 = vector.broadcast %cst_111 : f32 to vector<16x1xf32>
    %402 = arith.select %394, %400, %401 : vector<16x1xi1>, vector<16x1xf32>
    %cst_112 = arith.constant dense<0.000000e+00> : vector<1xf32>
    %403 = vector.multi_reduction <add>, %402, %cst_112 [0] : vector<16x1xf32> to vector<1xf32>
    %404 = vector.shape_cast %403 : vector<1xf32> to vector<1x1xf32>
    %cst_113 = arith.constant 1.000000e+00 : f32
    %405 = vector.broadcast %cst_113 : f32 to vector<1x1xf32>
    %406 = arith.maximumf %404, %405 : vector<1x1xf32>
    %407 = arith.divf %399, %406 : vector<1x1xf32>
    %408 = arith.addf %375, %407 : vector<1x1xf32>
    %c0_114 = arith.constant 0 : index
    %c0_115 = arith.constant 0 : index
    %409 = vector.load %arg7[%c0_114, %c0_115] : memref<1x1xf32, #tpu.memory_space<vmem>>, vector<1x1xf32>
    tpu.vector_store %arg7[%c0_114, %c0_115], %408 {strides = array<i32>} : memref<1x1xf32, #tpu.memory_space<vmem>>, vector<1x1xf32>,
    return
  }
  func.func @transform_0(%arg0: i32) -> (i32, i32) {
    %c0_i32 = arith.constant 0 : i32
    %c0_i32_0 = arith.constant 0 : i32
    %c0_i32_1 = arith.constant 0 : i32
    return %c0_i32, %c0_i32_0 : i32, i32
  }
  func.func @transform_1(%arg0: i32) -> (i32, i32) {
    %c0_i32 = arith.constant 0 : i32
    %c0_i32_0 = arith.constant 0 : i32
    %c0_i32_1 = arith.constant 0 : i32
    return %c0_i32, %c0_i32_0 : i32, i32
  }
  func.func @transform_2(%arg0: i32) -> (i32, i32) {
    %c0_i32 = arith.constant 0 : i32
    %c0_i32_0 = arith.constant 0 : i32
    %c0_i32_1 = arith.constant 0 : i32
    return %c0_i32, %c0_i32_0 : i32, i32
  }
  func.func @transform_3(%arg0: i32) -> (i32, i32, i32) {
    %c0_i32 = arith.constant 0 : i32
    %c0_i32_0 = arith.constant 0 : i32
    %c0_i32_1 = arith.constant 0 : i32
    %c0_i32_2 = arith.constant 0 : i32
    return %c0_i32, %c0_i32_0, %c0_i32_1 : i32, i32, i32
  }
  func.func @transform_4(%arg0: i32) -> (i32, i32, i32) {
    %c0_i32 = arith.constant 0 : i32
    %c0_i32_0 = arith.constant 0 : i32
    %c0_i32_1 = arith.constant 0 : i32
    %c0_i32_2 = arith.constant 0 : i32
    return %c0_i32, %c0_i32_0, %c0_i32_1 : i32, i32, i32
  }
  func.func @transform_5(%arg0: i32) -> (i32, i32) {
    %c0_i32 = arith.constant 0 : i32
    %c0_i32_0 = arith.constant 0 : i32
    %c0_i32_1 = arith.constant 0 : i32
    return %c0_i32, %c0_i32_0 : i32, i32
  }
  func.func @transform_6(%arg0: i32) -> (i32, i32) {
    %c0_i32 = arith.constant 0 : i32
    %c0_i32_0 = arith.constant 0 : i32
    %c0_i32_1 = arith.constant 0 : i32
    return %c0_i32, %c0_i32_0 : i32, i32
  }
}

</mosaic_0001>

<llo_original>
// kernel: tpu_custom_call.1
$region0: #{tpu_custom_call.1}
  #allocation0 [shape = 'u32[]', space=smem, size = 0x4, offset = 0x4, fixed_abs, tag = 'smem constant byte address 0x4 - core index']
  #allocation1 [shape = 'u32[144,128]{1,0:T(1,128)}', space=vmem, size = 0x12000, scoped, tag = 'internal scratch']
  %s0 = inlined_call_operand.vmem [shape: s32[16,3], index: 0, kind: input, shape index: {}]
  %s1 = inlined_call_operand.vmem [shape: f32[1,64], index: 1, kind: input, shape index: {}]
  %s2 = inlined_call_operand.vmem [shape: f32[93,32], index: 2, kind: input, shape index: {}]
  %s3 = inlined_call_operand.vmem [shape: f32[2,32,256], index: 3, kind: input, shape index: {}]
  %s4 = inlined_call_operand.vmem [shape: f32[2,8,96], index: 4, kind: input, shape index: {}]
  %s5 = inlined_call_operand.vmem [shape: f32[16,8], index: 5, kind: output, shape index: {0}]
  %s6 = inlined_call_operand.hbm [shape: f32[1,1], index: 6, kind: output, shape index: {1}]
  %7 = xla_tuple %s5, %s6
  %s8 = sld [smem:[#allocation0]]
  $region38: #{tpu_custom_call.1} parent=0
    _
  %s10 = ssub.s32 1, %s8
  %s11 = scalar_select 0, %s10, %s8
  $region1: #{tpu_custom_call.1} parent=0
    #allocation2 [shape = 'u8[512]{0}', space=vmem, size = 0x400, scoped, tag = 'output window, operand 1, single buffered']
    #allocation3 [shape = 's32[1]{0}', space=sflag, size = 0x4, scoped, tag = 'scoped memory for tpu_custom_call.1']
    %12 = vsyncpa [#allocation3], 0
    // Predicated region
    $region2: #{tpu_custom_call.1} parent=1 // pred_check
      _
    $region3: #{tpu_custom_call.1} parent=1 // pred_check_branch
      %14 = sbr.rel (0) target = $region5
    $region4: #{tpu_custom_call.1} parent=1 // pred_region
      _
    $region5: #{tpu_custom_call.1} parent=1 // pred_fallthru
      _
    // Predicated region
    $region6: #{tpu_custom_call.1} parent=1 // pred_check
      _
    $region7: #{tpu_custom_call.1} parent=1 // pred_check_branch
      %16 = sbr.rel (0) target = $region9
    $region8: #{tpu_custom_call.1} parent=1 // pred_region
      _
    $region9: #{tpu_custom_call.1} parent=1 // pred_fallthru
      _
    // Predicated region
    $region10: #{tpu_custom_call.1} parent=1 // pred_check
      _
    $region11: #{tpu_custom_call.1} parent=1 // pred_check_branch
      %18 = sbr.rel (0) target = $region13
    $region12: #{tpu_custom_call.1} parent=1 // pred_region
      _
    $region13: #{tpu_custom_call.1} parent=1 // pred_fallthru
      _
    // Predicated region
    $region14: #{tpu_custom_call.1} parent=1 // pred_check
      _
    $region15: #{tpu_custom_call.1} parent=1 // pred_check_branch
      %20 = sbr.rel (0) target = $region17
    $region16: #{tpu_custom_call.1} parent=1 // pred_region
      _
    $region17: #{tpu_custom_call.1} parent=1 // pred_fallthru
      _
    // Predicated region
    $region18: #{tpu_custom_call.1} parent=1 // pred_check
      _
    $region19: #{tpu_custom_call.1} parent=1 // pred_check_branch
      %22 = sbr.rel (0) target = $region21
    $region20: #{tpu_custom_call.1} parent=1 // pred_region
      _
    $region21: #{tpu_custom_call.1} parent=1 // pred_fallthru
      _
    %v23 = vld [vmem:[%s2] sm:$0xff]
    %v24 = vld [vmem:[%s2 + $0x8] sm:$0xff]
    %v25 = vld [vmem:[%s2 + $0x10] sm:$0xff]
    %v26 = vld [vmem:[%s2 + $0x18] sm:$0xff]
    %v27 = vld [vmem:[%s2 + $0x20] sm:$0xff]
    %v28 = vld [vmem:[%s2 + $0x28] sm:$0xff]
    %v29 = vld [vmem:[%s2 + $0x30] sm:$0xff]
    %v30 = vld [vmem:[%s2 + $0x38] sm:$0xff]
    %v31 = vld [vmem:[%s2 + $0x40] sm:$0xff]
    %v32 = vld [vmem:[%s2 + $0x50] sm:$0xff]
    %v33 = vld [vmem:[%s2 + $0x58] sm:$0x1f]
    %v34 = vld [vmem:[%s0] sm:$0xff]
    %v35 = vld [vmem:[%s0 + $0x8] sm:$0xff]
    %v36 = vld [vmem:[%s1] sm:$0x1]
    %v37 = vlaneseq
    %v38 = vand.u32 %v37, 127
    %39 = vset.pattern.permute.xlu0 0
    %40 = vperm.xlu0 %39, %v34
    %v41 = vpop.permute.xlu0 %40
    %42 = vset.pattern.permute.xlu0 0
    %43 = vperm.xlu0 %42, %v35
    %v44 = vpop.permute.xlu0 %43
    %vm45 = vcmp.eq.s32.totalorder %v38, %v41
    %vm46 = vcmp.eq.s32.totalorder %v38, %v44
    %v47 = vsel %vm45, 1.0, 0.0
    %v48 = vsel %vm46, 1.0, 0.0
    %vm49 = vcmask 523264
    %v51 = vsel %vm49, %v47, 0
    %v54 = vsel %vm49, %v48, 0
    %56 = vmatprep.subr.mxu0 0.0
    %57 = vmatpush1.msra.mxu0 0.0
    %58 = vmatprep.subr.mxu0 0.0
    %59 = vmatpush1.msra.mxu0 0.0
    %60 = vmatprep.subr.mxu0 0.0
    %61 = vmatpush1.msra.mxu0 0.0
    %62 = vmatprep.subr.mxu0 0.0
    %63 = vmatpush1.msra.mxu0 0.0
    %64 = vmatprep.subr.mxu0 0.0
    %65 = vmatpush1.msra.mxu0 0.0
    %66 = vmatprep.subr.mxu0 0.0
    %67 = vmatpush1.msra.mxu0 0.0
    %68 = vmatprep.subr.mxu0 0.0
    %69 = vmatpush1.msra.mxu0 0.0
    %70 = vmatprep.subr.mxu0 0.0
    %71 = vmatpush1.msra.mxu0 0.0
    %72 = vmatprep.subr.mxu0 0.0
    %73 = vmatpush1.msra.mxu0 %v30
    %74 = vmatprep.subr.mxu0 0.0
    %75 = vmatpush1.msra.mxu0 %v29
    %76 = vmatprep.subr.mxu0 0.0
    %77 = vmatpush1.msra.mxu0 %v28
    %78 = vmatprep.subr.mxu0 0.0
    %79 = vmatpush1.msra.mxu0 %v27
    %80 = vmatprep.subr.mxu0 0.0
    %81 = vmatpush1.msra.mxu0 %v26
    %82 = vmatprep.subr.mxu0 0.0
    %83 = vmatpush1.msra.mxu0 %v25
    %84 = vmatprep.subr.mxu0 0.0
    %85 = vmatpush1.msra.mxu0 %v24
    %86 = vmatprep.subr.mxu0 0.0
    %87 = vmatpush1.msra.mxu0 %v23
    %88 = vmatprep.subr.mxu0 0.0
    %89 = vmatpush2.msra.mxu0 0.0
    %90 = vmatprep.subr.mxu0 0.0
    %91 = vmatpush2.msra.mxu0 0.0
    %92 = vmatprep.subr.mxu0 0.0
    %93 = vmatpush2.msra.mxu0 0.0
    %94 = vmatprep.subr.mxu0 0.0
    %95 = vmatpush2.msra.mxu0 0.0
    %96 = vmatprep.subr.mxu0 0.0
    %97 = vmatpush2.msra.mxu0 0.0
    %98 = vmatprep.subr.mxu0 0.0
    %99 = vmatpush2.msra.mxu0 0.0
    %100 = vmatprep.subr.mxu0 0.0
    %101 = vmatpush2.msra.mxu0 0.0
    %102 = vmatprep.subr.mxu0 0.0
    %103 = vmatpush2.msra.mxu0 0.0
    %104 = vmatprep.subr.mxu0 0.0
    %105 = vmatpush2.msra.mxu0 0.0
    %106 = vmatprep.subr.mxu0 0.0
    %107 = vmatpush2.msra.mxu0 0.0
    %108 = vmatprep.subr.mxu0 0.0
    %109 = vmatpush2.msra.mxu0 0.0
    %110 = vmatprep.subr.mxu0 0.0
    %111 = vmatpush2.msra.mxu0 0.0
    %112 = vmatprep.subr.mxu0 0.0
    %113 = vmatpush2.msra.mxu0 0.0
    %114 = vmatprep.subr.mxu0 0.0
    %115 = vmatpush2.msra.mxu0 0.0
    %116 = vmatprep.subr.mxu0 0.0
    %117 = vmatpush2.msra.mxu0 0.0
    %118 = vmatprep.subr.mxu0 0.0
    %119 = vmatpush2.msra.mxu0 0.0
    %120 = vmatprep.mubr.f32.mxu0 0.0
    %121 = vmatmul.mubr.f32.gmra.mxu0 %v51
    %v122 = vpop.f32.mrf.mxu0
    %v123 = vadd.f32 %v31, %v122
    %v124 = vpop.f32.mrf.mxu0
    %125 = vmatprep.mubr.f32.mxu0 0.0
    %126 = vmatmul.mubr.f32.gmra.mxu0 %v54
    %v127 = vpop.f32.mrf.mxu0
    %v128 = vadd.f32 %v31, %v127
    %v129 = vpop.f32.mrf.mxu0
    %130 = vdwg.mxu0
    %v131 = vlaneseq
    %v132 = vshrl.u32 %v131, 7
    %v133 = vsub.s32 0, %v132
    %v134 = vrot.slane %v32, %v133
    %v135 = vadd.f32 %v123, %v134
    %v136 = vadd.f32 %v128, %v134
    %vm137 = vcmask 261120
    %v138 = vsel %vm137, %v135, 0.0
    %139 = vadd.xlane.f32.xlu0 %v138
    %v140 = vpop.xlane.xlu0 %139
    %v141 = vsel %vm137, %v136, 0.0
    %142 = vadd.xlane.f32.xlu0 %v141
    %v143 = vpop.xlane.xlu0 %142
    %v144 = vrcp.pop 32.0
    %v145 = vmul.f32 %v140, %v144
    %v146 = vmul.f32 %v143, %v144
    %v147 = vsub.f32 %v135, %v145
    %v148 = vsub.f32 %v136, %v146
    %v149 = vmul.f32 %v147, %v147
    %v150 = vmul.f32 %v148, %v148
    %v151 = vsel %vm137, %v149, 0.0
    %152 = vadd.xlane.f32.xlu0 %v151
    %v153 = vpop.xlane.xlu0 %152
    %v154 = vsel %vm137, %v150, 0.0
    %155 = vadd.xlane.f32.xlu0 %v154
    %v156 = vpop.xlane.xlu0 %155
    %v157 = vmul.f32 %v153, %v144
    %v158 = vmul.f32 %v156, %v144
    %v159 = vadd.f32 %v157, 1e-12
    %v160 = vadd.f32 %v158, 1e-12
    %v161 = vrsqrt.pop %v159
    %v162 = vrsqrt.pop %v160
    %v163 = vmul.f32 %v147, %v161
    %v164 = vmul.f32 %v148, %v162
    %v165 = vlaneseq
    %v166 = vshrl.u32 %v165, 7
    %v167 = vsub.s32 2, %v166
    %v168 = vrot.slane %v32, %v167
    %v169 = vmul.f32 %v163, %v168
    %v170 = vmul.f32 %v164, %v168
    %v171 = vlaneseq
    %v172 = vshrl.u32 %v171, 7
    %v173 = vsub.s32 3, %v172
    %v174 = vrot.slane %v32, %v173
    %v175 = vadd.f32 %v169, %v174
    %v176 = vadd.f32 %v170, %v174
    %v177 = vlaneseq
    %v178 = vshrl.u32 %v177, 7
    %v179 = vadd.s32 %v178, 8
    %v180 = vadd.s32 %v178, 16
    %v181 = vadd.s32 %v178, 24
    %v182 = vadd.s32 %v178, 32
    %v183 = vadd.s32 %v178, 40
    %v184 = vadd.s32 %v178, 48
    %v185 = vadd.s32 %v178, 56
    %v186 = vcvt.s32.f32 %v178
    %v187 = vcvt.s32.f32 %v179
    %v188 = vcvt.s32.f32 %v180
    %v189 = vcvt.s32.f32 %v181
    %v190 = vcvt.s32.f32 %v182
    %v191 = vcvt.s32.f32 %v183
    %v192 = vcvt.s32.f32 %v184
    %v193 = vcvt.s32.f32 %v185
    %v194 = vcvt.s32.f32 %v38
    %v195 = vrcp.pop 16.0
    %v196 = vmul.f32 %v186, %v195
    %v197 = vmul.f32 %v187, %v195
    %v198 = vmul.f32 %v188, %v195
    %v199 = vmul.f32 %v189, %v195
    %v200 = vmul.f32 %v190, %v195
    %v201 = vmul.f32 %v191, %v195
    %v202 = vmul.f32 %v192, %v195
    %v203 = vmul.f32 %v193, %v195
    %v204 = vfloor.f32 %v196
    %v205 = vfloor.f32 %v197
    %v206 = vfloor.f32 %v198
    %v207 = vfloor.f32 %v199
    %v208 = vfloor.f32 %v200
    %v209 = vfloor.f32 %v201
    %v210 = vfloor.f32 %v202
    %v211 = vfloor.f32 %v203
    %v212 = vmul.f32 %v194, %v195
    %v213 = vfloor.f32 %v212
    %v214 = vmul.f32 %v204, 16.0
    %v215 = vmul.f32 %v205, 16.0
    %v216 = vmul.f32 %v206, 16.0
    %v217 = vmul.f32 %v207, 16.0
    %v218 = vmul.f32 %v208, 16.0
    %v219 = vmul.f32 %v209, 16.0
    %v220 = vmul.f32 %v210, 16.0
    %v221 = vmul.f32 %v211, 16.0
    %v222 = vsub.f32 %v186, %v214
    %v223 = vsub.f32 %v187, %v215
    %v224 = vsub.f32 %v188, %v216
    %v225 = vsub.f32 %v189, %v217
    %v226 = vsub.f32 %v190, %v218
    %v227 = vsub.f32 %v191, %v219
    %v228 = vsub.f32 %v192, %v220
    %v229 = vsub.f32 %v193, %v221
    %v230 = vmul.f32 %v213, 16.0
    %v231 = vsub.f32 %v194, %v230
    %v232 = vrcp.pop 8.0
    %v233 = vmul.f32 %v222, %v232
    %v234 = vmul.f32 %v223, %v232
    %v235 = vmul.f32 %v224, %v232
    %v236 = vmul.f32 %v225, %v232
    %v237 = vmul.f32 %v226, %v232
    %v238 = vmul.f32 %v227, %v232
    %v239 = vmul.f32 %v228, %v232
    %v240 = vmul.f32 %v229, %v232
    %v241 = vfloor.f32 %v233
    %v242 = vfloor.f32 %v234
    %v243 = vfloor.f32 %v235
    %v244 = vfloor.f32 %v236
    %v245 = vfloor.f32 %v237
    %v246 = vfloor.f32 %v238
    %v247 = vfloor.f32 %v239
    %v248 = vfloor.f32 %v240
    %v249 = vmul.f32 %v231, %v232
    %v250 = vfloor.f32 %v249
    %vm251 = vcmp.eq.f32.partialorder %v204, %v213
    %vm252 = vcmp.eq.f32.partialorder %v205, %v213
    %vm253 = vcmp.eq.f32.partialorder %v206, %v213
    %vm254 = vcmp.eq.f32.partialorder %v207, %v213
    %vm255 = vcmp.eq.f32.partialorder %v208, %v213
    %vm256 = vcmp.eq.f32.partialorder %v209, %v213
    %vm257 = vcmp.eq.f32.partialorder %v210, %v213
    %vm258 = vcmp.eq.f32.partialorder %v211, %v213
    %vm259 = vcmp.eq.f32.partialorder %v241, %v250
    %vm260 = vcmp.eq.f32.partialorder %v242, %v250
    %vm261 = vcmp.eq.f32.partialorder %v243, %v250
    %vm262 = vcmp.eq.f32.partialorder %v244, %v250
    %vm263 = vcmp.eq.f32.partialorder %v245, %v250
    %vm264 = vcmp.eq.f32.partialorder %v246, %v250
    %vm265 = vcmp.eq.f32.partialorder %v247, %v250
    %vm266 = vcmp.eq.f32.partialorder %v248, %v250
    %vm267 = vmand %vm251, %vm259
    %vm268 = vmand %vm252, %vm260
    %vm269 = vmand %vm253, %vm261
    %vm270 = vmand %vm254, %vm262
    %vm271 = vmand %vm255, %vm263
    %vm272 = vmand %vm256, %vm264
    %vm273 = vmand %vm257, %vm265
    %vm274 = vmand %vm258, %vm266
    %vm275 = vcmp.gt.f32.partialorder %v36, 0.5
    %v276 = vsel %vm275, 1, 0
    %v277 = vlaneseq
    %v278 = vshrl.u32 %v277, 7
    %v279 = vsub.s32 0, %v278
    %v280 = vrot.slane %v276, %v279
    %vm281 = vcmp.eq.s32.totalorder %v280, 1
    %vm282 = vmand %vm267, %vm281
    %vm283 = vmand %vm268, %vm281
    %vm284 = vmand %vm269, %vm281
    %vm285 = vmand %vm270, %vm281
    %vm286 = vmand %vm271, %vm281
    %vm287 = vmand %vm272, %vm281
    %vm288 = vmand %vm273, %vm281
    %vm289 = vmand %vm274, %vm281
    %v290 = vsel %vm282, 0.0, -10000.0
    %v291 = vsel %vm283, 0.0, -10000.0
    %v292 = vsel %vm284, 0.0, -10000.0
    %v293 = vsel %vm285, 0.0, -10000.0
    %v294 = vsel %vm286, 0.0, -10000.0
    %v295 = vsel %vm287, 0.0, -10000.0
    %v296 = vsel %vm288, 0.0, -10000.0
    %v297 = vsel %vm289, 0.0, -10000.0
    %v298 = vmul.f32 %v194, %v232
    %v299 = vfloor.f32 %v298
    %vm300 = vcmp.eq.f32.partialorder %v299, %v204
    %vm301 = vcmp.eq.f32.partialorder %v299, %v205
    %vm302 = vcmp.eq.f32.partialorder %v299, %v206
    %vm303 = vcmp.eq.f32.partialorder %v299, %v207
    %vm304 = vcmp.eq.f32.partialorder %v299, %v208
    %vm305 = vcmp.eq.f32.partialorder %v299, %v209
    %vm306 = vcmp.eq.f32.partialorder %v299, %v210
    %vm307 = vcmp.eq.f32.partialorder %v299, %v211
    %v308 = vsel %vm300, 1.0, 0.0
    %v309 = vsel %vm301, 1.0, 0.0
    %v310 = vsel %vm302, 1.0, 0.0
    %v311 = vsel %vm303, 1.0, 0.0
    %v312 = vsel %vm304, 1.0, 0.0
    %v313 = vsel %vm305, 1.0, 0.0
    %v314 = vsel %vm306, 1.0, 0.0
    %v315 = vsel %vm307, 1.0, 0.0
    %v316 = vmul.f32 %v308, 0.35355338
    %v317 = vmul.f32 %v309, 0.35355338
    %v318 = vmul.f32 %v310, 0.35355338
    %v319 = vmul.f32 %v311, 0.35355338
    %v320 = vmul.f32 %v312, 0.35355338
    %v321 = vmul.f32 %v313, 0.35355338
    %v322 = vmul.f32 %v314, 0.35355338
    %v323 = vmul.f32 %v315, 0.35355338
    %v324 = vld [vmem:[%s3] sm:$0xff]
    %v325 = vld [vmem:[%s3 + $0x8] sm:$0xff]
    %v326 = vld [vmem:[%s3 + $0x10] sm:$0xff]
    %v327 = vld [vmem:[%s3 + $0x18] sm:$0xff]
    %v328 = vld [vmem:[%s3 + $0x20] sm:$0xff]
    %v329 = vld [vmem:[%s3 + $0x28] sm:$0xff]
    %v330 = vld [vmem:[%s3 + $0x30] sm:$0xff]
    %v331 = vld [vmem:[%s3 + $0x38] sm:$0xff]
    %v332 = vld [vmem:[%s4] sm:$0xff]
    %v333 = vlaneseq
    %v334 = vshrl.u32 %v333, 7
    %v335 = vsub.s32 0, %v334
    %v336 = vrot.slane %v332, %v335
    %v338 = vsel %vm137, %v175, 0
    %v341 = vsel %vm137, %v176, 0
    %343 = vmatprep.subr.mxu0 0.0
    %344 = vmatpush1.msra.mxu0 0.0
    %345 = vmatprep.subr.mxu0 0.0
    %346 = vmatpush1.msra.mxu0 0.0
    %347 = vmatprep.subr.mxu0 0.0
    %348 = vmatpush1.msra.mxu0 0.0
    %349 = vmatprep.subr.mxu0 0.0
    %350 = vmatpush1.msra.mxu0 0.0
    %351 = vmatprep.subr.mxu0 0.0
    %352 = vmatpush1.msra.mxu0 0.0
    %353 = vmatprep.subr.mxu0 0.0
    %354 = vmatpush1.msra.mxu0 0.0
    %355 = vmatprep.subr.mxu0 0.0
    %356 = vmatpush1.msra.mxu0 0.0
    %357 = vmatprep.subr.mxu0 0.0
    %358 = vmatpush1.msra.mxu0 0.0
    %359 = vmatprep.subr.mxu0 0.0
    %360 = vmatpush1.msra.mxu0 0.0
    %361 = vmatprep.subr.mxu0 0.0
    %362 = vmatpush1.msra.mxu0 0.0
    %363 = vmatprep.subr.mxu0 0.0
    %364 = vmatpush1.msra.mxu0 0.0
    %365 = vmatprep.subr.mxu0 0.0
    %366 = vmatpush1.msra.mxu0 0.0
    %367 = vmatprep.subr.mxu0 0.0
    %368 = vmatpush1.msra.mxu0 %v330
    %369 = vmatprep.subr.mxu0 0.0
    %370 = vmatpush1.msra.mxu0 %v328
    %371 = vmatprep.subr.mxu0 0.0
    %372 = vmatpush1.msra.mxu0 %v326
    %373 = vmatprep.subr.mxu0 0.0
    %374 = vmatpush1.msra.mxu0 %v324
    %375 = vmatprep.subr.mxu0 0.0
    %376 = vmatpush2.msra.mxu0 0.0
    %377 = vmatprep.subr.mxu0 0.0
    %378 = vmatpush2.msra.mxu0 0.0
    %379 = vmatprep.subr.mxu0 0.0
    %380 = vmatpush2.msra.mxu0 0.0
    %381 = vmatprep.subr.mxu0 0.0
    %382 = vmatpush2.msra.mxu0 0.0
    %383 = vmatprep.subr.mxu0 0.0
    %384 = vmatpush2.msra.mxu0 0.0
    %385 = vmatprep.subr.mxu0 0.0
    %386 = vmatpush2.msra.mxu0 0.0
    %387 = vmatprep.subr.mxu0 0.0
    %388 = vmatpush2.msra.mxu0 0.0
    %389 = vmatprep.subr.mxu0 0.0
    %390 = vmatpush2.msra.mxu0 0.0
    %391 = vmatprep.subr.mxu0 0.0
    %392 = vmatpush2.msra.mxu0 0.0
    %393 = vmatprep.subr.mxu0 0.0
    %394 = vmatpush2.msra.mxu0 0.0
    %395 = vmatprep.subr.mxu0 0.0
    %396 = vmatpush2.msra.mxu0 0.0
    %397 = vmatprep.subr.mxu0 0.0
    %398 = vmatpush2.msra.mxu0 0.0
    %399 = vmatprep.subr.mxu0 0.0
    %400 = vmatpush2.msra.mxu0 0.0
    %401 = vmatprep.subr.mxu0 0.0
    %402 = vmatpush2.msra.mxu0 0.0
    %403 = vmatprep.subr.mxu0 0.0
    %404 = vmatpush2.msra.mxu0 0.0
    %405 = vmatprep.subr.mxu0 0.0
    %406 = vmatpush2.msra.mxu0 0.0
    %407 = vmatprep.mubr.f32.mxu0 0.0
    %408 = vmatmul.mubr.f32.gmra.mxu0 %v338
    %v409 = vpop.f32.mrf.mxu0
    %v410 = vadd.f32 %v336, %v409
    %v411 = vpop.f32.mrf.mxu0
    %412 = vmatprep.mubr.f32.mxu0 0.0
    %413 = vmatmul.mubr.f32.gmra.mxu0 %v341
    %v414 = vpop.f32.mrf.mxu0
    %v415 = vadd.f32 %v336, %v414
    %v416 = vpop.f32.mrf.mxu0
    %417 = vdwg.mxu0
    %v418 = vmul.f32 %v410, %v316
    %v419 = vmul.f32 %v415, %v317
    %v420 = vmul.f32 %v410, %v318
    %v421 = vmul.f32 %v415, %v319
    %v422 = vmul.f32 %v410, %v320
    %v423 = vmul.f32 %v415, %v321
    %v424 = vmul.f32 %v410, %v322
    %v425 = vmul.f32 %v415, %v323
    %434 = vrot.lane.b32.xlu0 %v308, 32
    %v435 = vpop.permute.xlu0 %434
    %436 = vrot.lane.b32.xlu0 %v309, 32
    %v437 = vpop.permute.xlu0 %436
    %438 = vrot.lane.b32.xlu0 %v310, 32
    %v439 = vpop.permute.xlu0 %438
    %440 = vrot.lane.b32.xlu0 %v311, 32
    %v441 = vpop.permute.xlu0 %440
    %442 = vrot.lane.b32.xlu0 %v312, 32
    %v443 = vpop.permute.xlu0 %442
    %444 = vrot.lane.b32.xlu0 %v313, 32
    %v445 = vpop.permute.xlu0 %444
    %446 = vrot.lane.b32.xlu0 %v314, 32
    %v447 = vpop.permute.xlu0 %446
    %448 = vrot.lane.b32.xlu0 %v315, 32
    %v449 = vpop.permute.xlu0 %448
    %v458 = vmul.f32 %v410, %v435
    %v459 = vmul.f32 %v415, %v437
    %v460 = vmul.f32 %v410, %v439
    %v461 = vmul.f32 %v415, %v441
    %v462 = vmul.f32 %v410, %v443
    %v463 = vmul.f32 %v415, %v445
    %v464 = vmul.f32 %v410, %v447
    %v465 = vmul.f32 %v415, %v449
    %466 = vrot.lane.b32.xlu0 %v308, 64
    %v467 = vpop.permute.xlu0 %466
    %468 = vrot.lane.b32.xlu0 %v309, 64
    %v469 = vpop.permute.xlu0 %468
    %470 = vrot.lane.b32.xlu0 %v310, 64
    %v471 = vpop.permute.xlu0 %470
    %472 = vrot.lane.b32.xlu0 %v311, 64
    %v473 = vpop.permute.xlu0 %472
    %474 = vrot.lane.b32.xlu0 %v312, 64
    %v475 = vpop.permute.xlu0 %474
    %476 = vrot.lane.b32.xlu0 %v313, 64
    %v477 = vpop.permute.xlu0 %476
    %478 = vrot.lane.b32.xlu0 %v314, 64
    %v479 = vpop.permute.xlu0 %478
    %480 = vrot.lane.b32.xlu0 %v315, 64
    %v481 = vpop.permute.xlu0 %480
    %v490 = vmul.f32 %v410, %v467
    %v491 = vmul.f32 %v415, %v469
    %v492 = vmul.f32 %v410, %v471
    %v493 = vmul.f32 %v415, %v473
    %v494 = vmul.f32 %v410, %v475
    %v495 = vmul.f32 %v415, %v477
    %v496 = vmul.f32 %v410, %v479
    %v497 = vmul.f32 %v415, %v481
    %506 = vrot.lane.b32.xlu0 %v458, 96
    %v507 = vpop.permute.xlu0 %506
    %508 = vrot.lane.b32.xlu0 %v459, 96
    %v509 = vpop.permute.xlu0 %508
    %510 = vrot.lane.b32.xlu0 %v460, 96
    %v511 = vpop.permute.xlu0 %510
    %512 = vrot.lane.b32.xlu0 %v461, 96
    %v513 = vpop.permute.xlu0 %512
    %514 = vrot.lane.b32.xlu0 %v462, 96
    %v515 = vpop.permute.xlu0 %514
    %516 = vrot.lane.b32.xlu0 %v463, 96
    %v517 = vpop.permute.xlu0 %516
    %518 = vrot.lane.b32.xlu0 %v464, 96
    %v519 = vpop.permute.xlu0 %518
    %520 = vrot.lane.b32.xlu0 %v465, 96
    %v521 = vpop.permute.xlu0 %520
    %v523 = vsel %vm137, %v418, 0
    %v526 = vsel %vm137, %v419, 0
    %v529 = vsel %vm137, %v420, 0
    %v532 = vsel %vm137, %v421, 0
    %v535 = vsel %vm137, %v422, 0
    %v538 = vsel %vm137, %v423, 0
    %v541 = vsel %vm137, %v424, 0
    %v544 = vsel %vm137, %v425, 0
    %v546 = vsel %vm137, %v507, 0
    %v548 = vsel %vm137, %v509, 0
    %v550 = vsel %vm137, %v511, 0
    %v552 = vsel %vm137, %v513, 0
    %v554 = vsel %vm137, %v515, 0
    %v556 = vsel %vm137, %v517, 0
    %v558 = vsel %vm137, %v519, 0
    %v560 = vsel %vm137, %v521, 0
    %562 = vmatprep.subr.mxu0 0.0
    %563 = vmatpush1.xpose.msra.mxu0 0.0
    %564 = vmatprep.subr.mxu0 0.0
    %565 = vmatpush1.xpose.msra.mxu0 0.0
    %566 = vmatprep.subr.mxu0 0.0
    %567 = vmatpush1.xpose.msra.mxu0 0.0
    %568 = vmatprep.subr.mxu0 0.0
    %569 = vmatpush1.xpose.msra.mxu0 0.0
    %570 = vmatprep.subr.mxu0 0.0
    %571 = vmatpush1.xpose.msra.mxu0 0.0
    %572 = vmatprep.subr.mxu0 0.0
    %573 = vmatpush1.xpose.msra.mxu0 0.0
    %574 = vmatprep.subr.mxu0 0.0
    %575 = vmatpush1.xpose.msra.mxu0 0.0
    %576 = vmatprep.subr.mxu0 0.0
    %577 = vmatpush1.xpose.msra.mxu0 0.0
    %578 = vmatprep.subr.mxu0 0.0
    %579 = vmatpush1.xpose.msra.mxu0 %v560
    %580 = vmatprep.subr.mxu0 0.0
    %581 = vmatpush1.xpose.msra.mxu0 %v558
    %582 = vmatprep.subr.mxu0 0.0
    %583 = vmatpush1.xpose.msra.mxu0 %v556
    %584 = vmatprep.subr.mxu0 0.0
    %585 = vmatpush1.xpose.msra.mxu0 %v554
    %586 = vmatprep.subr.mxu0 0.0
    %587 = vmatpush1.xpose.msra.mxu0 %v552
    %588 = vmatprep.subr.mxu0 0.0
    %589 = vmatpush1.xpose.msra.mxu0 %v550
    %590 = vmatprep.subr.mxu0 0.0
    %591 = vmatpush1.xpose.msra.mxu0 %v548
    %592 = vmatprep.subr.mxu0 0.0
    %593 = vmatpush1.xpose.msra.mxu0 %v546
    %594 = vmatprep.subr.mxu0 0.0
    %595 = vmatpush2.xpose.msra.mxu0 0.0
    %596 = vmatprep.subr.mxu0 0.0
    %597 = vmatpush2.xpose.msra.mxu0 0.0
    %598 = vmatprep.subr.mxu0 0.0
    %599 = vmatpush2.xpose.msra.mxu0 0.0
    %600 = vmatprep.subr.mxu0 0.0
    %601 = vmatpush2.xpose.msra.mxu0 0.0
    %602 = vmatprep.subr.mxu0 0.0
    %603 = vmatpush2.xpose.msra.mxu0 0.0
    %604 = vmatprep.subr.mxu0 0.0
    %605 = vmatpush2.xpose.msra.mxu0 0.0
    %606 = vmatprep.subr.mxu0 0.0
    %607 = vmatpush2.xpose.msra.mxu0 0.0
    %608 = vmatprep.subr.mxu0 0.0
    %609 = vmatpush2.xpose.msra.mxu0 0.0
    %610 = vmatprep.subr.mxu0 0.0
    %611 = vmatpush2.xpose.msra.mxu0 0.0
    %612 = vmatprep.subr.mxu0 0.0
    %613 = vmatpush2.xpose.msra.mxu0 0.0
    %614 = vmatprep.subr.mxu0 0.0
    %615 = vmatpush2.xpose.msra.mxu0 0.0
    %616 = vmatprep.subr.mxu0 0.0
    %617 = vmatpush2.xpose.msra.mxu0 0.0
    %618 = vmatprep.subr.mxu0 0.0
    %619 = vmatpush2.xpose.msra.mxu0 0.0
    %620 = vmatprep.subr.mxu0 0.0
    %621 = vmatpush2.xpose.msra.mxu0 0.0
    %622 = vmatprep.subr.mxu0 0.0
    %623 = vmatpush2.xpose.msra.mxu0 0.0
    %624 = vmatprep.subr.mxu0 0.0
    %625 = vmatpush2.xpose.msra.mxu0 0.0
    %626 = vmatprep.mubr.f32.mxu0 0.0
    %627 = vmatmul.mubr.f32.gmra.mxu0 %v523
    %v628 = vpop.f32.mrf.mxu0
    %v629 = vadd.f32 %v290, %v628
    %v630 = vpop.f32.mrf.mxu0
    %631 = vmatprep.mubr.f32.mxu0 0.0
    %632 = vmatmul.mubr.f32.gmra.mxu0 %v526
    %v633 = vpop.f32.mrf.mxu0
    %v634 = vadd.f32 %v291, %v633
    %v635 = vpop.f32.mrf.mxu0
    %636 = vmatprep.mubr.f32.mxu0 0.0
    %637 = vmatmul.mubr.f32.gmra.mxu0 %v529
    %v638 = vpop.f32.mrf.mxu0
    %v639 = vadd.f32 %v292, %v638
    %v640 = vpop.f32.mrf.mxu0
    %641 = vmatprep.mubr.f32.mxu0 0.0
    %642 = vmatmul.mubr.f32.gmra.mxu0 %v532
    %v643 = vpop.f32.mrf.mxu0
    %v644 = vadd.f32 %v293, %v643
    %v645 = vpop.f32.mrf.mxu0
    %646 = vmatprep.mubr.f32.mxu0 0.0
    %647 = vmatmul.mubr.f32.gmra.mxu0 %v535
    %v648 = vpop.f32.mrf.mxu0
    %v649 = vadd.f32 %v294, %v648
    %v650 = vpop.f32.mrf.mxu0
    %651 = vmatprep.mubr.f32.mxu0 0.0
    %652 = vmatmul.mubr.f32.gmra.mxu0 %v538
    %v653 = vpop.f32.mrf.mxu0
    %v654 = vadd.f32 %v295, %v653
    %v655 = vpop.f32.mrf.mxu0
    %656 = vmatprep.mubr.f32.mxu0 0.0
    %657 = vmatmul.mubr.f32.gmra.mxu0 %v541
    %v658 = vpop.f32.mrf.mxu0
    %v659 = vadd.f32 %v296, %v658
    %v660 = vpop.f32.mrf.mxu0
    %661 = vmatprep.mubr.f32.mxu0 0.0
    %662 = vmatmul.mubr.f32.gmra.mxu0 %v544
    %v663 = vpop.f32.mrf.mxu0
    %v664 = vadd.f32 %v297, %v663
    %v665 = vpop.f32.mrf.mxu0
    %666 = vdwg.mxu0
    %v667 = vsel %vm49, %v629, -inf
    %668 = vmax.xlane.f32.xlu0 %v667
    %v669 = vpop.xlane.xlu0 %668
    %v670 = vsel %vm49, %v634, -inf
    %671 = vmax.xlane.f32.xlu0 %v670
    %v672 = vpop.xlane.xlu0 %671
    %v673 = vsel %vm49, %v639, -inf
    %674 = vmax.xlane.f32.xlu0 %v673
    %v675 = vpop.xlane.xlu0 %674
    %v676 = vsel %vm49, %v644, -inf
    %677 = vmax.xlane.f32.xlu0 %v676
    %v678 = vpop.xlane.xlu0 %677
    %v679 = vsel %vm49, %v649, -inf
    %680 = vmax.xlane.f32.xlu0 %v679
    %v681 = vpop.xlane.xlu0 %680
    %v682 = vsel %vm49, %v654, -inf
    %683 = vmax.xlane.f32.xlu0 %v682
    %v684 = vpop.xlane.xlu0 %683
    %v685 = vsel %vm49, %v659, -inf
    %686 = vmax.xlane.f32.xlu0 %v685
    %v687 = vpop.xlane.xlu0 %686
    %v688 = vsel %vm49, %v664, -inf
    %689 = vmax.xlane.f32.xlu0 %v688
    %v690 = vpop.xlane.xlu0 %689
    %v691 = vsub.f32 %v629, %v669
    %v692 = vsub.f32 %v634, %v672
    %v693 = vsub.f32 %v639, %v675
    %v694 = vsub.f32 %v644, %v678
    %v695 = vsub.f32 %v649, %v681
    %v696 = vsub.f32 %v654, %v684
    %v697 = vsub.f32 %v659, %v687
    %v698 = vsub.f32 %v664, %v690
    %v699 = vmul.f32 %v691, 1.442695
    %v700 = vpow.pop %v699
    %v701 = vmul.f32 %v692, 1.442695
    %v702 = vpow.pop %v701
    %v703 = vmul.f32 %v693, 1.442695
    %v704 = vpow.pop %v703
    %v705 = vmul.f32 %v694, 1.442695
    %v706 = vpow.pop %v705
    %v707 = vmul.f32 %v695, 1.442695
    %v708 = vpow.pop %v707
    %v709 = vmul.f32 %v696, 1.442695
    %v710 = vpow.pop %v709
    %v711 = vmul.f32 %v697, 1.442695
    %v712 = vpow.pop %v711
    %v713 = vmul.f32 %v698, 1.442695
    %v714 = vpow.pop %v713
    %v715 = vsel %vm49, %v700, 0.0
    %716 = vadd.xlane.f32.xlu0 %v715
    %v717 = vpop.xlane.xlu0 %716
    %v718 = vsel %vm49, %v702, 0.0
    %719 = vadd.xlane.f32.xlu0 %v718
    %v720 = vpop.xlane.xlu0 %719
    %v721 = vsel %vm49, %v704, 0.0
    %722 = vadd.xlane.f32.xlu0 %v721
    %v723 = vpop.xlane.xlu0 %722
    %v724 = vsel %vm49, %v706, 0.0
    %725 = vadd.xlane.f32.xlu0 %v724
    %v726 = vpop.xlane.xlu0 %725
    %v727 = vsel %vm49, %v708, 0.0
    %728 = vadd.xlane.f32.xlu0 %v727
    %v729 = vpop.xlane.xlu0 %728
    %v730 = vsel %vm49, %v710, 0.0
    %731 = vadd.xlane.f32.xlu0 %v730
    %v732 = vpop.xlane.xlu0 %731
    %v733 = vsel %vm49, %v712, 0.0
    %734 = vadd.xlane.f32.xlu0 %v733
    %v735 = vpop.xlane.xlu0 %734
    %v736 = vsel %vm49, %v714, 0.0
    %737 = vadd.xlane.f32.xlu0 %v736
    %v738 = vpop.xlane.xlu0 %737
    %v739 = vrcp.pop %v717
    %v740 = vmul.f32 %v700, %v739
    %v741 = vrcp.pop %v720
    %v742 = vmul.f32 %v702, %v741
    %v743 = vrcp.pop %v723
    %v744 = vmul.f32 %v704, %v743
    %v745 = vrcp.pop %v726
    %v746 = vmul.f32 %v706, %v745
    %v747 = vrcp.pop %v729
    %v748 = vmul.f32 %v708, %v747
    %v749 = vrcp.pop %v732
    %v750 = vmul.f32 %v710, %v749
    %v751 = vrcp.pop %v735
    %v752 = vmul.f32 %v712, %v751
    %v753 = vrcp.pop %v738
    %v754 = vmul.f32 %v714, %v753
    %763 = vrot.lane.b32.xlu0 %v490, 64
    %v764 = vpop.permute.xlu0 %763
    %765 = vrot.lane.b32.xlu0 %v491, 64
    %v766 = vpop.permute.xlu0 %765
    %767 = vrot.lane.b32.xlu0 %v492, 64
    %v768 = vpop.permute.xlu0 %767
    %769 = vrot.lane.b32.xlu0 %v493, 64
    %v770 = vpop.permute.xlu0 %769
    %771 = vrot.lane.b32.xlu0 %v494, 64
    %v772 = vpop.permute.xlu0 %771
    %773 = vrot.lane.b32.xlu0 %v495, 64
    %v774 = vpop.permute.xlu0 %773
    %775 = vrot.lane.b32.xlu0 %v496, 64
    %v776 = vpop.permute.xlu0 %775
    %777 = vrot.lane.b32.xlu0 %v497, 64
    %v778 = vpop.permute.xlu0 %777
    %v788 = vsel %vm49, %v740, 0
    %v791 = vsel %vm49, %v742, 0
    %v794 = vsel %vm49, %v744, 0
    %v797 = vsel %vm49, %v746, 0
    %v800 = vsel %vm49, %v748, 0
    %v803 = vsel %vm49, %v750, 0
    %v806 = vsel %vm49, %v752, 0
    %v809 = vsel %vm49, %v754, 0
    %811 = vmatprep.subr.mxu0 0.0
    %812 = vmatpush1.msra.mxu0 0.0
    %813 = vmatprep.subr.mxu0 0.0
    %814 = vmatpush1.msra.mxu0 0.0
    %815 = vmatprep.subr.mxu0 0.0
    %816 = vmatpush1.msra.mxu0 0.0
    %817 = vmatprep.subr.mxu0 0.0
    %818 = vmatpush1.msra.mxu0 0.0
    %819 = vmatprep.subr.mxu0 0.0
    %820 = vmatpush1.msra.mxu0 0.0
    %821 = vmatprep.subr.mxu0 0.0
    %822 = vmatpush1.msra.mxu0 0.0
    %823 = vmatprep.subr.mxu0 0.0
    %824 = vmatpush1.msra.mxu0 0.0
    %825 = vmatprep.subr.mxu0 0.0
    %826 = vmatpush1.msra.mxu0 0.0
    %827 = vmatprep.subr.mxu0 0.0
    %828 = vmatpush1.msra.mxu0 %v778
    %829 = vmatprep.subr.mxu0 0.0
    %830 = vmatpush1.msra.mxu0 %v776
    %831 = vmatprep.subr.mxu0 0.0
    %832 = vmatpush1.msra.mxu0 %v774
    %833 = vmatprep.subr.mxu0 0.0
    %834 = vmatpush1.msra.mxu0 %v772
    %835 = vmatprep.subr.mxu0 0.0
    %836 = vmatpush1.msra.mxu0 %v770
    %837 = vmatprep.subr.mxu0 0.0
    %838 = vmatpush1.msra.mxu0 %v768
    %839 = vmatprep.subr.mxu0 0.0
    %840 = vmatpush1.msra.mxu0 %v766
    %841 = vmatprep.subr.mxu0 0.0
    %842 = vmatpush1.msra.mxu0 %v764
    %843 = vmatprep.subr.mxu0 0.0
    %844 = vmatpush2.msra.mxu0 0.0
    %845 = vmatprep.subr.mxu0 0.0
    %846 = vmatpush2.msra.mxu0 0.0
    %847 = vmatprep.subr.mxu0 0.0
    %848 = vmatpush2.msra.mxu0 0.0
    %849 = vmatprep.subr.mxu0 0.0
    %850 = vmatpush2.msra.mxu0 0.0
    %851 = vmatprep.subr.mxu0 0.0
    %852 = vmatpush2.msra.mxu0 0.0
    %853 = vmatprep.subr.mxu0 0.0
    %854 = vmatpush2.msra.mxu0 0.0
    %855 = vmatprep.subr.mxu0 0.0
    %856 = vmatpush2.msra.mxu0 0.0
    %857 = vmatprep.subr.mxu0 0.0
    %858 = vmatpush2.msra.mxu0 0.0
    %859 = vmatprep.subr.mxu0 0.0
    %860 = vmatpush2.msra.mxu0 0.0
    %861 = vmatprep.subr.mxu0 0.0
    %862 = vmatpush2.msra.mxu0 0.0
    %863 = vmatprep.subr.mxu0 0.0
    %864 = vmatpush2.msra.mxu0 0.0
    %865 = vmatprep.subr.mxu0 0.0
    %866 = vmatpush2.msra.mxu0 0.0
    %867 = vmatprep.subr.mxu0 0.0
    %868 = vmatpush2.msra.mxu0 0.0
    %869 = vmatprep.subr.mxu0 0.0
    %870 = vmatpush2.msra.mxu0 0.0
    %871 = vmatprep.subr.mxu0 0.0
    %872 = vmatpush2.msra.mxu0 0.0
    %873 = vmatprep.subr.mxu0 0.0
    %874 = vmatpush2.msra.mxu0 0.0
    %875 = vmatprep.mubr.f32.mxu0 0.0
    %876 = vmatmul.mubr.f32.gmra.mxu0 %v788
    %v877 = vpop.f32.mrf.mxu0
    %v878 = vadd.f32 0.0, %v877
    %v879 = vpop.f32.mrf.mxu0
    %880 = vmatprep.mubr.f32.mxu0 0.0
    %881 = vmatmul.mubr.f32.gmra.mxu0 %v791
    %v882 = vpop.f32.mrf.mxu0
    %v883 = vadd.f32 0.0, %v882
    %v884 = vpop.f32.mrf.mxu0
    %885 = vmatprep.mubr.f32.mxu0 0.0
    %886 = vmatmul.mubr.f32.gmra.mxu0 %v794
    %v887 = vpop.f32.mrf.mxu0
    %v888 = vadd.f32 0.0, %v887
    %v889 = vpop.f32.mrf.mxu0
    %890 = vmatprep.mubr.f32.mxu0 0.0
    %891 = vmatmul.mubr.f32.gmra.mxu0 %v797
    %v892 = vpop.f32.mrf.mxu0
    %v893 = vadd.f32 0.0, %v892
    %v894 = vpop.f32.mrf.mxu0
    %895 = vmatprep.mubr.f32.mxu0 0.0
    %896 = vmatmul.mubr.f32.gmra.mxu0 %v800
    %v897 = vpop.f32.mrf.mxu0
    %v898 = vadd.f32 0.0, %v897
    %v899 = vpop.f32.mrf.mxu0
    %900 = vmatprep.mubr.f32.mxu0 0.0
    %901 = vmatmul.mubr.f32.gmra.mxu0 %v803
    %v902 = vpop.f32.mrf.mxu0
    %v903 = vadd.f32 0.0, %v902
    %v904 = vpop.f32.mrf.mxu0
    %905 = vmatprep.mubr.f32.mxu0 0.0
    %906 = vmatmul.mubr.f32.gmra.mxu0 %v806
    %v907 = vpop.f32.mrf.mxu0
    %v908 = vadd.f32 0.0, %v907
    %v909 = vpop.f32.mrf.mxu0
    %910 = vmatprep.mubr.f32.mxu0 0.0
    %911 = vmatmul.mubr.f32.gmra.mxu0 %v809
    %v912 = vpop.f32.mrf.mxu0
    %v913 = vadd.f32 0.0, %v912
    %v914 = vpop.f32.mrf.mxu0
    %915 = vdwg.mxu0
    %v916 = vadd.f32 %v878, %v888
    %v917 = vadd.f32 %v883, %v893
    %v918 = vadd.f32 %v916, %v898
    %v919 = vadd.f32 %v917, %v903
    %v920 = vadd.f32 %v918, %v908
    %v921 = vadd.f32 %v919, %v913
    %v922 = vlaneseq
    %v923 = vshrl.u32 %v922, 7
    %v924 = vsub.s32 1, %v923
    %v925 = vrot.slane %v332, %v924
    %930 = vrot.lane.b32.xlu0 %v324, 32
    %v931 = vpop.permute.xlu0 %930
    %932 = vrot.lane.b32.xlu0 %v326, 32
    %v933 = vpop.permute.xlu0 %932
    %934 = vrot.lane.b32.xlu0 %v328, 32
    %v935 = vpop.permute.xlu0 %934
    %936 = vrot.lane.b32.xlu0 %v330, 32
    %v937 = vpop.permute.xlu0 %936
    %v943 = vsel %vm137, %v920, 0
    %v946 = vsel %vm137, %v921, 0
    %948 = vmatprep.subr.mxu0 0.0
    %949 = vmatpush1.msra.mxu0 0.0
    %950 = vmatprep.subr.mxu0 0.0
    %951 = vmatpush1.msra.mxu0 0.0
    %952 = vmatprep.subr.mxu0 0.0
    %953 = vmatpush1.msra.mxu0 0.0
    %954 = vmatprep.subr.mxu0 0.0
    %955 = vmatpush1.msra.mxu0 0.0
    %956 = vmatprep.subr.mxu0 0.0
    %957 = vmatpush1.msra.mxu0 0.0
    %958 = vmatprep.subr.mxu0 0.0
    %959 = vmatpush1.msra.mxu0 0.0
    %960 = vmatprep.subr.mxu0 0.0
    %961 = vmatpush1.msra.mxu0 0.0
    %962 = vmatprep.subr.mxu0 0.0
    %963 = vmatpush1.msra.mxu0 0.0
    %964 = vmatprep.subr.mxu0 0.0
    %965 = vmatpush1.msra.mxu0 0.0
    %966 = vmatprep.subr.mxu0 0.0
    %967 = vmatpush1.msra.mxu0 0.0
    %968 = vmatprep.subr.mxu0 0.0
    %969 = vmatpush1.msra.mxu0 0.0
    %970 = vmatprep.subr.mxu0 0.0
    %971 = vmatpush1.msra.mxu0 0.0
    %972 = vmatprep.subr.mxu0 0.0
    %973 = vmatpush1.msra.mxu0 %v937
    %974 = vmatprep.subr.mxu0 0.0
    %975 = vmatpush1.msra.mxu0 %v935
    %976 = vmatprep.subr.mxu0 0.0
    %977 = vmatpush1.msra.mxu0 %v933
    %978 = vmatprep.subr.mxu0 0.0
    %979 = vmatpush1.msra.mxu0 %v931
    %980 = vmatprep.subr.mxu0 0.0
    %981 = vmatpush2.msra.mxu0 0.0
    %982 = vmatprep.subr.mxu0 0.0
    %983 = vmatpush2.msra.mxu0 0.0
    %984 = vmatprep.subr.mxu0 0.0
    %985 = vmatpush2.msra.mxu0 0.0
    %986 = vmatprep.subr.mxu0 0.0
    %987 = vmatpush2.msra.mxu0 0.0
    %988 = vmatprep.subr.mxu0 0.0
    %989 = vmatpush2.msra.mxu0 0.0
    %990 = vmatprep.subr.mxu0 0.0
    %991 = vmatpush2.msra.mxu0 0.0
    %992 = vmatprep.subr.mxu0 0.0
    %993 = vmatpush2.msra.mxu0 0.0
    %994 = vmatprep.subr.mxu0 0.0
    %995 = vmatpush2.msra.mxu0 0.0
    %996 = vmatprep.subr.mxu0 0.0
    %997 = vmatpush2.msra.mxu0 0.0
    %998 = vmatprep.subr.mxu0 0.0
    %999 = vmatpush2.msra.mxu0 0.0
    %1000 = vmatprep.subr.mxu0 0.0
    %1001 = vmatpush2.msra.mxu0 0.0
    %1002 = vmatprep.subr.mxu0 0.0
    %1003 = vmatpush2.msra.mxu0 0.0
    %1004 = vmatprep.subr.mxu0 0.0
    %1005 = vmatpush2.msra.mxu0 0.0
    %1006 = vmatprep.subr.mxu0 0.0
    %1007 = vmatpush2.msra.mxu0 0.0
    %1008 = vmatprep.subr.mxu0 0.0
    %1009 = vmatpush2.msra.mxu0 0.0
    %1010 = vmatprep.subr.mxu0 0.0
    %1011 = vmatpush2.msra.mxu0 0.0
    %1012 = vmatprep.mubr.f32.mxu0 0.0
    %1013 = vmatmul.mubr.f32.gmra.mxu0 %v943
    %v1014 = vpop.f32.mrf.mxu0
    %v1015 = vadd.f32 %v925, %v1014
    %v1016 = vpop.f32.mrf.mxu0
    %1017 = vmatprep.mubr.f32.mxu0 0.0
    %1018 = vmatmul.mubr.f32.gmra.mxu0 %v946
    %v1019 = vpop.f32.mrf.mxu0
    %v1020 = vadd.f32 %v925, %v1019
    %v1021 = vpop.f32.mrf.mxu0
    %1022 = vdwg.mxu0
    %v1023 = vadd.f32 %v1015, %v175
    %v1024 = vadd.f32 %v1020, %v176
    %v1025 = vsel %vm137, %v1023, 0.0
    %1026 = vadd.xlane.f32.xlu0 %v1025
    %v1027 = vpop.xlane.xlu0 %1026
    %v1028 = vsel %vm137, %v1024, 0.0
    %1029 = vadd.xlane.f32.xlu0 %v1028
    %v1030 = vpop.xlane.xlu0 %1029
    %v1031 = vmul.f32 %v1027, %v144
    %v1032 = vmul.f32 %v1030, %v144
    %v1033 = vsub.f32 %v1023, %v1031
    %v1034 = vsub.f32 %v1024, %v1032
    %v1035 = vmul.f32 %v1033, %v1033
    %v1036 = vmul.f32 %v1034, %v1034
    %v1037 = vsel %vm137, %v1035, 0.0
    %1038 = vadd.xlane.f32.xlu0 %v1037
    %v1039 = vpop.xlane.xlu0 %1038
    %v1040 = vsel %vm137, %v1036, 0.0
    %1041 = vadd.xlane.f32.xlu0 %v1040
    %v1042 = vpop.xlane.xlu0 %1041
    %v1043 = vmul.f32 %v1039, %v144
    %v1044 = vmul.f32 %v1042, %v144
    %v1045 = vadd.f32 %v1043, 1e-12
    %v1046 = vadd.f32 %v1044, 1e-12
    %v1047 = vrsqrt.pop %v1045
    %v1048 = vrsqrt.pop %v1046
    %v1049 = vmul.f32 %v1033, %v1047
    %v1050 = vmul.f32 %v1034, %v1048
    %v1051 = vlaneseq
    %v1052 = vshrl.u32 %v1051, 7
    %v1053 = vsub.s32 2, %v1052
    %v1054 = vrot.slane %v332, %v1053
    %v1055 = vmul.f32 %v1049, %v1054
    %v1056 = vmul.f32 %v1050, %v1054
    %v1057 = vlaneseq
    %v1058 = vshrl.u32 %v1057, 7
    %v1059 = vsub.s32 3, %v1058
    %v1060 = vrot.slane %v332, %v1059
    %v1061 = vadd.f32 %v1055, %v1060
    %v1062 = vadd.f32 %v1056, %v1060
    %v1063 = vlaneseq
    %v1064 = vshrl.u32 %v1063, 7
    %v1065 = vsub.s32 4, %v1064
    %v1066 = vrot.slane %v332, %v1065
    %v1068 = vsel %vm137, %v1061, 0
    %v1071 = vsel %vm137, %v1062, 0
    %1073 = vmatprep.subr.mxu0 0.0
    %1074 = vmatpush1.msra.mxu0 0.0
    %1075 = vmatprep.subr.mxu0 0.0
    %1076 = vmatpush1.msra.mxu0 0.0
    %1077 = vmatprep.subr.mxu0 0.0
    %1078 = vmatpush1.msra.mxu0 0.0
    %1079 = vmatprep.subr.mxu0 0.0
    %1080 = vmatpush1.msra.mxu0 0.0
    %1081 = vmatprep.subr.mxu0 0.0
    %1082 = vmatpush1.msra.mxu0 0.0
    %1083 = vmatprep.subr.mxu0 0.0
    %1084 = vmatpush1.msra.mxu0 0.0
    %1085 = vmatprep.subr.mxu0 0.0
    %1086 = vmatpush1.msra.mxu0 0.0
    %1087 = vmatprep.subr.mxu0 0.0
    %1088 = vmatpush1.msra.mxu0 0.0
    %1089 = vmatprep.subr.mxu0 0.0
    %1090 = vmatpush1.msra.mxu0 0.0
    %1091 = vmatprep.subr.mxu0 0.0
    %1092 = vmatpush1.msra.mxu0 0.0
    %1093 = vmatprep.subr.mxu0 0.0
    %1094 = vmatpush1.msra.mxu0 0.0
    %1095 = vmatprep.subr.mxu0 0.0
    %1096 = vmatpush1.msra.mxu0 0.0
    %1097 = vmatprep.subr.mxu0 0.0
    %1098 = vmatpush1.msra.mxu0 %v331
    %1099 = vmatprep.subr.mxu0 0.0
    %1100 = vmatpush1.msra.mxu0 %v329
    %1101 = vmatprep.subr.mxu0 0.0
    %1102 = vmatpush1.msra.mxu0 %v327
    %1103 = vmatprep.subr.mxu0 0.0
    %1104 = vmatpush1.msra.mxu0 %v325
    %1105 = vmatprep.subr.mxu0 0.0
    %1106 = vmatpush2.msra.mxu0 0.0
    %1107 = vmatprep.subr.mxu0 0.0
    %1108 = vmatpush2.msra.mxu0 0.0
    %1109 = vmatprep.subr.mxu0 0.0
    %1110 = vmatpush2.msra.mxu0 0.0
    %1111 = vmatprep.subr.mxu0 0.0
    %1112 = vmatpush2.msra.mxu0 0.0
    %1113 = vmatprep.subr.mxu0 0.0
    %1114 = vmatpush2.msra.mxu0 0.0
    %1115 = vmatprep.subr.mxu0 0.0
    %1116 = vmatpush2.msra.mxu0 0.0
    %1117 = vmatprep.subr.mxu0 0.0
    %1118 = vmatpush2.msra.mxu0 0.0
    %1119 = vmatprep.subr.mxu0 0.0
    %1120 = vmatpush2.msra.mxu0 0.0
    %1121 = vmatprep.subr.mxu0 0.0
    %1122 = vmatpush2.msra.mxu0 0.0
    %1123 = vmatprep.subr.mxu0 0.0
    %1124 = vmatpush2.msra.mxu0 0.0
    %1125 = vmatprep.subr.mxu0 0.0
    %1126 = vmatpush2.msra.mxu0 0.0
    %1127 = vmatprep.subr.mxu0 0.0
    %1128 = vmatpush2.msra.mxu0 0.0
    %1129 = vmatprep.subr.mxu0 0.0
    %1130 = vmatpush2.msra.mxu0 0.0
    %1131 = vmatprep.subr.mxu0 0.0
    %1132 = vmatpush2.msra.mxu0 0.0
    %1133 = vmatprep.subr.mxu0 0.0
    %1134 = vmatpush2.msra.mxu0 0.0
    %1135 = vmatprep.subr.mxu0 0.0
    %1136 = vmatpush2.msra.mxu0 0.0
    %1137 = vmatprep.mubr.f32.mxu0 0.0
    %1138 = vmatmul.mubr.f32.gmra.mxu0 %v1068
    %v1139 = vpop.f32.mrf.mxu0
    %v1140 = vadd.f32 %v1066, %v1139
    %v1141 = vpop.f32.mrf.mxu0
    %1142 = vmatprep.mubr.f32.mxu0 0.0
    %1143 = vmatmul.mubr.f32.gmra.mxu0 %v1071
    %v1144 = vpop.f32.mrf.mxu0
    %v1145 = vadd.f32 %v1066, %v1144
    %v1146 = vpop.f32.mrf.mxu0
    %1147 = vdwg.mxu0
    %v1148 = vmul.f32 %v1140, 0.5
    %v1149 = vmul.f32 %v1145, 0.5
    %v1150 = vmul.f32 %v1140, 0.044715
    %v1151 = vmul.f32 %v1145, 0.044715
    %v1152 = vmul.f32 %v1150, %v1140
    %v1153 = vmul.f32 %v1151, %v1145
    %v1154 = vmul.f32 %v1152, %v1140
    %v1155 = vmul.f32 %v1153, %v1145
    %v1156 = vadd.f32 %v1140, %v1154
    %v1157 = vadd.f32 %v1145, %v1155
    %v1158 = vmul.f32 %v1156, 0.7978846
    %v1159 = vmul.f32 %v1157, 0.7978846
    %v1160 = vtanh.pop %v1158
    %v1161 = vtanh.pop %v1159
    %v1162 = vadd.f32 %v1160, 1.0
    %v1163 = vadd.f32 %v1161, 1.0
    %v1164 = vmul.f32 %v1148, %v1162
    %v1165 = vmul.f32 %v1149, %v1163
    %v1166 = vlaneseq
    %v1167 = vshrl.u32 %v1166, 7
    %v1168 = vsub.s32 5, %v1167
    %v1169 = vrot.slane %v332, %v1168
    %1174 = vrot.lane.b32.xlu0 %v325, 64
    %v1175 = vpop.permute.xlu0 %1174
    %1176 = vrot.lane.b32.xlu0 %v327, 64
    %v1177 = vpop.permute.xlu0 %1176
    %1178 = vrot.lane.b32.xlu0 %v329, 64
    %v1179 = vpop.permute.xlu0 %1178
    %1180 = vrot.lane.b32.xlu0 %v331, 64
    %v1181 = vpop.permute.xlu0 %1180
    %v1183 = vsel %vm49, %v1164, 0
    %v1186 = vsel %vm49, %v1165, 0
    %v1188 = vsel %vm49, %v1175, 0
    %v1190 = vsel %vm49, %v1177, 0
    %v1192 = vsel %vm49, %v1179, 0
    %v1194 = vsel %vm49, %v1181, 0
    %1196 = vmatprep.subr.mxu0 0.0
    %1197 = vmatpush1.xpose.msra.mxu0 0.0
    %1198 = vmatprep.subr.mxu0 0.0
    %1199 = vmatpush1.xpose.msra.mxu0 0.0
    %1200 = vmatprep.subr.mxu0 0.0
    %1201 = vmatpush1.xpose.msra.mxu0 0.0
    %1202 = vmatprep.subr.mxu0 0.0
    %1203 = vmatpush1.xpose.msra.mxu0 0.0
    %1204 = vmatprep.subr.mxu0 0.0
    %1205 = vmatpush1.xpose.msra.mxu0 0.0
    %1206 = vmatprep.subr.mxu0 0.0
    %1207 = vmatpush1.xpose.msra.mxu0 0.0
    %1208 = vmatprep.subr.mxu0 0.0
    %1209 = vmatpush1.xpose.msra.mxu0 0.0
    %1210 = vmatprep.subr.mxu0 0.0
    %1211 = vmatpush1.xpose.msra.mxu0 0.0
    %1212 = vmatprep.subr.mxu0 0.0
    %1213 = vmatpush1.xpose.msra.mxu0 0.0
    %1214 = vmatprep.subr.mxu0 0.0
    %1215 = vmatpush1.xpose.msra.mxu0 0.0
    %1216 = vmatprep.subr.mxu0 0.0
    %1217 = vmatpush1.xpose.msra.mxu0 0.0
    %1218 = vmatprep.subr.mxu0 0.0
    %1219 = vmatpush1.xpose.msra.mxu0 0.0
    %1220 = vmatprep.subr.mxu0 0.0
    %1221 = vmatpush1.xpose.msra.mxu0 %v1194
    %1222 = vmatprep.subr.mxu0 0.0
    %1223 = vmatpush1.xpose.msra.mxu0 %v1192
    %1224 = vmatprep.subr.mxu0 0.0
    %1225 = vmatpush1.xpose.msra.mxu0 %v1190
    %1226 = vmatprep.subr.mxu0 0.0
    %1227 = vmatpush1.xpose.msra.mxu0 %v1188
    %1228 = vmatprep.subr.mxu0 0.0
    %1229 = vmatpush2.xpose.msra.mxu0 0.0
    %1230 = vmatprep.subr.mxu0 0.0
    %1231 = vmatpush2.xpose.msra.mxu0 0.0
    %1232 = vmatprep.subr.mxu0 0.0
    %1233 = vmatpush2.xpose.msra.mxu0 0.0
    %1234 = vmatprep.subr.mxu0 0.0
    %1235 = vmatpush2.xpose.msra.mxu0 0.0
    %1236 = vmatprep.subr.mxu0 0.0
    %1237 = vmatpush2.xpose.msra.mxu0 0.0
    %1238 = vmatprep.subr.mxu0 0.0
    %1239 = vmatpush2.xpose.msra.mxu0 0.0
    %1240 = vmatprep.subr.mxu0 0.0
    %1241 = vmatpush2.xpose.msra.mxu0 0.0
    %1242 = vmatprep.subr.mxu0 0.0
    %1243 = vmatpush2.xpose.msra.mxu0 0.0
    %1244 = vmatprep.subr.mxu0 0.0
    %1245 = vmatpush2.xpose.msra.mxu0 0.0
    %1246 = vmatprep.subr.mxu0 0.0
    %1247 = vmatpush2.xpose.msra.mxu0 0.0
    %1248 = vmatprep.subr.mxu0 0.0
    %1249 = vmatpush2.xpose.msra.mxu0 0.0
    %1250 = vmatprep.subr.mxu0 0.0
    %1251 = vmatpush2.xpose.msra.mxu0 0.0
    %1252 = vmatprep.subr.mxu0 0.0
    %1253 = vmatpush2.xpose.msra.mxu0 0.0
    %1254 = vmatprep.subr.mxu0 0.0
    %1255 = vmatpush2.xpose.msra.mxu0 0.0
    %1256 = vmatprep.subr.mxu0 0.0
    %1257 = vmatpush2.xpose.msra.mxu0 0.0
    %1258 = vmatprep.subr.mxu0 0.0
    %1259 = vmatpush2.xpose.msra.mxu0 0.0
    %1260 = vmatprep.mubr.f32.mxu0 0.0
    %1261 = vmatmul.mubr.f32.gmra.mxu0 %v1183
    %v1262 = vpop.f32.mrf.mxu0
    %v1263 = vadd.f32 %v1169, %v1262
    %v1264 = vpop.f32.mrf.mxu0
    %1265 = vmatprep.mubr.f32.mxu0 0.0
    %1266 = vmatmul.mubr.f32.gmra.mxu0 %v1186
    %v1267 = vpop.f32.mrf.mxu0
    %v1268 = vadd.f32 %v1169, %v1267
    %v1269 = vpop.f32.mrf.mxu0
    %1270 = vdwg.mxu0
    %v1271 = vadd.f32 %v1263, %v1061
    %v1272 = vadd.f32 %v1268, %v1062
    %v1273 = vsel %vm137, %v1271, 0.0
    %1274 = vadd.xlane.f32.xlu0 %v1273
    %v1275 = vpop.xlane.xlu0 %1274
    %v1276 = vsel %vm137, %v1272, 0.0
    %1277 = vadd.xlane.f32.xlu0 %v1276
    %v1278 = vpop.xlane.xlu0 %1277
    %v1279 = vmul.f32 %v1275, %v144
    %v1280 = vmul.f32 %v1278, %v144
    %v1281 = vsub.f32 %v1271, %v1279
    %v1282 = vsub.f32 %v1272, %v1280
    %v1283 = vmul.f32 %v1281, %v1281
    %v1284 = vmul.f32 %v1282, %v1282
    %v1285 = vsel %vm137, %v1283, 0.0
    %1286 = vadd.xlane.f32.xlu0 %v1285
    %v1287 = vpop.xlane.xlu0 %1286
    %v1288 = vsel %vm137, %v1284, 0.0
    %1289 = vadd.xlane.f32.xlu0 %v1288
    %v1290 = vpop.xlane.xlu0 %1289
    %v1291 = vmul.f32 %v1287, %v144
    %v1292 = vmul.f32 %v1290, %v144
    %v1293 = vadd.f32 %v1291, 1e-12
    %v1294 = vadd.f32 %v1292, 1e-12
    %v1295 = vrsqrt.pop %v1293
    %v1296 = vrsqrt.pop %v1294
    %v1297 = vmul.f32 %v1281, %v1295
    %v1298 = vmul.f32 %v1282, %v1296
    %v1299 = vlaneseq
    %v1300 = vshrl.u32 %v1299, 7
    %v1301 = vsub.s32 6, %v1300
    %v1302 = vrot.slane %v332, %v1301
    %v1303 = vmul.f32 %v1297, %v1302
    %v1304 = vmul.f32 %v1298, %v1302
    %v1305 = vlaneseq
    %v1306 = vshrl.u32 %v1305, 7
    %v1307 = vsub.s32 7, %v1306
    %v1308 = vrot.slane %v332, %v1307
    %v1309 = vadd.f32 %v1303, %v1308
    %v1310 = vadd.f32 %v1304, %v1308
    %s1311 = scalar_lea.vmem %s3, 64
    %v1312 = vld [vmem:[%s1311] sm:$0xff]
    %v1313 = vld [vmem:[%s1311 + $0x8] sm:$0xff]
    %v1314 = vld [vmem:[%s1311 + $0x10] sm:$0xff]
    %v1315 = vld [vmem:[%s1311 + $0x18] sm:$0xff]
    %v1316 = vld [vmem:[%s1311 + $0x20] sm:$0xff]
    %v1317 = vld [vmem:[%s1311 + $0x28] sm:$0xff]
    %v1318 = vld [vmem:[%s1311 + $0x30] sm:$0xff]
    %v1319 = vld [vmem:[%s1311 + $0x38] sm:$0xff]
    %s1320 = scalar_lea.vmem %s4, 8
    %v1321 = vld [vmem:[%s1320] sm:$0xff]
    %v1322 = vlaneseq
    %v1323 = vshrl.u32 %v1322, 7
    %v1324 = vsub.s32 0, %v1323
    %v1325 = vrot.slane %v1321, %v1324
    %v1327 = vsel %vm137, %v1309, 0
    %v1330 = vsel %vm137, %v1310, 0
    %1332 = vmatprep.subr.mxu0 0.0
    %1333 = vmatpush1.msra.mxu0 0.0
    %1334 = vmatprep.subr.mxu0 0.0
    %1335 = vmatpush1.msra.mxu0 0.0
    %1336 = vmatprep.subr.mxu0 0.0
    %1337 = vmatpush1.msra.mxu0 0.0
    %1338 = vmatprep.subr.mxu0 0.0
    %1339 = vmatpush1.msra.mxu0 0.0
    %1340 = vmatprep.subr.mxu0 0.0
    %1341 = vmatpush1.msra.mxu0 0.0
    %1342 = vmatprep.subr.mxu0 0.0
    %1343 = vmatpush1.msra.mxu0 0.0
    %1344 = vmatprep.subr.mxu0 0.0
    %1345 = vmatpush1.msra.mxu0 0.0
    %1346 = vmatprep.subr.mxu0 0.0
    %1347 = vmatpush1.msra.mxu0 0.0
    %1348 = vmatprep.subr.mxu0 0.0
    %1349 = vmatpush1.msra.mxu0 0.0
    %1350 = vmatprep.subr.mxu0 0.0
    %1351 = vmatpush1.msra.mxu0 0.0
    %1352 = vmatprep.subr.mxu0 0.0
    %1353 = vmatpush1.msra.mxu0 0.0
    %1354 = vmatprep.subr.mxu0 0.0
    %1355 = vmatpush1.msra.mxu0 0.0
    %1356 = vmatprep.subr.mxu0 0.0
    %1357 = vmatpush1.msra.mxu0 %v1318
    %1358 = vmatprep.subr.mxu0 0.0
    %1359 = vmatpush1.msra.mxu0 %v1316
    %1360 = vmatprep.subr.mxu0 0.0
    %1361 = vmatpush1.msra.mxu0 %v1314
    %1362 = vmatprep.subr.mxu0 0.0
    %1363 = vmatpush1.msra.mxu0 %v1312
    %1364 = vmatprep.subr.mxu0 0.0
    %1365 = vmatpush2.msra.mxu0 0.0
    %1366 = vmatprep.subr.mxu0 0.0
    %1367 = vmatpush2.msra.mxu0 0.0
    %1368 = vmatprep.subr.mxu0 0.0
    %1369 = vmatpush2.msra.mxu0 0.0
    %1370 = vmatprep.subr.mxu0 0.0
    %1371 = vmatpush2.msra.mxu0 0.0
    %1372 = vmatprep.subr.mxu0 0.0
    %1373 = vmatpush2.msra.mxu0 0.0
    %1374 = vmatprep.subr.mxu0 0.0
    %1375 = vmatpush2.msra.mxu0 0.0
    %1376 = vmatprep.subr.mxu0 0.0
    %1377 = vmatpush2.msra.mxu0 0.0
    %1378 = vmatprep.subr.mxu0 0.0
    %1379 = vmatpush2.msra.mxu0 0.0
    %1380 = vmatprep.subr.mxu0 0.0
    %1381 = vmatpush2.msra.mxu0 0.0
    %1382 = vmatprep.subr.mxu0 0.0
    %1383 = vmatpush2.msra.mxu0 0.0
    %1384 = vmatprep.subr.mxu0 0.0
    %1385 = vmatpush2.msra.mxu0 0.0
    %1386 = vmatprep.subr.mxu0 0.0
    %1387 = vmatpush2.msra.mxu0 0.0
    %1388 = vmatprep.subr.mxu0 0.0
    %1389 = vmatpush2.msra.mxu0 0.0
    %1390 = vmatprep.subr.mxu0 0.0
    %1391 = vmatpush2.msra.mxu0 0.0
    %1392 = vmatprep.subr.mxu0 0.0
    %1393 = vmatpush2.msra.mxu0 0.0
    %1394 = vmatprep.subr.mxu0 0.0
    %1395 = vmatpush2.msra.mxu0 0.0
    %1396 = vmatprep.mubr.f32.mxu0 0.0
    %1397 = vmatmul.mubr.f32.gmra.mxu0 %v1327
    %v1398 = vpop.f32.mrf.mxu0
    %v1399 = vadd.f32 %v1325, %v1398
    %v1400 = vpop.f32.mrf.mxu0
    %1401 = vmatprep.mubr.f32.mxu0 0.0
    %1402 = vmatmul.mubr.f32.gmra.mxu0 %v1330
    %v1403 = vpop.f32.mrf.mxu0
    %v1404 = vadd.f32 %v1325, %v1403
    %v1405 = vpop.f32.mrf.mxu0
    %1406 = vdwg.mxu0
    %v1407 = vmul.f32 %v1399, %v316
    %v1408 = vmul.f32 %v1404, %v317
    %v1409 = vmul.f32 %v1399, %v318
    %v1410 = vmul.f32 %v1404, %v319
    %v1411 = vmul.f32 %v1399, %v320
    %v1412 = vmul.f32 %v1404, %v321
    %v1413 = vmul.f32 %v1399, %v322
    %v1414 = vmul.f32 %v1404, %v323
    %v1415 = vmul.f32 %v1399, %v435
    %v1416 = vmul.f32 %v1404, %v437
    %v1417 = vmul.f32 %v1399, %v439
    %v1418 = vmul.f32 %v1404, %v441
    %v1419 = vmul.f32 %v1399, %v443
    %v1420 = vmul.f32 %v1404, %v445
    %v1421 = vmul.f32 %v1399, %v447
    %v1422 = vmul.f32 %v1404, %v449
    %v1423 = vmul.f32 %v1399, %v467
    %v1424 = vmul.f32 %v1404, %v469
    %v1425 = vmul.f32 %v1399, %v471
    %v1426 = vmul.f32 %v1404, %v473
    %v1427 = vmul.f32 %v1399, %v475
    %v1428 = vmul.f32 %v1404, %v477
    %v1429 = vmul.f32 %v1399, %v479
    %v1430 = vmul.f32 %v1404, %v481
    %1439 = vrot.lane.b32.xlu0 %v1415, 96
    %v1440 = vpop.permute.xlu0 %1439
    %1441 = vrot.lane.b32.xlu0 %v1416, 96
    %v1442 = vpop.permute.xlu0 %1441
    %1443 = vrot.lane.b32.xlu0 %v1417, 96
    %v1444 = vpop.permute.xlu0 %1443
    %1445 = vrot.lane.b32.xlu0 %v1418, 96
    %v1446 = vpop.permute.xlu0 %1445
    %1447 = vrot.lane.b32.xlu0 %v1419, 96
    %v1448 = vpop.permute.xlu0 %1447
    %1449 = vrot.lane.b32.xlu0 %v1420, 96
    %v1450 = vpop.permute.xlu0 %1449
    %1451 = vrot.lane.b32.xlu0 %v1421, 96
    %v1452 = vpop.permute.xlu0 %1451
    %1453 = vrot.lane.b32.xlu0 %v1422, 96
    %v1454 = vpop.permute.xlu0 %1453
    %v1456 = vsel %vm137, %v1407, 0
    %v1459 = vsel %vm137, %v1408, 0
    %v1462 = vsel %vm137, %v1409, 0
    %v1465 = vsel %vm137, %v1410, 0
    %v1468 = vsel %vm137, %v1411, 0
    %v1471 = vsel %vm137, %v1412, 0
    %v1474 = vsel %vm137, %v1413, 0
    %v1477 = vsel %vm137, %v1414, 0
    %v1479 = vsel %vm137, %v1440, 0
    %v1481 = vsel %vm137, %v1442, 0
    %v1483 = vsel %vm137, %v1444, 0
    %v1485 = vsel %vm137, %v1446, 0
    %v1487 = vsel %vm137, %v1448, 0
    %v1489 = vsel %vm137, %v1450, 0
    %v1491 = vsel %vm137, %v1452, 0
    %v1493 = vsel %vm137, %v1454, 0
    %1495 = vmatprep.subr.mxu0 0.0
    %1496 = vmatpush1.xpose.msra.mxu0 0.0
    %1497 = vmatprep.subr.mxu0 0.0
    %1498 = vmatpush1.xpose.msra.mxu0 0.0
    %1499 = vmatprep.subr.mxu0 0.0
    %1500 = vmatpush1.xpose.msra.mxu0 0.0
    %1501 = vmatprep.subr.mxu0 0.0
    %1502 = vmatpush1.xpose.msra.mxu0 0.0
    %1503 = vmatprep.subr.mxu0 0.0
    %1504 = vmatpush1.xpose.msra.mxu0 0.0
    %1505 = vmatprep.subr.mxu0 0.0
    %1506 = vmatpush1.xpose.msra.mxu0 0.0
    %1507 = vmatprep.subr.mxu0 0.0
    %1508 = vmatpush1.xpose.msra.mxu0 0.0
    %1509 = vmatprep.subr.mxu0 0.0
    %1510 = vmatpush1.xpose.msra.mxu0 0.0
    %1511 = vmatprep.subr.mxu0 0.0
    %1512 = vmatpush1.xpose.msra.mxu0 %v1493
    %1513 = vmatprep.subr.mxu0 0.0
    %1514 = vmatpush1.xpose.msra.mxu0 %v1491
    %1515 = vmatprep.subr.mxu0 0.0
    %1516 = vmatpush1.xpose.msra.mxu0 %v1489
    %1517 = vmatprep.subr.mxu0 0.0
    %1518 = vmatpush1.xpose.msra.mxu0 %v1487
    %1519 = vmatprep.subr.mxu0 0.0
    %1520 = vmatpush1.xpose.msra.mxu0 %v1485
    %1521 = vmatprep.subr.mxu0 0.0
    %1522 = vmatpush1.xpose.msra.mxu0 %v1483
    %1523 = vmatprep.subr.mxu0 0.0
    %1524 = vmatpush1.xpose.msra.mxu0 %v1481
    %1525 = vmatprep.subr.mxu0 0.0
    %1526 = vmatpush1.xpose.msra.mxu0 %v1479
    %1527 = vmatprep.subr.mxu0 0.0
    %1528 = vmatpush2.xpose.msra.mxu0 0.0
    %1529 = vmatprep.subr.mxu0 0.0
    %1530 = vmatpush2.xpose.msra.mxu0 0.0
    %1531 = vmatprep.subr.mxu0 0.0
    %1532 = vmatpush2.xpose.msra.mxu0 0.0
    %1533 = vmatprep.subr.mxu0 0.0
    %1534 = vmatpush2.xpose.msra.mxu0 0.0
    %1535 = vmatprep.subr.mxu0 0.0
    %1536 = vmatpush2.xpose.msra.mxu0 0.0
    %1537 = vmatprep.subr.mxu0 0.0
    %1538 = vmatpush2.xpose.msra.mxu0 0.0
    %1539 = vmatprep.subr.mxu0 0.0
    %1540 = vmatpush2.xpose.msra.mxu0 0.0
    %1541 = vmatprep.subr.mxu0 0.0
    %1542 = vmatpush2.xpose.msra.mxu0 0.0
    %1543 = vmatprep.subr.mxu0 0.0
    %1544 = vmatpush2.xpose.msra.mxu0 0.0
    %1545 = vmatprep.subr.mxu0 0.0
    %1546 = vmatpush2.xpose.msra.mxu0 0.0
    %1547 = vmatprep.subr.mxu0 0.0
    %1548 = vmatpush2.xpose.msra.mxu0 0.0
    %1549 = vmatprep.subr.mxu0 0.0
    %1550 = vmatpush2.xpose.msra.mxu0 0.0
    %1551 = vmatprep.subr.mxu0 0.0
    %1552 = vmatpush2.xpose.msra.mxu0 0.0
    %1553 = vmatprep.subr.mxu0 0.0
    %1554 = vmatpush2.xpose.msra.mxu0 0.0
    %1555 = vmatprep.subr.mxu0 0.0
    %1556 = vmatpush2.xpose.msra.mxu0 0.0
    %1557 = vmatprep.subr.mxu0 0.0
    %1558 = vmatpush2.xpose.msra.mxu0 0.0
    %1559 = vmatprep.mubr.f32.mxu0 0.0
    %1560 = vmatmul.mubr.f32.gmra.mxu0 %v1456
    %v1561 = vpop.f32.mrf.mxu0
    %v1562 = vadd.f32 %v290, %v1561
    %v1563 = vpop.f32.mrf.mxu0
    %1564 = vmatprep.mubr.f32.mxu0 0.0
    %1565 = vmatmul.mubr.f32.gmra.mxu0 %v1459
    %v1566 = vpop.f32.mrf.mxu0
    %v1567 = vadd.f32 %v291, %v1566
    %v1568 = vpop.f32.mrf.mxu0
    %1569 = vmatprep.mubr.f32.mxu0 0.0
    %1570 = vmatmul.mubr.f32.gmra.mxu0 %v1462
    %v1571 = vpop.f32.mrf.mxu0
    %v1572 = vadd.f32 %v292, %v1571
    %v1573 = vpop.f32.mrf.mxu0
    %1574 = vmatprep.mubr.f32.mxu0 0.0
    %1575 = vmatmul.mubr.f32.gmra.mxu0 %v1465
    %v1576 = vpop.f32.mrf.mxu0
    %v1577 = vadd.f32 %v293, %v1576
    %v1578 = vpop.f32.mrf.mxu0
    %1579 = vmatprep.mubr.f32.mxu0 0.0
    %1580 = vmatmul.mubr.f32.gmra.mxu0 %v1468
    %v1581 = vpop.f32.mrf.mxu0
    %v1582 = vadd.f32 %v294, %v1581
    %v1583 = vpop.f32.mrf.mxu0
    %1584 = vmatprep.mubr.f32.mxu0 0.0
    %1585 = vmatmul.mubr.f32.gmra.mxu0 %v1471
    %v1586 = vpop.f32.mrf.mxu0
    %v1587 = vadd.f32 %v295, %v1586
    %v1588 = vpop.f32.mrf.mxu0
    %1589 = vmatprep.mubr.f32.mxu0 0.0
    %1590 = vmatmul.mubr.f32.gmra.mxu0 %v1474
    %v1591 = vpop.f32.mrf.mxu0
    %v1592 = vadd.f32 %v296, %v1591
    %v1593 = vpop.f32.mrf.mxu0
    %1594 = vmatprep.mubr.f32.mxu0 0.0
    %1595 = vmatmul.mubr.f32.gmra.mxu0 %v1477
    %v1596 = vpop.f32.mrf.mxu0
    %v1597 = vadd.f32 %v297, %v1596
    %v1598 = vpop.f32.mrf.mxu0
    %1599 = vdwg.mxu0
    %v1600 = vsel %vm49, %v1562, -inf
    %1601 = vmax.xlane.f32.xlu0 %v1600
    %v1602 = vpop.xlane.xlu0 %1601
    %v1603 = vsel %vm49, %v1567, -inf
    %1604 = vmax.xlane.f32.xlu0 %v1603
    %v1605 = vpop.xlane.xlu0 %1604
    %v1606 = vsel %vm49, %v1572, -inf
    %1607 = vmax.xlane.f32.xlu0 %v1606
    %v1608 = vpop.xlane.xlu0 %1607
    %v1609 = vsel %vm49, %v1577, -inf
    %1610 = vmax.xlane.f32.xlu0 %v1609
    %v1611 = vpop.xlane.xlu0 %1610
    %v1612 = vsel %vm49, %v1582, -inf
    %1613 = vmax.xlane.f32.xlu0 %v1612
    %v1614 = vpop.xlane.xlu0 %1613
    %v1615 = vsel %vm49, %v1587, -inf
    %1616 = vmax.xlane.f32.xlu0 %v1615
    %v1617 = vpop.xlane.xlu0 %1616
    %v1618 = vsel %vm49, %v1592, -inf
    %1619 = vmax.xlane.f32.xlu0 %v1618
    %v1620 = vpop.xlane.xlu0 %1619
    %v1621 = vsel %vm49, %v1597, -inf
    %1622 = vmax.xlane.f32.xlu0 %v1621
    %v1623 = vpop.xlane.xlu0 %1622
    %v1624 = vsub.f32 %v1562, %v1602
    %v1625 = vsub.f32 %v1567, %v1605
    %v1626 = vsub.f32 %v1572, %v1608
    %v1627 = vsub.f32 %v1577, %v1611
    %v1628 = vsub.f32 %v1582, %v1614
    %v1629 = vsub.f32 %v1587, %v1617
    %v1630 = vsub.f32 %v1592, %v1620
    %v1631 = vsub.f32 %v1597, %v1623
    %v1632 = vmul.f32 %v1624, 1.442695
    %v1633 = vpow.pop %v1632
    %v1634 = vmul.f32 %v1625, 1.442695
    %v1635 = vpow.pop %v1634
    %v1636 = vmul.f32 %v1626, 1.442695
    %v1637 = vpow.pop %v1636
    %v1638 = vmul.f32 %v1627, 1.442695
    %v1639 = vpow.pop %v1638
    %v1640 = vmul.f32 %v1628, 1.442695
    %v1641 = vpow.pop %v1640
    %v1642 = vmul.f32 %v1629, 1.442695
    %v1643 = vpow.pop %v1642
    %v1644 = vmul.f32 %v1630, 1.442695
    %v1645 = vpow.pop %v1644
    %v1646 = vmul.f32 %v1631, 1.442695
    %v1647 = vpow.pop %v1646
    %v1648 = vsel %vm49, %v1633, 0.0
    %1649 = vadd.xlane.f32.xlu0 %v1648
    %v1650 = vpop.xlane.xlu0 %1649
    %v1651 = vsel %vm49, %v1635, 0.0
    %1652 = vadd.xlane.f32.xlu0 %v1651
    %v1653 = vpop.xlane.xlu0 %1652
    %v1654 = vsel %vm49, %v1637, 0.0
    %1655 = vadd.xlane.f32.xlu0 %v1654
    %v1656 = vpop.xlane.xlu0 %1655
    %v1657 = vsel %vm49, %v1639, 0.0
    %1658 = vadd.xlane.f32.xlu0 %v1657
    %v1659 = vpop.xlane.xlu0 %1658
    %v1660 = vsel %vm49, %v1641, 0.0
    %1661 = vadd.xlane.f32.xlu0 %v1660
    %v1662 = vpop.xlane.xlu0 %1661
    %v1663 = vsel %vm49, %v1643, 0.0
    %1664 = vadd.xlane.f32.xlu0 %v1663
    %v1665 = vpop.xlane.xlu0 %1664
    %v1666 = vsel %vm49, %v1645, 0.0
    %1667 = vadd.xlane.f32.xlu0 %v1666
    %v1668 = vpop.xlane.xlu0 %1667
    %v1669 = vsel %vm49, %v1647, 0.0
    %1670 = vadd.xlane.f32.xlu0 %v1669
    %v1671 = vpop.xlane.xlu0 %1670
    %v1672 = vrcp.pop %v1650
    %v1673 = vmul.f32 %v1633, %v1672
    %v1674 = vrcp.pop %v1653
    %v1675 = vmul.f32 %v1635, %v1674
    %v1676 = vrcp.pop %v1656
    %v1677 = vmul.f32 %v1637, %v1676
    %v1678 = vrcp.pop %v1659
    %v1679 = vmul.f32 %v1639, %v1678
    %v1680 = vrcp.pop %v1662
    %v1681 = vmul.f32 %v1641, %v1680
    %v1682 = vrcp.pop %v1665
    %v1683 = vmul.f32 %v1643, %v1682
    %v1684 = vrcp.pop %v1668
    %v1685 = vmul.f32 %v1645, %v1684
    %v1686 = vrcp.pop %v1671
    %v1687 = vmul.f32 %v1647, %v1686
    %1696 = vrot.lane.b32.xlu0 %v1423, 64
    %v1697 = vpop.permute.xlu0 %1696
    %1698 = vrot.lane.b32.xlu0 %v1424, 64
    %v1699 = vpop.permute.xlu0 %1698
    %1700 = vrot.lane.b32.xlu0 %v1425, 64
    %v1701 = vpop.permute.xlu0 %1700
    %1702 = vrot.lane.b32.xlu0 %v1426, 64
    %v1703 = vpop.permute.xlu0 %1702
    %1704 = vrot.lane.b32.xlu0 %v1427, 64
    %v1705 = vpop.permute.xlu0 %1704
    %1706 = vrot.lane.b32.xlu0 %v1428, 64
    %v1707 = vpop.permute.xlu0 %1706
    %1708 = vrot.lane.b32.xlu0 %v1429, 64
    %v1709 = vpop.permute.xlu0 %1708
    %1710 = vrot.lane.b32.xlu0 %v1430, 64
    %v1711 = vpop.permute.xlu0 %1710
    %v1721 = vsel %vm49, %v1673, 0
    %v1724 = vsel %vm49, %v1675, 0
    %v1727 = vsel %vm49, %v1677, 0
    %v1730 = vsel %vm49, %v1679, 0
    %v1733 = vsel %vm49, %v1681, 0
    %v1736 = vsel %vm49, %v1683, 0
    %v1739 = vsel %vm49, %v1685, 0
    %v1742 = vsel %vm49, %v1687, 0
    %1744 = vmatprep.subr.mxu0 0.0
    %1745 = vmatpush1.msra.mxu0 0.0
    %1746 = vmatprep.subr.mxu0 0.0
    %1747 = vmatpush1.msra.mxu0 0.0
    %1748 = vmatprep.subr.mxu0 0.0
    %1749 = vmatpush1.msra.mxu0 0.0
    %1750 = vmatprep.subr.mxu0 0.0
    %1751 = vmatpush1.msra.mxu0 0.0
    %1752 = vmatprep.subr.mxu0 0.0
    %1753 = vmatpush1.msra.mxu0 0.0
    %1754 = vmatprep.subr.mxu0 0.0
    %1755 = vmatpush1.msra.mxu0 0.0
    %1756 = vmatprep.subr.mxu0 0.0
    %1757 = vmatpush1.msra.mxu0 0.0
    %1758 = vmatprep.subr.mxu0 0.0
    %1759 = vmatpush1.msra.mxu0 0.0
    %1760 = vmatprep.subr.mxu0 0.0
    %1761 = vmatpush1.msra.mxu0 %v1711
    %1762 = vmatprep.subr.mxu0 0.0
    %1763 = vmatpush1.msra.mxu0 %v1709
    %1764 = vmatprep.subr.mxu0 0.0
    %1765 = vmatpush1.msra.mxu0 %v1707
    %1766 = vmatprep.subr.mxu0 0.0
    %1767 = vmatpush1.msra.mxu0 %v1705
    %1768 = vmatprep.subr.mxu0 0.0
    %1769 = vmatpush1.msra.mxu0 %v1703
    %1770 = vmatprep.subr.mxu0 0.0
    %1771 = vmatpush1.msra.mxu0 %v1701
    %1772 = vmatprep.subr.mxu0 0.0
    %1773 = vmatpush1.msra.mxu0 %v1699
    %1774 = vmatprep.subr.mxu0 0.0
    %1775 = vmatpush1.msra.mxu0 %v1697
    %1776 = vmatprep.subr.mxu0 0.0
    %1777 = vmatpush2.msra.mxu0 0.0
    %1778 = vmatprep.subr.mxu0 0.0
    %1779 = vmatpush2.msra.mxu0 0.0
    %1780 = vmatprep.subr.mxu0 0.0
    %1781 = vmatpush2.msra.mxu0 0.0
    %1782 = vmatprep.subr.mxu0 0.0
    %1783 = vmatpush2.msra.mxu0 0.0
    %1784 = vmatprep.subr.mxu0 0.0
    %1785 = vmatpush2.msra.mxu0 0.0
    %1786 = vmatprep.subr.mxu0 0.0
    %1787 = vmatpush2.msra.mxu0 0.0
    %1788 = vmatprep.subr.mxu0 0.0
    %1789 = vmatpush2.msra.mxu0 0.0
    %1790 = vmatprep.subr.mxu0 0.0
    %1791 = vmatpush2.msra.mxu0 0.0
    %1792 = vmatprep.subr.mxu0 0.0
    %1793 = vmatpush2.msra.mxu0 0.0
    %1794 = vmatprep.subr.mxu0 0.0
    %1795 = vmatpush2.msra.mxu0 0.0
    %1796 = vmatprep.subr.mxu0 0.0
    %1797 = vmatpush2.msra.mxu0 0.0
    %1798 = vmatprep.subr.mxu0 0.0
    %1799 = vmatpush2.msra.mxu0 0.0
    %1800 = vmatprep.subr.mxu0 0.0
    %1801 = vmatpush2.msra.mxu0 0.0
    %1802 = vmatprep.subr.mxu0 0.0
    %1803 = vmatpush2.msra.mxu0 0.0
    %1804 = vmatprep.subr.mxu0 0.0
    %1805 = vmatpush2.msra.mxu0 0.0
    %1806 = vmatprep.subr.mxu0 0.0
    %1807 = vmatpush2.msra.mxu0 0.0
    %1808 = vmatprep.mubr.f32.mxu0 0.0
    %1809 = vmatmul.mubr.f32.gmra.mxu0 %v1721
    %v1810 = vpop.f32.mrf.mxu0
    %v1811 = vadd.f32 0.0, %v1810
    %v1812 = vpop.f32.mrf.mxu0
    %1813 = vmatprep.mubr.f32.mxu0 0.0
    %1814 = vmatmul.mubr.f32.gmra.mxu0 %v1724
    %v1815 = vpop.f32.mrf.mxu0
    %v1816 = vadd.f32 0.0, %v1815
    %v1817 = vpop.f32.mrf.mxu0
    %1818 = vmatprep.mubr.f32.mxu0 0.0
    %1819 = vmatmul.mubr.f32.gmra.mxu0 %v1727
    %v1820 = vpop.f32.mrf.mxu0
    %v1821 = vadd.f32 0.0, %v1820
    %v1822 = vpop.f32.mrf.mxu0
    %1823 = vmatprep.mubr.f32.mxu0 0.0
    %1824 = vmatmul.mubr.f32.gmra.mxu0 %v1730
    %v1825 = vpop.f32.mrf.mxu0
    %v1826 = vadd.f32 0.0, %v1825
    %v1827 = vpop.f32.mrf.mxu0
    %1828 = vmatprep.mubr.f32.mxu0 0.0
    %1829 = vmatmul.mubr.f32.gmra.mxu0 %v1733
    %v1830 = vpop.f32.mrf.mxu0
    %v1831 = vadd.f32 0.0, %v1830
    %v1832 = vpop.f32.mrf.mxu0
    %1833 = vmatprep.mubr.f32.mxu0 0.0
    %1834 = vmatmul.mubr.f32.gmra.mxu0 %v1736
    %v1835 = vpop.f32.mrf.mxu0
    %v1836 = vadd.f32 0.0, %v1835
    %v1837 = vpop.f32.mrf.mxu0
    %1838 = vmatprep.mubr.f32.mxu0 0.0
    %1839 = vmatmul.mubr.f32.gmra.mxu0 %v1739
    %v1840 = vpop.f32.mrf.mxu0
    %v1841 = vadd.f32 0.0, %v1840
    %v1842 = vpop.f32.mrf.mxu0
    %1843 = vmatprep.mubr.f32.mxu0 0.0
    %1844 = vmatmul.mubr.f32.gmra.mxu0 %v1742
    %v1845 = vpop.f32.mrf.mxu0
    %v1846 = vadd.f32 0.0, %v1845
    %v1847 = vpop.f32.mrf.mxu0
    %1848 = vdwg.mxu0
    %v1849 = vadd.f32 %v1811, %v1821
    %v1850 = vadd.f32 %v1816, %v1826
    %v1851 = vadd.f32 %v1849, %v1831
    %v1852 = vadd.f32 %v1850, %v1836
    %v1853 = vadd.f32 %v1851, %v1841
    %v1854 = vadd.f32 %v1852, %v1846
    %v1855 = vlaneseq
    %v1856 = vshrl.u32 %v1855, 7
    %v1857 = vsub.s32 1, %v1856
    %v1858 = vrot.slane %v1321, %v1857
    %1863 = vrot.lane.b32.xlu0 %v1312, 32
    %v1864 = vpop.permute.xlu0 %1863
    %1865 = vrot.lane.b32.xlu0 %v1314, 32
    %v1866 = vpop.permute.xlu0 %1865
    %1867 = vrot.lane.b32.xlu0 %v1316, 32
    %v1868 = vpop.permute.xlu0 %1867
    %1869 = vrot.lane.b32.xlu0 %v1318, 32
    %v1870 = vpop.permute.xlu0 %1869
    %v1876 = vsel %vm137, %v1853, 0
    %v1879 = vsel %vm137, %v1854, 0
    %1881 = vmatprep.subr.mxu0 0.0
    %1882 = vmatpush1.msra.mxu0 0.0
    %1883 = vmatprep.subr.mxu0 0.0
    %1884 = vmatpush1.msra.mxu0 0.0
    %1885 = vmatprep.subr.mxu0 0.0
    %1886 = vmatpush1.msra.mxu0 0.0
    %1887 = vmatprep.subr.mxu0 0.0
    %1888 = vmatpush1.msra.mxu0 0.0
    %1889 = vmatprep.subr.mxu0 0.0
    %1890 = vmatpush1.msra.mxu0 0.0
    %1891 = vmatprep.subr.mxu0 0.0
    %1892 = vmatpush1.msra.mxu0 0.0
    %1893 = vmatprep.subr.mxu0 0.0
    %1894 = vmatpush1.msra.mxu0 0.0
    %1895 = vmatprep.subr.mxu0 0.0
    %1896 = vmatpush1.msra.mxu0 0.0
    %1897 = vmatprep.subr.mxu0 0.0
    %1898 = vmatpush1.msra.mxu0 0.0
    %1899 = vmatprep.subr.mxu0 0.0
    %1900 = vmatpush1.msra.mxu0 0.0
    %1901 = vmatprep.subr.mxu0 0.0
    %1902 = vmatpush1.msra.mxu0 0.0
    %1903 = vmatprep.subr.mxu0 0.0
    %1904 = vmatpush1.msra.mxu0 0.0
    %1905 = vmatprep.subr.mxu0 0.0
    %1906 = vmatpush1.msra.mxu0 %v1870
    %1907 = vmatprep.subr.mxu0 0.0
    %1908 = vmatpush1.msra.mxu0 %v1868
    %1909 = vmatprep.subr.mxu0 0.0
    %1910 = vmatpush1.msra.mxu0 %v1866
    %1911 = vmatprep.subr.mxu0 0.0
    %1912 = vmatpush1.msra.mxu0 %v1864
    %1913 = vmatprep.subr.mxu0 0.0
    %1914 = vmatpush2.msra.mxu0 0.0
    %1915 = vmatprep.subr.mxu0 0.0
    %1916 = vmatpush2.msra.mxu0 0.0
    %1917 = vmatprep.subr.mxu0 0.0
    %1918 = vmatpush2.msra.mxu0 0.0
    %1919 = vmatprep.subr.mxu0 0.0
    %1920 = vmatpush2.msra.mxu0 0.0
    %1921 = vmatprep.subr.mxu0 0.0
    %1922 = vmatpush2.msra.mxu0 0.0
    %1923 = vmatprep.subr.mxu0 0.0
    %1924 = vmatpush2.msra.mxu0 0.0
    %1925 = vmatprep.subr.mxu0 0.0
    %1926 = vmatpush2.msra.mxu0 0.0
    %1927 = vmatprep.subr.mxu0 0.0
    %1928 = vmatpush2.msra.mxu0 0.0
    %1929 = vmatprep.subr.mxu0 0.0
    %1930 = vmatpush2.msra.mxu0 0.0
    %1931 = vmatprep.subr.mxu0 0.0
    %1932 = vmatpush2.msra.mxu0 0.0
    %1933 = vmatprep.subr.mxu0 0.0
    %1934 = vmatpush2.msra.mxu0 0.0
    %1935 = vmatprep.subr.mxu0 0.0
    %1936 = vmatpush2.msra.mxu0 0.0
    %1937 = vmatprep.subr.mxu0 0.0
    %1938 = vmatpush2.msra.mxu0 0.0
    %1939 = vmatprep.subr.mxu0 0.0
    %1940 = vmatpush2.msra.mxu0 0.0
    %1941 = vmatprep.subr.mxu0 0.0
    %1942 = vmatpush2.msra.mxu0 0.0
    %1943 = vmatprep.subr.mxu0 0.0
    %1944 = vmatpush2.msra.mxu0 0.0
    %1945 = vmatprep.mubr.f32.mxu0 0.0
    %1946 = vmatmul.mubr.f32.gmra.mxu0 %v1876
    %v1947 = vpop.f32.mrf.mxu0
    %v1948 = vadd.f32 %v1858, %v1947
    %v1949 = vpop.f32.mrf.mxu0
    %1950 = vmatprep.mubr.f32.mxu0 0.0
    %1951 = vmatmul.mubr.f32.gmra.mxu0 %v1879
    %v1952 = vpop.f32.mrf.mxu0
    %v1953 = vadd.f32 %v1858, %v1952
    %v1954 = vpop.f32.mrf.mxu0
    %1955 = vdwg.mxu0
    %v1956 = vadd.f32 %v1948, %v1309
    %v1957 = vadd.f32 %v1953, %v1310
    %v1958 = vsel %vm137, %v1956, 0.0
    %1959 = vadd.xlane.f32.xlu0 %v1958
    %v1960 = vpop.xlane.xlu0 %1959
    %v1961 = vsel %vm137, %v1957, 0.0
    %1962 = vadd.xlane.f32.xlu0 %v1961
    %v1963 = vpop.xlane.xlu0 %1962
    %v1964 = vmul.f32 %v1960, %v144
    %v1965 = vmul.f32 %v1963, %v144
    %v1966 = vsub.f32 %v1956, %v1964
    %v1967 = vsub.f32 %v1957, %v1965
    %v1968 = vmul.f32 %v1966, %v1966
    %v1969 = vmul.f32 %v1967, %v1967
    %v1970 = vsel %vm137, %v1968, 0.0
    %1971 = vadd.xlane.f32.xlu0 %v1970
    %v1972 = vpop.xlane.xlu0 %1971
    %v1973 = vsel %vm137, %v1969, 0.0
    %1974 = vadd.xlane.f32.xlu0 %v1973
    %v1975 = vpop.xlane.xlu0 %1974
    %v1976 = vmul.f32 %v1972, %v144
    %v1977 = vmul.f32 %v1975, %v144
    %v1978 = vadd.f32 %v1976, 1e-12
    %v1979 = vadd.f32 %v1977, 1e-12
    %v1980 = vrsqrt.pop %v1978
    %v1981 = vrsqrt.pop %v1979
    %v1982 = vmul.f32 %v1966, %v1980
    %v1983 = vmul.f32 %v1967, %v1981
    %v1984 = vlaneseq
    %v1985 = vshrl.u32 %v1984, 7
    %v1986 = vsub.s32 2, %v1985
    %v1987 = vrot.slane %v1321, %v1986
    %v1988 = vmul.f32 %v1982, %v1987
    %v1989 = vmul.f32 %v1983, %v1987
    %v1990 = vlaneseq
    %v1991 = vshrl.u32 %v1990, 7
    %v1992 = vsub.s32 3, %v1991
    %v1993 = vrot.slane %v1321, %v1992
    %v1994 = vadd.f32 %v1988, %v1993
    %v1995 = vadd.f32 %v1989, %v1993
    %v1996 = vlaneseq
    %v1997 = vshrl.u32 %v1996, 7
    %v1998 = vsub.s32 4, %v1997
    %v1999 = vrot.slane %v1321, %v1998
    %v2001 = vsel %vm137, %v1994, 0
    %v2004 = vsel %vm137, %v1995, 0
    %2006 = vmatprep.subr.mxu0 0.0
    %2007 = vmatpush1.msra.mxu0 0.0
    %2008 = vmatprep.subr.mxu0 0.0
    %2009 = vmatpush1.msra.mxu0 0.0
    %2010 = vmatprep.subr.mxu0 0.0
    %2011 = vmatpush1.msra.mxu0 0.0
    %2012 = vmatprep.subr.mxu0 0.0
    %2013 = vmatpush1.msra.mxu0 0.0
    %2014 = vmatprep.subr.mxu0 0.0
    %2015 = vmatpush1.msra.mxu0 0.0
    %2016 = vmatprep.subr.mxu0 0.0
    %2017 = vmatpush1.msra.mxu0 0.0
    %2018 = vmatprep.subr.mxu0 0.0
    %2019 = vmatpush1.msra.mxu0 0.0
    %2020 = vmatprep.subr.mxu0 0.0
    %2021 = vmatpush1.msra.mxu0 0.0
    %2022 = vmatprep.subr.mxu0 0.0
    %2023 = vmatpush1.msra.mxu0 0.0
    %2024 = vmatprep.subr.mxu0 0.0
    %2025 = vmatpush1.msra.mxu0 0.0
    %2026 = vmatprep.subr.mxu0 0.0
    %2027 = vmatpush1.msra.mxu0 0.0
    %2028 = vmatprep.subr.mxu0 0.0
    %2029 = vmatpush1.msra.mxu0 0.0
    %2030 = vmatprep.subr.mxu0 0.0
    %2031 = vmatpush1.msra.mxu0 %v1319
    %2032 = vmatprep.subr.mxu0 0.0
    %2033 = vmatpush1.msra.mxu0 %v1317
    %2034 = vmatprep.subr.mxu0 0.0
    %2035 = vmatpush1.msra.mxu0 %v1315
    %2036 = vmatprep.subr.mxu0 0.0
    %2037 = vmatpush1.msra.mxu0 %v1313
    %2038 = vmatprep.subr.mxu0 0.0
    %2039 = vmatpush2.msra.mxu0 0.0
    %2040 = vmatprep.subr.mxu0 0.0
    %2041 = vmatpush2.msra.mxu0 0.0
    %2042 = vmatprep.subr.mxu0 0.0
    %2043 = vmatpush2.msra.mxu0 0.0
    %2044 = vmatprep.subr.mxu0 0.0
    %2045 = vmatpush2.msra.mxu0 0.0
    %2046 = vmatprep.subr.mxu0 0.0
    %2047 = vmatpush2.msra.mxu0 0.0
    %2048 = vmatprep.subr.mxu0 0.0
    %2049 = vmatpush2.msra.mxu0 0.0
    %2050 = vmatprep.subr.mxu0 0.0
    %2051 = vmatpush2.msra.mxu0 0.0
    %2052 = vmatprep.subr.mxu0 0.0
    %2053 = vmatpush2.msra.mxu0 0.0
    %2054 = vmatprep.subr.mxu0 0.0
    %2055 = vmatpush2.msra.mxu0 0.0
    %2056 = vmatprep.subr.mxu0 0.0
    %2057 = vmatpush2.msra.mxu0 0.0
    %2058 = vmatprep.subr.mxu0 0.0
    %2059 = vmatpush2.msra.mxu0 0.0
    %2060 = vmatprep.subr.mxu0 0.0
    %2061 = vmatpush2.msra.mxu0 0.0
    %2062 = vmatprep.subr.mxu0 0.0
    %2063 = vmatpush2.msra.mxu0 0.0
    %2064 = vmatprep.subr.mxu0 0.0
    %2065 = vmatpush2.msra.mxu0 0.0
    %2066 = vmatprep.subr.mxu0 0.0
    %2067 = vmatpush2.msra.mxu0 0.0
    %2068 = vmatprep.subr.mxu0 0.0
    %2069 = vmatpush2.msra.mxu0 0.0
    %2070 = vmatprep.mubr.f32.mxu0 0.0
    %2071 = vmatmul.mubr.f32.gmra.mxu0 %v2001
    %v2072 = vpop.f32.mrf.mxu0
    %v2073 = vadd.f32 %v1999, %v2072
    %v2074 = vpop.f32.mrf.mxu0
    %2075 = vmatprep.mubr.f32.mxu0 0.0
    %2076 = vmatmul.mubr.f32.gmra.mxu0 %v2004
    %v2077 = vpop.f32.mrf.mxu0
    %v2078 = vadd.f32 %v1999, %v2077
    %v2079 = vpop.f32.mrf.mxu0
    %2080 = vdwg.mxu0
    %v2081 = vmul.f32 %v2073, 0.5
    %v2082 = vmul.f32 %v2078, 0.5
    %v2083 = vmul.f32 %v2073, 0.044715
    %v2084 = vmul.f32 %v2078, 0.044715
    %v2085 = vmul.f32 %v2083, %v2073
    %v2086 = vmul.f32 %v2084, %v2078
    %v2087 = vmul.f32 %v2085, %v2073
    %v2088 = vmul.f32 %v2086, %v2078
    %v2089 = vadd.f32 %v2073, %v2087
    %v2090 = vadd.f32 %v2078, %v2088
    %v2091 = vmul.f32 %v2089, 0.7978846
    %v2092 = vmul.f32 %v2090, 0.7978846
    %v2093 = vtanh.pop %v2091
    %v2094 = vtanh.pop %v2092
    %v2095 = vadd.f32 %v2093, 1.0
    %v2096 = vadd.f32 %v2094, 1.0
    %v2097 = vmul.f32 %v2081, %v2095
    %v2098 = vmul.f32 %v2082, %v2096
    %v2099 = vlaneseq
    %v2100 = vshrl.u32 %v2099, 7
    %v2101 = vsub.s32 5, %v2100
    %v2102 = vrot.slane %v1321, %v2101
    %2107 = vrot.lane.b32.xlu0 %v1313, 64
    %v2108 = vpop.permute.xlu0 %2107
    %2109 = vrot.lane.b32.xlu0 %v1315, 64
    %v2110 = vpop.permute.xlu0 %2109
    %2111 = vrot.lane.b32.xlu0 %v1317, 64
    %v2112 = vpop.permute.xlu0 %2111
    %2113 = vrot.lane.b32.xlu0 %v1319, 64
    %v2114 = vpop.permute.xlu0 %2113
    %v2116 = vsel %vm49, %v2097, 0
    %v2119 = vsel %vm49, %v2098, 0
    %v2121 = vsel %vm49, %v2108, 0
    %v2123 = vsel %vm49, %v2110, 0
    %v2125 = vsel %vm49, %v2112, 0
    %v2127 = vsel %vm49, %v2114, 0
    %2129 = vmatprep.subr.mxu0 0.0
    %2130 = vmatpush1.xpose.msra.mxu0 0.0
    %2131 = vmatprep.subr.mxu0 0.0
    %2132 = vmatpush1.xpose.msra.mxu0 0.0
    %2133 = vmatprep.subr.mxu0 0.0
    %2134 = vmatpush1.xpose.msra.mxu0 0.0
    %2135 = vmatprep.subr.mxu0 0.0
    %2136 = vmatpush1.xpose.msra.mxu0 0.0
    %2137 = vmatprep.subr.mxu0 0.0
    %2138 = vmatpush1.xpose.msra.mxu0 0.0
    %2139 = vmatprep.subr.mxu0 0.0
    %2140 = vmatpush1.xpose.msra.mxu0 0.0
    %2141 = vmatprep.subr.mxu0 0.0
    %2142 = vmatpush1.xpose.msra.mxu0 0.0
    %2143 = vmatprep.subr.mxu0 0.0
    %2144 = vmatpush1.xpose.msra.mxu0 0.0
    %2145 = vmatprep.subr.mxu0 0.0
    %2146 = vmatpush1.xpose.msra.mxu0 0.0
    %2147 = vmatprep.subr.mxu0 0.0
    %2148 = vmatpush1.xpose.msra.mxu0 0.0
    %2149 = vmatprep.subr.mxu0 0.0
    %2150 = vmatpush1.xpose.msra.mxu0 0.0
    %2151 = vmatprep.subr.mxu0 0.0
    %2152 = vmatpush1.xpose.msra.mxu0 0.0
    %2153 = vmatprep.subr.mxu0 0.0
    %2154 = vmatpush1.xpose.msra.mxu0 %v2127
    %2155 = vmatprep.subr.mxu0 0.0
    %2156 = vmatpush1.xpose.msra.mxu0 %v2125
    %2157 = vmatprep.subr.mxu0 0.0
    %2158 = vmatpush1.xpose.msra.mxu0 %v2123
    %2159 = vmatprep.subr.mxu0 0.0
    %2160 = vmatpush1.xpose.msra.mxu0 %v2121
    %2161 = vmatprep.subr.mxu0 0.0
    %2162 = vmatpush2.xpose.msra.mxu0 0.0
    %2163 = vmatprep.subr.mxu0 0.0
    %2164 = vmatpush2.xpose.msra.mxu0 0.0
    %2165 = vmatprep.subr.mxu0 0.0
    %2166 = vmatpush2.xpose.msra.mxu0 0.0
    %2167 = vmatprep.subr.mxu0 0.0
    %2168 = vmatpush2.xpose.msra.mxu0 0.0
    %2169 = vmatprep.subr.mxu0 0.0
    %2170 = vmatpush2.xpose.msra.mxu0 0.0
    %2171 = vmatprep.subr.mxu0 0.0
    %2172 = vmatpush2.xpose.msra.mxu0 0.0
    %2173 = vmatprep.subr.mxu0 0.0
    %2174 = vmatpush2.xpose.msra.mxu0 0.0
    %2175 = vmatprep.subr.mxu0 0.0
    %2176 = vmatpush2.xpose.msra.mxu0 0.0
    %2177 = vmatprep.subr.mxu0 0.0
    %2178 = vmatpush2.xpose.msra.mxu0 0.0
    %2179 = vmatprep.subr.mxu0 0.0
    %2180 = vmatpush2.xpose.msra.mxu0 0.0
    %2181 = vmatprep.subr.mxu0 0.0
    %2182 = vmatpush2.xpose.msra.mxu0 0.0
    %2183 = vmatprep.subr.mxu0 0.0
    %2184 = vmatpush2.xpose.msra.mxu0 0.0
    %2185 = vmatprep.subr.mxu0 0.0
    %2186 = vmatpush2.xpose.msra.mxu0 0.0
    %2187 = vmatprep.subr.mxu0 0.0
    %2188 = vmatpush2.xpose.msra.mxu0 0.0
    %2189 = vmatprep.subr.mxu0 0.0
    %2190 = vmatpush2.xpose.msra.mxu0 0.0
    %2191 = vmatprep.subr.mxu0 0.0
    %2192 = vmatpush2.xpose.msra.mxu0 0.0
    %2193 = vmatprep.mubr.f32.mxu0 0.0
    %2194 = vmatmul.mubr.f32.gmra.mxu0 %v2116
    %v2195 = vpop.f32.mrf.mxu0
    %v2196 = vadd.f32 %v2102, %v2195
    %v2197 = vpop.f32.mrf.mxu0
    %2198 = vmatprep.mubr.f32.mxu0 0.0
    %2199 = vmatmul.mubr.f32.gmra.mxu0 %v2119
    %v2200 = vpop.f32.mrf.mxu0
    %v2201 = vadd.f32 %v2102, %v2200
    %v2202 = vpop.f32.mrf.mxu0
    %2203 = vdwg.mxu0
    %v2204 = vadd.f32 %v2196, %v1994
    %v2205 = vadd.f32 %v2201, %v1995
    %v2206 = vsel %vm137, %v2204, 0.0
    %2207 = vadd.xlane.f32.xlu0 %v2206
    %v2208 = vpop.xlane.xlu0 %2207
    %v2209 = vsel %vm137, %v2205, 0.0
    %2210 = vadd.xlane.f32.xlu0 %v2209
    %v2211 = vpop.xlane.xlu0 %2210
    %v2212 = vmul.f32 %v2208, %v144
    %v2213 = vmul.f32 %v2211, %v144
    %v2214 = vsub.f32 %v2204, %v2212
    %v2215 = vsub.f32 %v2205, %v2213
    %v2216 = vmul.f32 %v2214, %v2214
    %v2217 = vmul.f32 %v2215, %v2215
    %v2218 = vsel %vm137, %v2216, 0.0
    %2219 = vadd.xlane.f32.xlu0 %v2218
    %v2220 = vpop.xlane.xlu0 %2219
    %v2221 = vsel %vm137, %v2217, 0.0
    %2222 = vadd.xlane.f32.xlu0 %v2221
    %v2223 = vpop.xlane.xlu0 %2222
    %v2224 = vmul.f32 %v2220, %v144
    %v2225 = vmul.f32 %v2223, %v144
    %v2226 = vadd.f32 %v2224, 1e-12
    %v2227 = vadd.f32 %v2225, 1e-12
    %v2228 = vrsqrt.pop %v2226
    %v2229 = vrsqrt.pop %v2227
    %v2230 = vmul.f32 %v2214, %v2228
    %v2231 = vmul.f32 %v2215, %v2229
    %v2232 = vlaneseq
    %v2233 = vshrl.u32 %v2232, 7
    %v2234 = vsub.s32 6, %v2233
    %v2235 = vrot.slane %v1321, %v2234
    %v2236 = vmul.f32 %v2230, %v2235
    %v2237 = vmul.f32 %v2231, %v2235
    %v2238 = vlaneseq
    %v2239 = vshrl.u32 %v2238, 7
    %v2240 = vsub.s32 7, %v2239
    %v2241 = vrot.slane %v1321, %v2240
    %v2242 = vadd.f32 %v2236, %v2241
    %v2243 = vadd.f32 %v2237, %v2241
    %v2244 = vlaneseq
    %v2245 = vshrl.u32 %v2244, 7
    %v2246 = vsub.s32 4, %v2245
    %v2247 = vrot.slane %v32, %v2246
    %vm2250 = vcmask 1042432
    %v2251 = vrot.slane %v32, 5
    %v2252 = vrot.slane %v33, 5
    %v2253 = vsel %vm2250, %v2251, %v2252
    %v2255 = vsel %vm137, %v2242, 0
    %v2258 = vsel %vm137, %v2243, 0
    %v2260 = vsel %vm137, %v2253, 0
    %2262 = vmatprep.subr.mxu0 0.0
    %2263 = vmatpush1.xpose.msra.mxu0 0.0
    %2264 = vmatprep.subr.mxu0 0.0
    %2265 = vmatpush1.xpose.msra.mxu0 0.0
    %2266 = vmatprep.subr.mxu0 0.0
    %2267 = vmatpush1.xpose.msra.mxu0 0.0
    %2268 = vmatprep.subr.mxu0 0.0
    %2269 = vmatpush1.xpose.msra.mxu0 0.0
    %2270 = vmatprep.subr.mxu0 0.0
    %2271 = vmatpush1.xpose.msra.mxu0 0.0
    %2272 = vmatprep.subr.mxu0 0.0
    %2273 = vmatpush1.xpose.msra.mxu0 0.0
    %2274 = vmatprep.subr.mxu0 0.0
    %2275 = vmatpush1.xpose.msra.mxu0 0.0
    %2276 = vmatprep.subr.mxu0 0.0
    %2277 = vmatpush1.xpose.msra.mxu0 0.0
    %2278 = vmatprep.subr.mxu0 0.0
    %2279 = vmatpush1.xpose.msra.mxu0 0.0
    %2280 = vmatprep.subr.mxu0 0.0
    %2281 = vmatpush1.xpose.msra.mxu0 0.0
    %2282 = vmatprep.subr.mxu0 0.0
    %2283 = vmatpush1.xpose.msra.mxu0 0.0
    %2284 = vmatprep.subr.mxu0 0.0
    %2285 = vmatpush1.xpose.msra.mxu0 0.0
    %2286 = vmatprep.subr.mxu0 0.0
    %2287 = vmatpush1.xpose.msra.mxu0 0.0
    %2288 = vmatprep.subr.mxu0 0.0
    %2289 = vmatpush1.xpose.msra.mxu0 0.0
    %2290 = vmatprep.subr.mxu0 0.0
    %2291 = vmatpush1.xpose.msra.mxu0 0.0
    %2292 = vmatprep.subr.mxu0 0.0
    %2293 = vmatpush1.xpose.msra.mxu0 %v2260
    %2294 = vmatprep.subr.mxu0 0.0
    %2295 = vmatpush2.xpose.msra.mxu0 0.0
    %2296 = vmatprep.subr.mxu0 0.0
    %2297 = vmatpush2.xpose.msra.mxu0 0.0
    %2298 = vmatprep.subr.mxu0 0.0
    %2299 = vmatpush2.xpose.msra.mxu0 0.0
    %2300 = vmatprep.subr.mxu0 0.0
    %2301 = vmatpush2.xpose.msra.mxu0 0.0
    %2302 = vmatprep.subr.mxu0 0.0
    %2303 = vmatpush2.xpose.msra.mxu0 0.0
    %2304 = vmatprep.subr.mxu0 0.0
    %2305 = vmatpush2.xpose.msra.mxu0 0.0
    %2306 = vmatprep.subr.mxu0 0.0
    %2307 = vmatpush2.xpose.msra.mxu0 0.0
    %2308 = vmatprep.subr.mxu0 0.0
    %2309 = vmatpush2.xpose.msra.mxu0 0.0
    %2310 = vmatprep.subr.mxu0 0.0
    %2311 = vmatpush2.xpose.msra.mxu0 0.0
    %2312 = vmatprep.subr.mxu0 0.0
    %2313 = vmatpush2.xpose.msra.mxu0 0.0
    %2314 = vmatprep.subr.mxu0 0.0
    %2315 = vmatpush2.xpose.msra.mxu0 0.0
    %2316 = vmatprep.subr.mxu0 0.0
    %2317 = vmatpush2.xpose.msra.mxu0 0.0
    %2318 = vmatprep.subr.mxu0 0.0
    %2319 = vmatpush2.xpose.msra.mxu0 0.0
    %2320 = vmatprep.subr.mxu0 0.0
    %2321 = vmatpush2.xpose.msra.mxu0 0.0
    %2322 = vmatprep.subr.mxu0 0.0
    %2323 = vmatpush2.xpose.msra.mxu0 0.0
    %2324 = vmatprep.subr.mxu0 0.0
    %2325 = vmatpush2.xpose.msra.mxu0 0.0
    %2326 = vmatprep.mubr.f32.mxu0 0.0
    %2327 = vmatmul.mubr.f32.gmra.mxu0 %v2255
    %v2328 = vpop.f32.mrf.mxu0
    %v2329 = vadd.f32 %v2247, %v2328
    %v2330 = vpop.f32.mrf.mxu0
    %2331 = vmatprep.mubr.f32.mxu0 0.0
    %2332 = vmatmul.mubr.f32.gmra.mxu0 %v2258
    %v2333 = vpop.f32.mrf.mxu0
    %v2334 = vadd.f32 %v2247, %v2333
    %v2335 = vpop.f32.mrf.mxu0
    %2336 = vdwg.mxu0
    %vm2337 = vcmask 64512
    %2338 = vst.msk [vmem:[%s5] sm:$0xff] %vm2337, %v2329
    %2339 = vst.msk [vmem:[%s5 + $0x8] sm:$0xff] %vm2337, %v2334
    %v2340 = vcvt.s32.f32 %v34
    %v2341 = vcvt.s32.f32 %v35
    %v2342 = vrcp.pop 5.0
    %v2343 = vmul.f32 %v2340, %v2342
    %v2344 = vmul.f32 %v2341, %v2342
    %v2345 = vfloor.f32 %v2343
    %v2346 = vfloor.f32 %v2344
    %v2347 = vsub.f32 %v2345, 1.0
    %v2348 = vsub.f32 %v2346, 1.0
    %v2349 = vmul.f32 %v2345, 5.0
    %v2350 = vmul.f32 %v2346, 5.0
    %v2351 = vsub.f32 %v2340, %v2349
    %v2352 = vsub.f32 %v2341, %v2350
    %v2353 = vsub.f32 %v2351, 1.0
    %v2354 = vsub.f32 %v2352, 1.0
    %vm2355 = vcmp.gt.s32.totalorder %v34, 0
    %vm2356 = vcmp.gt.s32.totalorder %v35, 0
    %2359 = vrot.lane.b32.xlu0 %v2347, 1
    %v2360 = vpop.permute.xlu0 %2359
    %2361 = vrot.lane.b32.xlu0 %v2348, 1
    %v2362 = vpop.permute.xlu0 %2361
    %v2365 = vsel %vm2355, %v2360, -1.0
    %v2366 = vsel %vm2356, %v2362, -1.0
    %2369 = vrot.lane.b32.xlu0 %v2353, 1
    %v2370 = vpop.permute.xlu0 %2369
    %2371 = vrot.lane.b32.xlu0 %v2354, 1
    %v2372 = vpop.permute.xlu0 %2371
    %v2375 = vsel %vm2355, %v2370, -1.0
    %v2376 = vsel %vm2356, %v2372, -1.0
    %vm2377 = vcmask 64544
    %v2378 = vsel %vm2377, %v2329, -inf
    %2379 = vmax.xlane.f32.xlu0 %v2378
    %v2380 = vpop.xlane.xlu0 %2379
    %v2381 = vsel %vm2377, %v2334, -inf
    %2382 = vmax.xlane.f32.xlu0 %v2381
    %v2383 = vpop.xlane.xlu0 %2382
    %v2384 = vsub.f32 %v2329, %v2380
    %v2385 = vsub.f32 %v2334, %v2383
    %v2386 = vmul.f32 %v2384, 1.442695
    %v2387 = vpow.pop %v2386
    %v2388 = vmul.f32 %v2385, 1.442695
    %v2389 = vpow.pop %v2388
    %2392 = vrot.lane.b32.xlu0 %v2387, 124
    %v2393 = vpop.permute.xlu0 %2392
    %2394 = vrot.lane.b32.xlu0 %v2389, 124
    %v2395 = vpop.permute.xlu0 %2394
    %vm2398 = vcmask 31744
    %v2399 = vsel %vm2398, %v2393, 0.0
    %2400 = vadd.xlane.f32.xlu0 %v2399
    %v2401 = vpop.xlane.xlu0 %2400
    %v2402 = vsel %vm2398, %v2395, 0.0
    %2403 = vadd.xlane.f32.xlu0 %v2402
    %v2404 = vpop.xlane.xlu0 %2403
    %v2405 = vlog2.pop %v2401
    %v2406 = vmul.f32 %v2405, 0.6931472
    %v2407 = vlog2.pop %v2404
    %v2408 = vmul.f32 %v2407, 0.6931472
    %v2409 = vadd.f32 %v2406, %v2380
    %v2410 = vadd.f32 %v2408, %v2383
    %2412 = vset.pattern.permute.xlu0 2
    %2413 = vperm.xlu0 %2412, %v2375
    %v2414 = vpop.permute.xlu0 %2413
    %2417 = vset.pattern.permute.xlu0 2
    %2418 = vperm.xlu0 %2417, %v2376
    %v2419 = vpop.permute.xlu0 %2418
    %vm2421 = vcmp.eq.f32.partialorder %v194, %v2414
    %vm2422 = vcmp.eq.f32.partialorder %v194, %v2419
    %2425 = vrot.lane.b32.xlu0 %v2329, 124
    %v2426 = vpop.permute.xlu0 %2425
    %2427 = vrot.lane.b32.xlu0 %v2334, 124
    %v2428 = vpop.permute.xlu0 %2427
    %v2431 = vsel %vm2421, %v2426, 0.0
    %v2432 = vsel %vm2422, %v2428, 0.0
    %v2433 = vsel %vm2398, %v2431, 0.0
    %2434 = vadd.xlane.f32.xlu0 %v2433
    %v2435 = vpop.xlane.xlu0 %2434
    %v2436 = vsel %vm2398, %v2432, 0.0
    %2437 = vadd.xlane.f32.xlu0 %v2436
    %v2438 = vpop.xlane.xlu0 %2437
    %vm2439 = vcmp.ge.f32.partialorder %v2375, 0.0
    %vm2440 = vcmp.ge.f32.partialorder %v2376, 0.0
    %v2441 = vsub.f32 %v2409, %v2435
    %v2442 = vsub.f32 %v2410, %v2438
    %v2443 = vsel %vm2439, %v2441, 0.0
    %v2444 = vsel %vm2440, %v2442, 0.0
    %vm2445 = vcmask 23568
    %v2446 = vsel %vm2445, %v2443, 0.0
    %v2447 = vsel %vm2445, %v2444, 0.0
    %v2448 = vadd.f32 %v2446, %v2447
    %v2449 = vrot.slane %v2448, 4
    %v2450 = vadd.f32 %v2448, %v2449
    %v2451 = vrot.slane %v2450, 2
    %v2452 = vadd.f32 %v2450, %v2451
    %v2453 = vrot.slane %v2452, 1
    %v2454 = vadd.f32 %v2452, %v2453
    %v2455 = vsel %vm2439, 1.0, 0.0
    %v2456 = vsel %vm2440, 1.0, 0.0
    %v2457 = vsel %vm2445, %v2455, 0.0
    %v2458 = vsel %vm2445, %v2456, 0.0
    %v2459 = vadd.f32 %v2457, %v2458
    %v2460 = vrot.slane %v2459, 4
    %v2461 = vadd.f32 %v2459, %v2460
    %v2462 = vrot.slane %v2461, 2
    %v2463 = vadd.f32 %v2461, %v2462
    %v2464 = vrot.slane %v2463, 1
    %v2465 = vadd.f32 %v2463, %v2464
    %v2466 = vmax.f32 %v2465, 1.0
    %v2467 = vrcp.pop %v2466
    %v2468 = vmul.f32 %v2454, %v2467
    %v2469 = vsel %vm2398, %v2329, -inf
    %2470 = vmax.xlane.f32.xlu0 %v2469
    %v2471 = vpop.xlane.xlu0 %2470
    %v2472 = vsel %vm2398, %v2334, -inf
    %2473 = vmax.xlane.f32.xlu0 %v2472
    %v2474 = vpop.xlane.xlu0 %2473
    %v2475 = vsub.f32 %v2329, %v2471
    %v2476 = vsub.f32 %v2334, %v2474
    %v2477 = vmul.f32 %v2475, 1.442695
    %v2478 = vpow.pop %v2477
    %v2479 = vmul.f32 %v2476, 1.442695
    %v2480 = vpow.pop %v2479
    %v2481 = vsel %vm2398, %v2478, 0.0
    %2482 = vadd.xlane.f32.xlu0 %v2481
    %v2483 = vpop.xlane.xlu0 %2482
    %v2484 = vsel %vm2398, %v2480, 0.0
    %2485 = vadd.xlane.f32.xlu0 %v2484
    %v2486 = vpop.xlane.xlu0 %2485
    %v2487 = vlog2.pop %v2483
    %v2488 = vmul.f32 %v2487, 0.6931472
    %v2489 = vlog2.pop %v2486
    %v2490 = vmul.f32 %v2489, 0.6931472
    %v2491 = vadd.f32 %v2488, %v2471
    %v2492 = vadd.f32 %v2490, %v2474
    %2494 = vset.pattern.permute.xlu0 2
    %2495 = vperm.xlu0 %2494, %v2365
    %v2496 = vpop.permute.xlu0 %2495
    %2499 = vset.pattern.permute.xlu0 2
    %2500 = vperm.xlu0 %2499, %v2366
    %v2501 = vpop.permute.xlu0 %2500
    %vm2503 = vcmp.eq.f32.partialorder %v194, %v2496
    %vm2504 = vcmp.eq.f32.partialorder %v194, %v2501
    %v2505 = vsel %vm2503, %v2329, 0.0
    %v2506 = vsel %vm2504, %v2334, 0.0
    %v2507 = vsel %vm2398, %v2505, 0.0
    %2508 = vadd.xlane.f32.xlu0 %v2507
    %v2509 = vpop.xlane.xlu0 %2508
    %v2510 = vsel %vm2398, %v2506, 0.0
    %2511 = vadd.xlane.f32.xlu0 %v2510
    %v2512 = vpop.xlane.xlu0 %2511
    %vm2513 = vcmp.ge.f32.partialorder %v2365, 0.0
    %vm2514 = vcmp.ge.f32.partialorder %v2366, 0.0
    %v2515 = vsub.f32 %v2491, %v2509
    %v2516 = vsub.f32 %v2492, %v2512
    %v2517 = vsel %vm2513, %v2515, 0.0
    %v2518 = vsel %vm2514, %v2516, 0.0
    %v2519 = vsel %vm2445, %v2517, 0.0
    %v2520 = vsel %vm2445, %v2518, 0.0
    %v2521 = vadd.f32 %v2519, %v2520
    %v2522 = vrot.slane %v2521, 4
    %v2523 = vadd.f32 %v2521, %v2522
    %v2524 = vrot.slane %v2523, 2
    %v2525 = vadd.f32 %v2523, %v2524
    %v2526 = vrot.slane %v2525, 1
    %v2527 = vadd.f32 %v2525, %v2526
    %v2528 = vsel %vm2513, 1.0, 0.0
    %v2529 = vsel %vm2514, 1.0, 0.0
    %v2530 = vsel %vm2445, %v2528, 0.0
    %v2531 = vsel %vm2445, %v2529, 0.0
    %v2532 = vadd.f32 %v2530, %v2531
    %v2533 = vrot.slane %v2532, 4
    %v2534 = vadd.f32 %v2532, %v2533
    %v2535 = vrot.slane %v2534, 2
    %v2536 = vadd.f32 %v2534, %v2535
    %v2537 = vrot.slane %v2536, 1
    %v2538 = vadd.f32 %v2536, %v2537
    %v2539 = vmax.f32 %v2538, 1.0
    %v2540 = vrcp.pop %v2539
    %v2541 = vmul.f32 %v2527, %v2540
    %v2542 = vadd.f32 %v2468, %v2541
    %2544 = vrot.lane.b32.xlu0 %v2542, 126
    %v2545 = vpop.permute.xlu0 %2544
    %vm2547 = vcmask 0
    %2548 = vst.msk [vmem:[#allocation2] sm:$0x1] %vm2547, %v2545
    // Predicated region
    $region22: #{tpu_custom_call.1} parent=1 // pred_check
      _
    $region23: #{tpu_custom_call.1} parent=1 // pred_check_branch
      %2550 = sbr.rel (0) target = $region25
    $region24: #{tpu_custom_call.1} parent=1 // pred_region
      _
    $region25: #{tpu_custom_call.1} parent=1 // pred_fallthru
      _
    // Predicated region
    $region26: #{tpu_custom_call.1} parent=1 // pred_check
      _
    $region27: #{tpu_custom_call.1} parent=1 // pred_check_branch
      %2552 = sbr.rel (0) target = $region29
    $region28: #{tpu_custom_call.1} parent=1 // pred_region
      %s2554 = ssub.s32 16, 16
      %2555 = vsyncadd [#allocation3], %s2554
      %s2557 = sshll.u32 [#allocation2], 4
      %s2558 = int_to_ptr.vmem [resolvable:$true] %s2557
      %2560 = dma.vmem_to_hbm [thread:$0]  %s2558, 16, %s6, [#allocation3]
    $region29: #{tpu_custom_call.1} parent=1 // pred_fallthru
      _
    // Predicated region
    $region30: #{tpu_custom_call.1} parent=1 // pred_check
      _
    $region31: #{tpu_custom_call.1} parent=1 // pred_check_branch
      %2562 = sbr.rel (0) target = $region33
    $region32: #{tpu_custom_call.1} parent=1 // pred_region
      _
    $region33: #{tpu_custom_call.1} parent=1 // pred_fallthru
      _
    // Predicated region
    $region34: #{tpu_custom_call.1} parent=1 // pred_check
      _
    $region35: #{tpu_custom_call.1} parent=1 // pred_check_branch
      %2564 = sbr.rel (0) target = $region37
    $region36: #{tpu_custom_call.1} parent=1 // pred_region
      %2565 = dma.done [#allocation3], 16
    $region37: #{tpu_custom_call.1} parent=1 // pred_fallthru
      _
    %2566 = vsyncpa [#allocation3], 1

</llo_original>
